<compile_context>
chip_gen: v7x
topology: tpu7x:2x2x1
jax: 0.10.0
libtpu: 0.0.40
codegen_flags: <defaults>
</compile_context>

<pallas_src>
import jax
import jax.numpy as jnp
from jax.experimental import pallas as pl
from jax.experimental.pallas import tpu as pltpu

# Module defaults (from OldTextModel.__init__)
INPUT_DIM = 256      # dim of `y`
EMBED_DIM = 256
LSTM_DIM = 256
OUTPUT_DIM = 256
VOCAB = 32           # len(word_to_ix) is not defined in the spec; small demo vocab.


def _round_up(x, m):
    return ((x + m - 1) // m) * m


def _sigmoid(x):
    # sigmoid(x) = 0.5 * (tanh(x / 2) + 1): one EUP transcendental, no divide.
    return 0.5 * (jnp.tanh(0.5 * x) + 1.0)


def _old_text_kernel(tokens_ref, y_ref, emb_proj_ref, w_hh_ref, b_lstm_ref,
                     wf_h_ref, wf_y_ref, b_fc_ref, o_ref, x_gates_ref):
    TB, T = tokens_ref.shape
    Vp, G = emb_proj_ref.shape            # G = 4 * H, Vp = lane-padded vocab
    H = w_hh_ref.shape[0]

    # ---- Phase 1: hoist all input-side gate work out of the recurrence -----
    # Stack token ids t-major, build ONE lane-dense one-hot, and compute the
    # gate pre-activations for every (t, b) in a single batched bf16 matmul.
    ids = jnp.concatenate([tokens_ref[:, t:t + 1] for t in range(T)], axis=0)  # (T*TB, 1)
    lane = jax.lax.broadcasted_iota(jnp.int32, (T * TB, Vp), 1)
    onehot = (ids == lane).astype(jnp.float32).astype(jnp.bfloat16)            # (T*TB, Vp)
    x_pre = jnp.dot(onehot, emb_proj_ref[...],
                    preferred_element_type=jnp.float32)                        # (T*TB, G) f32
    # Fold the summed LSTM bias in once (NOT once per unrolled step).
    x_gates_ref[...] = x_pre.reshape(T, TB, G) + b_lstm_ref[...]

    # ---- Phase 2: serial recurrence; only h @ W_hh is on the critical path --
    w_hh = w_hh_ref[...]                  # bf16, loaded once
    h = jnp.zeros((TB, H), jnp.float32)
    c = jnp.zeros((TB, H), jnp.float32)
    # TODO(synk): for long sequences, switch this static unroll to
    # lax.fori_loop(0, T, step, (h, c), unroll=2) reading x_gates_ref[t]
    # (dynamic leading index) to bound live ranges / code size.
    for t in range(T):
        gates = x_gates_ref[t] + jnp.dot(h.astype(jnp.bfloat16), w_hh,
                                         preferred_element_type=jnp.float32)
        i_g = _sigmoid(gates[:, 0:H])            # PyTorch gate order: i, f, g, o
        f_g = _sigmoid(gates[:, H:2 * H])
        g_g = jnp.tanh(gates[:, 2 * H:3 * H])
        o_g = _sigmoid(gates[:, 3 * H:4 * H])
        c = f_g * c + i_g * g_g
        h = o_g * jnp.tanh(c)

    # ---- Phase 3: fc_sen(concat([h, y])) as a split matmul (no concat) ------
    out = (jnp.dot(h.astype(jnp.bfloat16), wf_h_ref[...],
                   preferred_element_type=jnp.float32)
           + jnp.dot(y_ref[...].astype(jnp.bfloat16), wf_y_ref[...],
                     preferred_element_type=jnp.float32)
           + b_fc_ref[...])
    o_ref[...] = out.astype(o_ref.dtype)


def prepare_params(params):
    """Parameter-only prep (run once / amortized under jit):
    fuse emb @ W_ih, pad the vocab axis to a lane-dense multiple of 128, and
    cast matmul operands to bf16 (in-kernel accumulation stays f32)."""
    emb, w_ih, w_hh, b_lstm, wf_h, wf_y, b_fc = params
    V = emb.shape[0]
    emb_proj = jnp.dot(emb, w_ih)                                   # (V, 4H) f32
    Vp = _round_up(V, 128)
    emb_proj = jnp.pad(emb_proj, ((0, Vp - V), (0, 0))).astype(jnp.bfloat16)
    return (emb_proj,
            w_hh.astype(jnp.bfloat16),
            b_lstm,
            wf_h.astype(jnp.bfloat16),
            wf_y.astype(jnp.bfloat16),
            b_fc)


def old_text_model_forward(tokens, y, kparams, *, tb=128):
    """tokens: (B, T) int32, y: (B, INPUT_DIM) f32 -> (B, OUTPUT_DIM) f32.

    kparams = prepare_params(raw_params).  tb: batch tile; 128 fills a v5e
    MXU tile and stays under its 16 MiB scoped-VMEM default; 256 is a good
    choice on v6e/v7x for large batches."""
    emb_proj, w_hh, b_lstm, wf_h, wf_y, b_fc = kparams
    B, T = tokens.shape
    Vp, G = emb_proj.shape
    H = w_hh.shape[0]
    D_in = wf_y.shape[0]
    D_out = wf_h.shape[1]

    # Batch tile: multiple of 8 sublanes.  Keep >= 2 grid steps whenever the
    # batch allows so the "parallel" axis can shard over v7x's two TensorCores.
    TB = min(tb, _round_up(B, 8))
    if B >= 16:
        TB = min(TB, _round_up((B + 1) // 2, 8))
    Bp = _round_up(B, TB)
    if Bp != B:
        tokens = jnp.pad(tokens, ((0, Bp - B), (0, 0)))   # token id 0 is valid
        y = jnp.pad(y, ((0, Bp - B), (0, 0)))

    grid = (Bp // TB,)

    def batch_spec(cols):
        return pl.BlockSpec((TB, cols), lambda i: (i, 0))

    def resident(rows, cols):
        # Constant index_map: block stays VMEM-resident across grid steps.
        return pl.BlockSpec((rows, cols), lambda i: (0, 0))

    flops = int(Bp * (T * (2 * Vp * G + 2 * H * G) + 2 * (H + D_in) * D_out))
    transcendentals = int(Bp * T * 5 * H)      # 3 sigmoid(->tanh) + 2 tanh / step
    bytes_accessed = int(
        tokens.size * 4 + y.size * 4 + Bp * D_out * 4
        + 2 * (emb_proj.size + w_hh.size + wf_h.size + wf_y.size)   # bf16 weights
        + 4 * (b_lstm.size + b_fc.size))

    out = pl.pallas_call(
        _old_text_kernel,
        out_shape=jax.ShapeDtypeStruct((Bp, D_out), jnp.float32),
        grid=grid,
        in_specs=[
            batch_spec(T),              # token tile          (TB, T)   int32
            batch_spec(D_in),           # y tile              (TB, Din) f32
            resident(Vp, G),            # emb @ W_ih (padded) (Vp, 4H)  bf16
            resident(H, G),             # W_hh                (H, 4H)   bf16
            resident(1, G),             # b_ih + b_hh         (1, 4H)   f32
            resident(H, D_out),         # fc weight, h part             bf16
            resident(D_in, D_out),      # fc weight, y part             bf16
            resident(1, D_out),         # fc bias                       f32
        ],
        out_specs=batch_spec(D_out),
        scratch_shapes=[pltpu.VMEM((T, TB, G), jnp.float32)],   # x_gates, t-major
        compiler_params=pltpu.CompilerParams(
            dimension_semantics=("parallel",)),
        cost_estimate=pl.CostEstimate(flops=flops,
                                      transcendentals=transcendentals,
                                      bytes_accessed=bytes_accessed),
    )(tokens, y, emb_proj, w_hh, b_lstm, wf_h, wf_y, b_fc)

    return out[:B]


def init_params(key, vocab=VOCAB, embed=EMBED_DIM, hidden=LSTM_DIM,
                input_dim=INPUT_DIM, output_dim=OUTPUT_DIM):
    # NOTE: when loading real PyTorch weights, transpose weight_ih_l0 /
    # weight_hh_l0 (here stored as (in, 4H)) and sum bias_ih + bias_hh.
    ks = jax.random.split(key, 7)
    emb = jax.random.normal(ks[0], (vocab, embed), jnp.float32)      # Embedding ~ N(0,1)
    bnd = 1.0 / (hidden ** 0.5)                                      # LSTM default init
    w_ih = jax.random.uniform(ks[1], (embed, 4 * hidden), jnp.float32, -bnd, bnd)
    w_hh = jax.random.uniform(ks[2], (hidden, 4 * hidden), jnp.float32, -bnd, bnd)
    b_ih = jax.random.uniform(ks[3], (1, 4 * hidden), jnp.float32, -bnd, bnd)
    b_hh = jax.random.uniform(ks[4], (1, 4 * hidden), jnp.float32, -bnd, bnd)
    b_lstm = b_ih + b_hh                                             # added jointly each step
    fan_in = hidden + input_dim
    bnd2 = 1.0 / (fan_in ** 0.5)                                     # Linear default init
    wf = jax.random.uniform(ks[5], (fan_in, output_dim), jnp.float32, -bnd2, bnd2)
    wf_h, wf_y = wf[:hidden], wf[hidden:]
    b_fc = jax.random.uniform(ks[6], (1, output_dim), jnp.float32, -bnd2, bnd2)
    return emb, w_ih, w_hh, b_lstm, wf_h, wf_y, b_fc


def reference_forward(tokens, y, params):
    emb, w_ih, w_hh, b_lstm, wf_h, wf_y, b_fc = params
    x = emb[tokens]                                   # (B, T, E)
    B, T, _ = x.shape
    H = w_hh.shape[0]
    h = jnp.zeros((B, H), jnp.float32)
    c = jnp.zeros((B, H), jnp.float32)
    for t in range(T):
        gates = x[:, t] @ w_ih + h @ w_hh + b_lstm
        i = _sigmoid(gates[:, 0:H])
        f = _sigmoid(gates[:, H:2 * H])
        g = jnp.tanh(gates[:, 2 * H:3 * H])
        o = _sigmoid(gates[:, 3 * H:4 * H])
        c = f * c + i * g
        h = o * jnp.tanh(c)
    return h @ wf_h + y @ wf_y + b_fc


if __name__ == "__main__":
    key = jax.random.PRNGKey(0)
    k_tok, k_y, k_p = jax.random.split(key, 3)

    B, T = 4, 8
    tokens = jax.random.randint(k_tok, (B, T), 0, VOCAB, dtype=jnp.int32)
    y = jax.random.normal(k_y, (B, INPUT_DIM), jnp.float32)
    params = init_params(k_p)
    kparams = prepare_params(params)

    out = old_text_model_forward(tokens, y, kparams)
    out = jax.block_until_ready(out)

    ref = reference_forward(tokens, y, params)
    assert out.shape == (B, OUTPUT_DIM)
    # Tolerance covers bf16 MXU operands (f32 accumulation) vs the pure-f32
    # reference, compounded over the T-step recurrence.
    assert jnp.allclose(out, ref, atol=5e-2, rtol=5e-2), "mismatch vs JAX reference"

    print("KERNEL_OK")
</pallas_src>

<mosaic_0001>
module attributes {stable_mosaic.version = 11 : i64} {
  func.func @_old_text_kernel(%arg0: i32, %arg1: memref<8x8xi32, #tpu.memory_space<vmem>>, %arg2: memref<8x256xf32, #tpu.memory_space<vmem>>, %arg3: memref<128x1024xbf16, #tpu.memory_space<vmem>>, %arg4: memref<256x1024xbf16, #tpu.memory_space<vmem>>, %arg5: memref<1x1024xf32, #tpu.memory_space<vmem>>, %arg6: memref<256x256xbf16, #tpu.memory_space<vmem>>, %arg7: memref<256x256xbf16, #tpu.memory_space<vmem>>, %arg8: memref<1x256xf32, #tpu.memory_space<vmem>>, %arg9: memref<8x256xf32, #tpu.memory_space<vmem>>, %arg10: memref<8x8x1024xf32, #tpu.memory_space<vmem>>) attributes {dimension_semantics = [#tpu.dimension_semantics<parallel>], iteration_bounds = array<i64: 1>, scalar_prefetch = 0 : i64, scratch_operands = 1 : i64, tpu.core_type = #tpu.core_type<tc>, window_params = [{transform_indices = @transform_0, window_bounds = array<i64: 8, 8>}, {transform_indices = @transform_1, window_bounds = array<i64: 8, 256>}, {pipeline_mode = #tpu.pipeline_mode<synchronous>, transform_indices = @transform_2, window_bounds = array<i64: 128, 1024>}, {pipeline_mode = #tpu.pipeline_mode<synchronous>, transform_indices = @transform_3, window_bounds = array<i64: 256, 1024>}, {pipeline_mode = #tpu.pipeline_mode<synchronous>, transform_indices = @transform_4, window_bounds = array<i64: 1, 1024>}, {pipeline_mode = #tpu.pipeline_mode<synchronous>, transform_indices = @transform_5, window_bounds = array<i64: 256, 256>}, {pipeline_mode = #tpu.pipeline_mode<synchronous>, transform_indices = @transform_6, window_bounds = array<i64: 256, 256>}, {pipeline_mode = #tpu.pipeline_mode<synchronous>, transform_indices = @transform_7, window_bounds = array<i64: 1, 256>}, {transform_indices = @transform_8, window_bounds = array<i64: 8, 256>}]} {
    %c0 = arith.constant 0 : index
    %c0_0 = arith.constant 0 : index
    %0 = vector.load %arg1[%c0, %c0_0] : memref<8x8xi32, #tpu.memory_space<vmem>>, vector<8x1xi32>
    %c0_1 = arith.constant 0 : index
    %c1 = arith.constant 1 : index
    %1 = vector.load %arg1[%c0_1, %c1] : memref<8x8xi32, #tpu.memory_space<vmem>>, vector<8x1xi32>
    %c0_2 = arith.constant 0 : index
    %c2 = arith.constant 2 : index
    %2 = vector.load %arg1[%c0_2, %c2] : memref<8x8xi32, #tpu.memory_space<vmem>>, vector<8x1xi32>
    %c0_3 = arith.constant 0 : index
    %c3 = arith.constant 3 : index
    %3 = vector.load %arg1[%c0_3, %c3] : memref<8x8xi32, #tpu.memory_space<vmem>>, vector<8x1xi32>
    %c0_4 = arith.constant 0 : index
    %c4 = arith.constant 4 : index
    %4 = vector.load %arg1[%c0_4, %c4] : memref<8x8xi32, #tpu.memory_space<vmem>>, vector<8x1xi32>
    %c0_5 = arith.constant 0 : index
    %c5 = arith.constant 5 : index
    %5 = vector.load %arg1[%c0_5, %c5] : memref<8x8xi32, #tpu.memory_space<vmem>>, vector<8x1xi32>
    %c0_6 = arith.constant 0 : index
    %c6 = arith.constant 6 : index
    %6 = vector.load %arg1[%c0_6, %c6] : memref<8x8xi32, #tpu.memory_space<vmem>>, vector<8x1xi32>
    %c0_7 = arith.constant 0 : index
    %c7 = arith.constant 7 : index
    %7 = vector.load %arg1[%c0_7, %c7] : memref<8x8xi32, #tpu.memory_space<vmem>>, vector<8x1xi32>
    %8 = tpu.concatenate %0, %1, %2, %3, %4, %5, %6, %7 in 0 : vector<8x1xi32>, vector<8x1xi32>, vector<8x1xi32>, vector<8x1xi32>, vector<8x1xi32>, vector<8x1xi32>, vector<8x1xi32>, vector<8x1xi32> -> vector<64x1xi32>
    %9 = tpu.iota {dimensions = array<i32: 1>} : vector<64x128xi32>
    %10 = vector.broadcast %8 : vector<64x1xi32> to vector<64x128xi32>
    %11 = arith.cmpi eq, %10, %9 : vector<64x128xi32>
    %12 = arith.extui %11 : vector<64x128xi1> to vector<64x128xi32>
    %13 = arith.sitofp %12 : vector<64x128xi32> to vector<64x128xf32>
    %14 = arith.truncf %13 : vector<64x128xf32> to vector<64x128xbf16>
    %c0_8 = arith.constant 0 : index
    %c0_9 = arith.constant 0 : index
    %15 = vector.load %arg3[%c0_8, %c0_9] : memref<128x1024xbf16, #tpu.memory_space<vmem>>, vector<128x1024xbf16>
    %cst = arith.constant dense<0.000000e+00> : vector<64x1024xf32>
    %16 = tpu.matmul %14, %15, %cst {dimension_numbers = #tpu.dot_dimension_numbers<[1], [0], [0], [1], [0, 0, 1, 1], [], []>} : vector<64x128xbf16>, vector<128x1024xbf16>, vector<64x1024xf32> -> vector<64x1024xf32>
    %17 = vector.shape_cast %16 : vector<64x1024xf32> to vector<8x8x1024xf32>
    %c0_10 = arith.constant 0 : index
    %c0_11 = arith.constant 0 : index
    %18 = vector.load %arg5[%c0_10, %c0_11] : memref<1x1024xf32, #tpu.memory_space<vmem>>, vector<1x1024xf32>
    %19 = vector.shape_cast %18 : vector<1x1024xf32> to vector<1x1x1024xf32>
    %20 = vector.broadcast %19 : vector<1x1x1024xf32> to vector<8x8x1024xf32>
    %21 = arith.addf %17, %20 : vector<8x8x1024xf32>
    %c0_12 = arith.constant 0 : index
    %c0_13 = arith.constant 0 : index
    %c0_14 = arith.constant 0 : index
    %22 = vector.load %arg10[%c0_12, %c0_13, %c0_14] : memref<8x8x1024xf32, #tpu.memory_space<vmem>>, vector<8x8x1024xf32>
    tpu.vector_store %arg10[%c0_12, %c0_13, %c0_14], %21 {strides = array<i32>} : memref<8x8x1024xf32, #tpu.memory_space<vmem>>, vector<8x8x1024xf32>,
    %c0_15 = arith.constant 0 : index
    %c0_16 = arith.constant 0 : index
    %23 = vector.load %arg4[%c0_15, %c0_16] : memref<256x1024xbf16, #tpu.memory_space<vmem>>, vector<256x1024xbf16>
    %cst_17 = arith.constant 0.000000e+00 : f32
    %24 = vector.broadcast %cst_17 : f32 to vector<8x256xf32>
    %cst_18 = arith.constant 0.000000e+00 : f32
    %25 = vector.broadcast %cst_18 : f32 to vector<8x256xf32>
    %c0_19 = arith.constant 0 : index
    %c0_20 = arith.constant 0 : index
    %c0_21 = arith.constant 0 : index
    %26 = vector.load %arg10[%c0_19, %c0_20, %c0_21] : memref<8x8x1024xf32, #tpu.memory_space<vmem>>, vector<1x8x1024xf32>
    %27 = vector.shape_cast %26 : vector<1x8x1024xf32> to vector<8x1024xf32>
    %28 = arith.truncf %24 : vector<8x256xf32> to vector<8x256xbf16>
    %cst_22 = arith.constant dense<0.000000e+00> : vector<8x1024xf32>
    %29 = tpu.matmul %28, %23, %cst_22 {dimension_numbers = #tpu.dot_dimension_numbers<[1], [0], [0], [1], [0, 0, 1, 1], [], []>} : vector<8x256xbf16>, vector<256x1024xbf16>, vector<8x1024xf32> -> vector<8x1024xf32>
    %30 = arith.addf %27, %29 : vector<8x1024xf32>
    %31 = vector.extract_strided_slice %30 {offsets = [0, 0], sizes = [8, 256], strides = [1, 1]} : vector<8x1024xf32> to vector<8x256xf32>
    %cst_23 = arith.constant 5.000000e-01 : f32
    %32 = vector.broadcast %cst_23 : f32 to vector<8x256xf32>
    %33 = arith.mulf %32, %31 : vector<8x256xf32>
    %34 = math.tanh %33 : vector<8x256xf32>
    %cst_24 = arith.constant 1.000000e+00 : f32
    %35 = vector.broadcast %cst_24 : f32 to vector<8x256xf32>
    %36 = arith.addf %34, %35 : vector<8x256xf32>
    %cst_25 = arith.constant 5.000000e-01 : f32
    %37 = vector.broadcast %cst_25 : f32 to vector<8x256xf32>
    %38 = arith.mulf %37, %36 : vector<8x256xf32>
    %39 = vector.extract_strided_slice %30 {offsets = [0, 256], sizes = [8, 256], strides = [1, 1]} : vector<8x1024xf32> to vector<8x256xf32>
    %cst_26 = arith.constant 5.000000e-01 : f32
    %40 = vector.broadcast %cst_26 : f32 to vector<8x256xf32>
    %41 = arith.mulf %40, %39 : vector<8x256xf32>
    %42 = math.tanh %41 : vector<8x256xf32>
    %cst_27 = arith.constant 1.000000e+00 : f32
    %43 = vector.broadcast %cst_27 : f32 to vector<8x256xf32>
    %44 = arith.addf %42, %43 : vector<8x256xf32>
    %cst_28 = arith.constant 5.000000e-01 : f32
    %45 = vector.broadcast %cst_28 : f32 to vector<8x256xf32>
    %46 = arith.mulf %45, %44 : vector<8x256xf32>
    %47 = vector.extract_strided_slice %30 {offsets = [0, 512], sizes = [8, 256], strides = [1, 1]} : vector<8x1024xf32> to vector<8x256xf32>
    %48 = math.tanh %47 : vector<8x256xf32>
    %49 = vector.extract_strided_slice %30 {offsets = [0, 768], sizes = [8, 256], strides = [1, 1]} : vector<8x1024xf32> to vector<8x256xf32>
    %cst_29 = arith.constant 5.000000e-01 : f32
    %50 = vector.broadcast %cst_29 : f32 to vector<8x256xf32>
    %51 = arith.mulf %50, %49 : vector<8x256xf32>
    %52 = math.tanh %51 : vector<8x256xf32>
    %cst_30 = arith.constant 1.000000e+00 : f32
    %53 = vector.broadcast %cst_30 : f32 to vector<8x256xf32>
    %54 = arith.addf %52, %53 : vector<8x256xf32>
    %cst_31 = arith.constant 5.000000e-01 : f32
    %55 = vector.broadcast %cst_31 : f32 to vector<8x256xf32>
    %56 = arith.mulf %55, %54 : vector<8x256xf32>
    %57 = arith.mulf %46, %25 : vector<8x256xf32>
    %58 = arith.mulf %38, %48 : vector<8x256xf32>
    %59 = arith.addf %57, %58 : vector<8x256xf32>
    %60 = math.tanh %59 : vector<8x256xf32>
    %61 = arith.mulf %56, %60 : vector<8x256xf32>
    %c1_32 = arith.constant 1 : index
    %c0_33 = arith.constant 0 : index
    %c0_34 = arith.constant 0 : index
    %62 = vector.load %arg10[%c1_32, %c0_33, %c0_34] : memref<8x8x1024xf32, #tpu.memory_space<vmem>>, vector<1x8x1024xf32>
    %63 = vector.shape_cast %62 : vector<1x8x1024xf32> to vector<8x1024xf32>
    %64 = arith.truncf %61 : vector<8x256xf32> to vector<8x256xbf16>
    %cst_35 = arith.constant dense<0.000000e+00> : vector<8x1024xf32>
    %65 = tpu.matmul %64, %23, %cst_35 {dimension_numbers = #tpu.dot_dimension_numbers<[1], [0], [0], [1], [0, 0, 1, 1], [], []>} : vector<8x256xbf16>, vector<256x1024xbf16>, vector<8x1024xf32> -> vector<8x1024xf32>
    %66 = arith.addf %63, %65 : vector<8x1024xf32>
    %67 = vector.extract_strided_slice %66 {offsets = [0, 0], sizes = [8, 256], strides = [1, 1]} : vector<8x1024xf32> to vector<8x256xf32>
    %cst_36 = arith.constant 5.000000e-01 : f32
    %68 = vector.broadcast %cst_36 : f32 to vector<8x256xf32>
    %69 = arith.mulf %68, %67 : vector<8x256xf32>
    %70 = math.tanh %69 : vector<8x256xf32>
    %cst_37 = arith.constant 1.000000e+00 : f32
    %71 = vector.broadcast %cst_37 : f32 to vector<8x256xf32>
    %72 = arith.addf %70, %71 : vector<8x256xf32>
    %cst_38 = arith.constant 5.000000e-01 : f32
    %73 = vector.broadcast %cst_38 : f32 to vector<8x256xf32>
    %74 = arith.mulf %73, %72 : vector<8x256xf32>
    %75 = vector.extract_strided_slice %66 {offsets = [0, 256], sizes = [8, 256], strides = [1, 1]} : vector<8x1024xf32> to vector<8x256xf32>
    %cst_39 = arith.constant 5.000000e-01 : f32
    %76 = vector.broadcast %cst_39 : f32 to vector<8x256xf32>
    %77 = arith.mulf %76, %75 : vector<8x256xf32>
    %78 = math.tanh %77 : vector<8x256xf32>
    %cst_40 = arith.constant 1.000000e+00 : f32
    %79 = vector.broadcast %cst_40 : f32 to vector<8x256xf32>
    %80 = arith.addf %78, %79 : vector<8x256xf32>
    %cst_41 = arith.constant 5.000000e-01 : f32
    %81 = vector.broadcast %cst_41 : f32 to vector<8x256xf32>
    %82 = arith.mulf %81, %80 : vector<8x256xf32>
    %83 = vector.extract_strided_slice %66 {offsets = [0, 512], sizes = [8, 256], strides = [1, 1]} : vector<8x1024xf32> to vector<8x256xf32>
    %84 = math.tanh %83 : vector<8x256xf32>
    %85 = vector.extract_strided_slice %66 {offsets = [0, 768], sizes = [8, 256], strides = [1, 1]} : vector<8x1024xf32> to vector<8x256xf32>
    %cst_42 = arith.constant 5.000000e-01 : f32
    %86 = vector.broadcast %cst_42 : f32 to vector<8x256xf32>
    %87 = arith.mulf %86, %85 : vector<8x256xf32>
    %88 = math.tanh %87 : vector<8x256xf32>
    %cst_43 = arith.constant 1.000000e+00 : f32
    %89 = vector.broadcast %cst_43 : f32 to vector<8x256xf32>
    %90 = arith.addf %88, %89 : vector<8x256xf32>
    %cst_44 = arith.constant 5.000000e-01 : f32
    %91 = vector.broadcast %cst_44 : f32 to vector<8x256xf32>
    %92 = arith.mulf %91, %90 : vector<8x256xf32>
    %93 = arith.mulf %82, %59 : vector<8x256xf32>
    %94 = arith.mulf %74, %84 : vector<8x256xf32>
    %95 = arith.addf %93, %94 : vector<8x256xf32>
    %96 = math.tanh %95 : vector<8x256xf32>
    %97 = arith.mulf %92, %96 : vector<8x256xf32>
    %c2_45 = arith.constant 2 : index
    %c0_46 = arith.constant 0 : index
    %c0_47 = arith.constant 0 : index
    %98 = vector.load %arg10[%c2_45, %c0_46, %c0_47] : memref<8x8x1024xf32, #tpu.memory_space<vmem>>, vector<1x8x1024xf32>
    %99 = vector.shape_cast %98 : vector<1x8x1024xf32> to vector<8x1024xf32>
    %100 = arith.truncf %97 : vector<8x256xf32> to vector<8x256xbf16>
    %cst_48 = arith.constant dense<0.000000e+00> : vector<8x1024xf32>
    %101 = tpu.matmul %100, %23, %cst_48 {dimension_numbers = #tpu.dot_dimension_numbers<[1], [0], [0], [1], [0, 0, 1, 1], [], []>} : vector<8x256xbf16>, vector<256x1024xbf16>, vector<8x1024xf32> -> vector<8x1024xf32>
    %102 = arith.addf %99, %101 : vector<8x1024xf32>
    %103 = vector.extract_strided_slice %102 {offsets = [0, 0], sizes = [8, 256], strides = [1, 1]} : vector<8x1024xf32> to vector<8x256xf32>
    %cst_49 = arith.constant 5.000000e-01 : f32
    %104 = vector.broadcast %cst_49 : f32 to vector<8x256xf32>
    %105 = arith.mulf %104, %103 : vector<8x256xf32>
    %106 = math.tanh %105 : vector<8x256xf32>
    %cst_50 = arith.constant 1.000000e+00 : f32
    %107 = vector.broadcast %cst_50 : f32 to vector<8x256xf32>
    %108 = arith.addf %106, %107 : vector<8x256xf32>
    %cst_51 = arith.constant 5.000000e-01 : f32
    %109 = vector.broadcast %cst_51 : f32 to vector<8x256xf32>
    %110 = arith.mulf %109, %108 : vector<8x256xf32>
    %111 = vector.extract_strided_slice %102 {offsets = [0, 256], sizes = [8, 256], strides = [1, 1]} : vector<8x1024xf32> to vector<8x256xf32>
    %cst_52 = arith.constant 5.000000e-01 : f32
    %112 = vector.broadcast %cst_52 : f32 to vector<8x256xf32>
    %113 = arith.mulf %112, %111 : vector<8x256xf32>
    %114 = math.tanh %113 : vector<8x256xf32>
    %cst_53 = arith.constant 1.000000e+00 : f32
    %115 = vector.broadcast %cst_53 : f32 to vector<8x256xf32>
    %116 = arith.addf %114, %115 : vector<8x256xf32>
    %cst_54 = arith.constant 5.000000e-01 : f32
    %117 = vector.broadcast %cst_54 : f32 to vector<8x256xf32>
    %118 = arith.mulf %117, %116 : vector<8x256xf32>
    %119 = vector.extract_strided_slice %102 {offsets = [0, 512], sizes = [8, 256], strides = [1, 1]} : vector<8x1024xf32> to vector<8x256xf32>
    %120 = math.tanh %119 : vector<8x256xf32>
    %121 = vector.extract_strided_slice %102 {offsets = [0, 768], sizes = [8, 256], strides = [1, 1]} : vector<8x1024xf32> to vector<8x256xf32>
    %cst_55 = arith.constant 5.000000e-01 : f32
    %122 = vector.broadcast %cst_55 : f32 to vector<8x256xf32>
    %123 = arith.mulf %122, %121 : vector<8x256xf32>
    %124 = math.tanh %123 : vector<8x256xf32>
    %cst_56 = arith.constant 1.000000e+00 : f32
    %125 = vector.broadcast %cst_56 : f32 to vector<8x256xf32>
    %126 = arith.addf %124, %125 : vector<8x256xf32>
    %cst_57 = arith.constant 5.000000e-01 : f32
    %127 = vector.broadcast %cst_57 : f32 to vector<8x256xf32>
    %128 = arith.mulf %127, %126 : vector<8x256xf32>
    %129 = arith.mulf %118, %95 : vector<8x256xf32>
    %130 = arith.mulf %110, %120 : vector<8x256xf32>
    %131 = arith.addf %129, %130 : vector<8x256xf32>
    %132 = math.tanh %131 : vector<8x256xf32>
    %133 = arith.mulf %128, %132 : vector<8x256xf32>
    %c3_58 = arith.constant 3 : index
    %c0_59 = arith.constant 0 : index
    %c0_60 = arith.constant 0 : index
    %134 = vector.load %arg10[%c3_58, %c0_59, %c0_60] : memref<8x8x1024xf32, #tpu.memory_space<vmem>>, vector<1x8x1024xf32>
    %135 = vector.shape_cast %134 : vector<1x8x1024xf32> to vector<8x1024xf32>
    %136 = arith.truncf %133 : vector<8x256xf32> to vector<8x256xbf16>
    %cst_61 = arith.constant dense<0.000000e+00> : vector<8x1024xf32>
    %137 = tpu.matmul %136, %23, %cst_61 {dimension_numbers = #tpu.dot_dimension_numbers<[1], [0], [0], [1], [0, 0, 1, 1], [], []>} : vector<8x256xbf16>, vector<256x1024xbf16>, vector<8x1024xf32> -> vector<8x1024xf32>
    %138 = arith.addf %135, %137 : vector<8x1024xf32>
    %139 = vector.extract_strided_slice %138 {offsets = [0, 0], sizes = [8, 256], strides = [1, 1]} : vector<8x1024xf32> to vector<8x256xf32>
    %cst_62 = arith.constant 5.000000e-01 : f32
    %140 = vector.broadcast %cst_62 : f32 to vector<8x256xf32>
    %141 = arith.mulf %140, %139 : vector<8x256xf32>
    %142 = math.tanh %141 : vector<8x256xf32>
    %cst_63 = arith.constant 1.000000e+00 : f32
    %143 = vector.broadcast %cst_63 : f32 to vector<8x256xf32>
    %144 = arith.addf %142, %143 : vector<8x256xf32>
    %cst_64 = arith.constant 5.000000e-01 : f32
    %145 = vector.broadcast %cst_64 : f32 to vector<8x256xf32>
    %146 = arith.mulf %145, %144 : vector<8x256xf32>
    %147 = vector.extract_strided_slice %138 {offsets = [0, 256], sizes = [8, 256], strides = [1, 1]} : vector<8x1024xf32> to vector<8x256xf32>
    %cst_65 = arith.constant 5.000000e-01 : f32
    %148 = vector.broadcast %cst_65 : f32 to vector<8x256xf32>
    %149 = arith.mulf %148, %147 : vector<8x256xf32>
    %150 = math.tanh %149 : vector<8x256xf32>
    %cst_66 = arith.constant 1.000000e+00 : f32
    %151 = vector.broadcast %cst_66 : f32 to vector<8x256xf32>
    %152 = arith.addf %150, %151 : vector<8x256xf32>
    %cst_67 = arith.constant 5.000000e-01 : f32
    %153 = vector.broadcast %cst_67 : f32 to vector<8x256xf32>
    %154 = arith.mulf %153, %152 : vector<8x256xf32>
    %155 = vector.extract_strided_slice %138 {offsets = [0, 512], sizes = [8, 256], strides = [1, 1]} : vector<8x1024xf32> to vector<8x256xf32>
    %156 = math.tanh %155 : vector<8x256xf32>
    %157 = vector.extract_strided_slice %138 {offsets = [0, 768], sizes = [8, 256], strides = [1, 1]} : vector<8x1024xf32> to vector<8x256xf32>
    %cst_68 = arith.constant 5.000000e-01 : f32
    %158 = vector.broadcast %cst_68 : f32 to vector<8x256xf32>
    %159 = arith.mulf %158, %157 : vector<8x256xf32>
    %160 = math.tanh %159 : vector<8x256xf32>
    %cst_69 = arith.constant 1.000000e+00 : f32
    %161 = vector.broadcast %cst_69 : f32 to vector<8x256xf32>
    %162 = arith.addf %160, %161 : vector<8x256xf32>
    %cst_70 = arith.constant 5.000000e-01 : f32
    %163 = vector.broadcast %cst_70 : f32 to vector<8x256xf32>
    %164 = arith.mulf %163, %162 : vector<8x256xf32>
    %165 = arith.mulf %154, %131 : vector<8x256xf32>
    %166 = arith.mulf %146, %156 : vector<8x256xf32>
    %167 = arith.addf %165, %166 : vector<8x256xf32>
    %168 = math.tanh %167 : vector<8x256xf32>
    %169 = arith.mulf %164, %168 : vector<8x256xf32>
    %c4_71 = arith.constant 4 : index
    %c0_72 = arith.constant 0 : index
    %c0_73 = arith.constant 0 : index
    %170 = vector.load %arg10[%c4_71, %c0_72, %c0_73] : memref<8x8x1024xf32, #tpu.memory_space<vmem>>, vector<1x8x1024xf32>
    %171 = vector.shape_cast %170 : vector<1x8x1024xf32> to vector<8x1024xf32>
    %172 = arith.truncf %169 : vector<8x256xf32> to vector<8x256xbf16>
    %cst_74 = arith.constant dense<0.000000e+00> : vector<8x1024xf32>
    %173 = tpu.matmul %172, %23, %cst_74 {dimension_numbers = #tpu.dot_dimension_numbers<[1], [0], [0], [1], [0, 0, 1, 1], [], []>} : vector<8x256xbf16>, vector<256x1024xbf16>, vector<8x1024xf32> -> vector<8x1024xf32>
    %174 = arith.addf %171, %173 : vector<8x1024xf32>
    %175 = vector.extract_strided_slice %174 {offsets = [0, 0], sizes = [8, 256], strides = [1, 1]} : vector<8x1024xf32> to vector<8x256xf32>
    %cst_75 = arith.constant 5.000000e-01 : f32
    %176 = vector.broadcast %cst_75 : f32 to vector<8x256xf32>
    %177 = arith.mulf %176, %175 : vector<8x256xf32>
    %178 = math.tanh %177 : vector<8x256xf32>
    %cst_76 = arith.constant 1.000000e+00 : f32
    %179 = vector.broadcast %cst_76 : f32 to vector<8x256xf32>
    %180 = arith.addf %178, %179 : vector<8x256xf32>
    %cst_77 = arith.constant 5.000000e-01 : f32
    %181 = vector.broadcast %cst_77 : f32 to vector<8x256xf32>
    %182 = arith.mulf %181, %180 : vector<8x256xf32>
    %183 = vector.extract_strided_slice %174 {offsets = [0, 256], sizes = [8, 256], strides = [1, 1]} : vector<8x1024xf32> to vector<8x256xf32>
    %cst_78 = arith.constant 5.000000e-01 : f32
    %184 = vector.broadcast %cst_78 : f32 to vector<8x256xf32>
    %185 = arith.mulf %184, %183 : vector<8x256xf32>
    %186 = math.tanh %185 : vector<8x256xf32>
    %cst_79 = arith.constant 1.000000e+00 : f32
    %187 = vector.broadcast %cst_79 : f32 to vector<8x256xf32>
    %188 = arith.addf %186, %187 : vector<8x256xf32>
    %cst_80 = arith.constant 5.000000e-01 : f32
    %189 = vector.broadcast %cst_80 : f32 to vector<8x256xf32>
    %190 = arith.mulf %189, %188 : vector<8x256xf32>
    %191 = vector.extract_strided_slice %174 {offsets = [0, 512], sizes = [8, 256], strides = [1, 1]} : vector<8x1024xf32> to vector<8x256xf32>
    %192 = math.tanh %191 : vector<8x256xf32>
    %193 = vector.extract_strided_slice %174 {offsets = [0, 768], sizes = [8, 256], strides = [1, 1]} : vector<8x1024xf32> to vector<8x256xf32>
    %cst_81 = arith.constant 5.000000e-01 : f32
    %194 = vector.broadcast %cst_81 : f32 to vector<8x256xf32>
    %195 = arith.mulf %194, %193 : vector<8x256xf32>
    %196 = math.tanh %195 : vector<8x256xf32>
    %cst_82 = arith.constant 1.000000e+00 : f32
    %197 = vector.broadcast %cst_82 : f32 to vector<8x256xf32>
    %198 = arith.addf %196, %197 : vector<8x256xf32>
    %cst_83 = arith.constant 5.000000e-01 : f32
    %199 = vector.broadcast %cst_83 : f32 to vector<8x256xf32>
    %200 = arith.mulf %199, %198 : vector<8x256xf32>
    %201 = arith.mulf %190, %167 : vector<8x256xf32>
    %202 = arith.mulf %182, %192 : vector<8x256xf32>
    %203 = arith.addf %201, %202 : vector<8x256xf32>
    %204 = math.tanh %203 : vector<8x256xf32>
    %205 = arith.mulf %200, %204 : vector<8x256xf32>
    %c5_84 = arith.constant 5 : index
    %c0_85 = arith.constant 0 : index
    %c0_86 = arith.constant 0 : index
    %206 = vector.load %arg10[%c5_84, %c0_85, %c0_86] : memref<8x8x1024xf32, #tpu.memory_space<vmem>>, vector<1x8x1024xf32>
    %207 = vector.shape_cast %206 : vector<1x8x1024xf32> to vector<8x1024xf32>
    %208 = arith.truncf %205 : vector<8x256xf32> to vector<8x256xbf16>
    %cst_87 = arith.constant dense<0.000000e+00> : vector<8x1024xf32>
    %209 = tpu.matmul %208, %23, %cst_87 {dimension_numbers = #tpu.dot_dimension_numbers<[1], [0], [0], [1], [0, 0, 1, 1], [], []>} : vector<8x256xbf16>, vector<256x1024xbf16>, vector<8x1024xf32> -> vector<8x1024xf32>
    %210 = arith.addf %207, %209 : vector<8x1024xf32>
    %211 = vector.extract_strided_slice %210 {offsets = [0, 0], sizes = [8, 256], strides = [1, 1]} : vector<8x1024xf32> to vector<8x256xf32>
    %cst_88 = arith.constant 5.000000e-01 : f32
    %212 = vector.broadcast %cst_88 : f32 to vector<8x256xf32>
    %213 = arith.mulf %212, %211 : vector<8x256xf32>
    %214 = math.tanh %213 : vector<8x256xf32>
    %cst_89 = arith.constant 1.000000e+00 : f32
    %215 = vector.broadcast %cst_89 : f32 to vector<8x256xf32>
    %216 = arith.addf %214, %215 : vector<8x256xf32>
    %cst_90 = arith.constant 5.000000e-01 : f32
    %217 = vector.broadcast %cst_90 : f32 to vector<8x256xf32>
    %218 = arith.mulf %217, %216 : vector<8x256xf32>
    %219 = vector.extract_strided_slice %210 {offsets = [0, 256], sizes = [8, 256], strides = [1, 1]} : vector<8x1024xf32> to vector<8x256xf32>
    %cst_91 = arith.constant 5.000000e-01 : f32
    %220 = vector.broadcast %cst_91 : f32 to vector<8x256xf32>
    %221 = arith.mulf %220, %219 : vector<8x256xf32>
    %222 = math.tanh %221 : vector<8x256xf32>
    %cst_92 = arith.constant 1.000000e+00 : f32
    %223 = vector.broadcast %cst_92 : f32 to vector<8x256xf32>
    %224 = arith.addf %222, %223 : vector<8x256xf32>
    %cst_93 = arith.constant 5.000000e-01 : f32
    %225 = vector.broadcast %cst_93 : f32 to vector<8x256xf32>
    %226 = arith.mulf %225, %224 : vector<8x256xf32>
    %227 = vector.extract_strided_slice %210 {offsets = [0, 512], sizes = [8, 256], strides = [1, 1]} : vector<8x1024xf32> to vector<8x256xf32>
    %228 = math.tanh %227 : vector<8x256xf32>
    %229 = vector.extract_strided_slice %210 {offsets = [0, 768], sizes = [8, 256], strides = [1, 1]} : vector<8x1024xf32> to vector<8x256xf32>
    %cst_94 = arith.constant 5.000000e-01 : f32
    %230 = vector.broadcast %cst_94 : f32 to vector<8x256xf32>
    %231 = arith.mulf %230, %229 : vector<8x256xf32>
    %232 = math.tanh %231 : vector<8x256xf32>
    %cst_95 = arith.constant 1.000000e+00 : f32
    %233 = vector.broadcast %cst_95 : f32 to vector<8x256xf32>
    %234 = arith.addf %232, %233 : vector<8x256xf32>
    %cst_96 = arith.constant 5.000000e-01 : f32
    %235 = vector.broadcast %cst_96 : f32 to vector<8x256xf32>
    %236 = arith.mulf %235, %234 : vector<8x256xf32>
    %237 = arith.mulf %226, %203 : vector<8x256xf32>
    %238 = arith.mulf %218, %228 : vector<8x256xf32>
    %239 = arith.addf %237, %238 : vector<8x256xf32>
    %240 = math.tanh %239 : vector<8x256xf32>
    %241 = arith.mulf %236, %240 : vector<8x256xf32>
    %c6_97 = arith.constant 6 : index
    %c0_98 = arith.constant 0 : index
    %c0_99 = arith.constant 0 : index
    %242 = vector.load %arg10[%c6_97, %c0_98, %c0_99] : memref<8x8x1024xf32, #tpu.memory_space<vmem>>, vector<1x8x1024xf32>
    %243 = vector.shape_cast %242 : vector<1x8x1024xf32> to vector<8x1024xf32>
    %244 = arith.truncf %241 : vector<8x256xf32> to vector<8x256xbf16>
    %cst_100 = arith.constant dense<0.000000e+00> : vector<8x1024xf32>
    %245 = tpu.matmul %244, %23, %cst_100 {dimension_numbers = #tpu.dot_dimension_numbers<[1], [0], [0], [1], [0, 0, 1, 1], [], []>} : vector<8x256xbf16>, vector<256x1024xbf16>, vector<8x1024xf32> -> vector<8x1024xf32>
    %246 = arith.addf %243, %245 : vector<8x1024xf32>
    %247 = vector.extract_strided_slice %246 {offsets = [0, 0], sizes = [8, 256], strides = [1, 1]} : vector<8x1024xf32> to vector<8x256xf32>
    %cst_101 = arith.constant 5.000000e-01 : f32
    %248 = vector.broadcast %cst_101 : f32 to vector<8x256xf32>
    %249 = arith.mulf %248, %247 : vector<8x256xf32>
    %250 = math.tanh %249 : vector<8x256xf32>
    %cst_102 = arith.constant 1.000000e+00 : f32
    %251 = vector.broadcast %cst_102 : f32 to vector<8x256xf32>
    %252 = arith.addf %250, %251 : vector<8x256xf32>
    %cst_103 = arith.constant 5.000000e-01 : f32
    %253 = vector.broadcast %cst_103 : f32 to vector<8x256xf32>
    %254 = arith.mulf %253, %252 : vector<8x256xf32>
    %255 = vector.extract_strided_slice %246 {offsets = [0, 256], sizes = [8, 256], strides = [1, 1]} : vector<8x1024xf32> to vector<8x256xf32>
    %cst_104 = arith.constant 5.000000e-01 : f32
    %256 = vector.broadcast %cst_104 : f32 to vector<8x256xf32>
    %257 = arith.mulf %256, %255 : vector<8x256xf32>
    %258 = math.tanh %257 : vector<8x256xf32>
    %cst_105 = arith.constant 1.000000e+00 : f32
    %259 = vector.broadcast %cst_105 : f32 to vector<8x256xf32>
    %260 = arith.addf %258, %259 : vector<8x256xf32>
    %cst_106 = arith.constant 5.000000e-01 : f32
    %261 = vector.broadcast %cst_106 : f32 to vector<8x256xf32>
    %262 = arith.mulf %261, %260 : vector<8x256xf32>
    %263 = vector.extract_strided_slice %246 {offsets = [0, 512], sizes = [8, 256], strides = [1, 1]} : vector<8x1024xf32> to vector<8x256xf32>
    %264 = math.tanh %263 : vector<8x256xf32>
    %265 = vector.extract_strided_slice %246 {offsets = [0, 768], sizes = [8, 256], strides = [1, 1]} : vector<8x1024xf32> to vector<8x256xf32>
    %cst_107 = arith.constant 5.000000e-01 : f32
    %266 = vector.broadcast %cst_107 : f32 to vector<8x256xf32>
    %267 = arith.mulf %266, %265 : vector<8x256xf32>
    %268 = math.tanh %267 : vector<8x256xf32>
    %cst_108 = arith.constant 1.000000e+00 : f32
    %269 = vector.broadcast %cst_108 : f32 to vector<8x256xf32>
    %270 = arith.addf %268, %269 : vector<8x256xf32>
    %cst_109 = arith.constant 5.000000e-01 : f32
    %271 = vector.broadcast %cst_109 : f32 to vector<8x256xf32>
    %272 = arith.mulf %271, %270 : vector<8x256xf32>
    %273 = arith.mulf %262, %239 : vector<8x256xf32>
    %274 = arith.mulf %254, %264 : vector<8x256xf32>
    %275 = arith.addf %273, %274 : vector<8x256xf32>
    %276 = math.tanh %275 : vector<8x256xf32>
    %277 = arith.mulf %272, %276 : vector<8x256xf32>
    %c7_110 = arith.constant 7 : index
    %c0_111 = arith.constant 0 : index
    %c0_112 = arith.constant 0 : index
    %278 = vector.load %arg10[%c7_110, %c0_111, %c0_112] : memref<8x8x1024xf32, #tpu.memory_space<vmem>>, vector<1x8x1024xf32>
    %279 = vector.shape_cast %278 : vector<1x8x1024xf32> to vector<8x1024xf32>
    %280 = arith.truncf %277 : vector<8x256xf32> to vector<8x256xbf16>
    %cst_113 = arith.constant dense<0.000000e+00> : vector<8x1024xf32>
    %281 = tpu.matmul %280, %23, %cst_113 {dimension_numbers = #tpu.dot_dimension_numbers<[1], [0], [0], [1], [0, 0, 1, 1], [], []>} : vector<8x256xbf16>, vector<256x1024xbf16>, vector<8x1024xf32> -> vector<8x1024xf32>
    %282 = arith.addf %279, %281 : vector<8x1024xf32>
    %283 = vector.extract_strided_slice %282 {offsets = [0, 0], sizes = [8, 256], strides = [1, 1]} : vector<8x1024xf32> to vector<8x256xf32>
    %cst_114 = arith.constant 5.000000e-01 : f32
    %284 = vector.broadcast %cst_114 : f32 to vector<8x256xf32>
    %285 = arith.mulf %284, %283 : vector<8x256xf32>
    %286 = math.tanh %285 : vector<8x256xf32>
    %cst_115 = arith.constant 1.000000e+00 : f32
    %287 = vector.broadcast %cst_115 : f32 to vector<8x256xf32>
    %288 = arith.addf %286, %287 : vector<8x256xf32>
    %cst_116 = arith.constant 5.000000e-01 : f32
    %289 = vector.broadcast %cst_116 : f32 to vector<8x256xf32>
    %290 = arith.mulf %289, %288 : vector<8x256xf32>
    %291 = vector.extract_strided_slice %282 {offsets = [0, 256], sizes = [8, 256], strides = [1, 1]} : vector<8x1024xf32> to vector<8x256xf32>
    %cst_117 = arith.constant 5.000000e-01 : f32
    %292 = vector.broadcast %cst_117 : f32 to vector<8x256xf32>
    %293 = arith.mulf %292, %291 : vector<8x256xf32>
    %294 = math.tanh %293 : vector<8x256xf32>
    %cst_118 = arith.constant 1.000000e+00 : f32
    %295 = vector.broadcast %cst_118 : f32 to vector<8x256xf32>
    %296 = arith.addf %294, %295 : vector<8x256xf32>
    %cst_119 = arith.constant 5.000000e-01 : f32
    %297 = vector.broadcast %cst_119 : f32 to vector<8x256xf32>
    %298 = arith.mulf %297, %296 : vector<8x256xf32>
    %299 = vector.extract_strided_slice %282 {offsets = [0, 512], sizes = [8, 256], strides = [1, 1]} : vector<8x1024xf32> to vector<8x256xf32>
    %300 = math.tanh %299 : vector<8x256xf32>
    %301 = vector.extract_strided_slice %282 {offsets = [0, 768], sizes = [8, 256], strides = [1, 1]} : vector<8x1024xf32> to vector<8x256xf32>
    %cst_120 = arith.constant 5.000000e-01 : f32
    %302 = vector.broadcast %cst_120 : f32 to vector<8x256xf32>
    %303 = arith.mulf %302, %301 : vector<8x256xf32>
    %304 = math.tanh %303 : vector<8x256xf32>
    %cst_121 = arith.constant 1.000000e+00 : f32
    %305 = vector.broadcast %cst_121 : f32 to vector<8x256xf32>
    %306 = arith.addf %304, %305 : vector<8x256xf32>
    %cst_122 = arith.constant 5.000000e-01 : f32
    %307 = vector.broadcast %cst_122 : f32 to vector<8x256xf32>
    %308 = arith.mulf %307, %306 : vector<8x256xf32>
    %309 = arith.mulf %298, %275 : vector<8x256xf32>
    %310 = arith.mulf %290, %300 : vector<8x256xf32>
    %311 = arith.addf %309, %310 : vector<8x256xf32>
    %312 = math.tanh %311 : vector<8x256xf32>
    %313 = arith.mulf %308, %312 : vector<8x256xf32>
    %314 = arith.truncf %313 : vector<8x256xf32> to vector<8x256xbf16>
    %c0_123 = arith.constant 0 : index
    %c0_124 = arith.constant 0 : index
    %315 = vector.load %arg6[%c0_123, %c0_124] : memref<256x256xbf16, #tpu.memory_space<vmem>>, vector<256x256xbf16>
    %cst_125 = arith.constant dense<0.000000e+00> : vector<8x256xf32>
    %316 = tpu.matmul %314, %315, %cst_125 {dimension_numbers = #tpu.dot_dimension_numbers<[1], [0], [0], [1], [0, 0, 1, 1], [], []>} : vector<8x256xbf16>, vector<256x256xbf16>, vector<8x256xf32> -> vector<8x256xf32>
    %c0_126 = arith.constant 0 : index
    %c0_127 = arith.constant 0 : index
    %317 = vector.load %arg2[%c0_126, %c0_127] : memref<8x256xf32, #tpu.memory_space<vmem>>, vector<8x256xf32>
    %318 = arith.truncf %317 : vector<8x256xf32> to vector<8x256xbf16>
    %c0_128 = arith.constant 0 : index
    %c0_129 = arith.constant 0 : index
    %319 = vector.load %arg7[%c0_128, %c0_129] : memref<256x256xbf16, #tpu.memory_space<vmem>>, vector<256x256xbf16>
    %cst_130 = arith.constant dense<0.000000e+00> : vector<8x256xf32>
    %320 = tpu.matmul %318, %319, %cst_130 {dimension_numbers = #tpu.dot_dimension_numbers<[1], [0], [0], [1], [0, 0, 1, 1], [], []>} : vector<8x256xbf16>, vector<256x256xbf16>, vector<8x256xf32> -> vector<8x256xf32>
    %321 = arith.addf %316, %320 : vector<8x256xf32>
    %c0_131 = arith.constant 0 : index
    %c0_132 = arith.constant 0 : index
    %322 = vector.load %arg8[%c0_131, %c0_132] : memref<1x256xf32, #tpu.memory_space<vmem>>, vector<1x256xf32>
    %323 = vector.broadcast %322 : vector<1x256xf32> to vector<8x256xf32>
    %324 = arith.addf %321, %323 : vector<8x256xf32>
    %c0_133 = arith.constant 0 : index
    %c0_134 = arith.constant 0 : index
    %325 = vector.load %arg9[%c0_133, %c0_134] : memref<8x256xf32, #tpu.memory_space<vmem>>, vector<8x256xf32>
    tpu.vector_store %arg9[%c0_133, %c0_134], %324 {strides = array<i32>} : memref<8x256xf32, #tpu.memory_space<vmem>>, vector<8x256xf32>,
    return
  }
  func.func @transform_0(%arg0: i32) -> (i32, i32) {
    %c0_i32 = arith.constant 0 : i32
    %c0_i32_0 = arith.constant 0 : i32
    return %arg0, %c0_i32 : i32, i32
  }
  func.func @transform_1(%arg0: i32) -> (i32, i32) {
    %c0_i32 = arith.constant 0 : i32
    %c0_i32_0 = arith.constant 0 : i32
    return %arg0, %c0_i32 : i32, i32
  }
  func.func @transform_2(%arg0: i32) -> (i32, i32) {
    %c0_i32 = arith.constant 0 : i32
    %c0_i32_0 = arith.constant 0 : i32
    %c0_i32_1 = arith.constant 0 : i32
    return %c0_i32, %c0_i32_0 : i32, i32
  }
  func.func @transform_3(%arg0: i32) -> (i32, i32) {
    %c0_i32 = arith.constant 0 : i32
    %c0_i32_0 = arith.constant 0 : i32
    %c0_i32_1 = arith.constant 0 : i32
    return %c0_i32, %c0_i32_0 : i32, i32
  }
  func.func @transform_4(%arg0: i32) -> (i32, i32) {
    %c0_i32 = arith.constant 0 : i32
    %c0_i32_0 = arith.constant 0 : i32
    %c0_i32_1 = arith.constant 0 : i32
    return %c0_i32, %c0_i32_0 : i32, i32
  }
  func.func @transform_5(%arg0: i32) -> (i32, i32) {
    %c0_i32 = arith.constant 0 : i32
    %c0_i32_0 = arith.constant 0 : i32
    %c0_i32_1 = arith.constant 0 : i32
    return %c0_i32, %c0_i32_0 : i32, i32
  }
  func.func @transform_6(%arg0: i32) -> (i32, i32) {
    %c0_i32 = arith.constant 0 : i32
    %c0_i32_0 = arith.constant 0 : i32
    %c0_i32_1 = arith.constant 0 : i32
    return %c0_i32, %c0_i32_0 : i32, i32
  }
  func.func @transform_7(%arg0: i32) -> (i32, i32) {
    %c0_i32 = arith.constant 0 : i32
    %c0_i32_0 = arith.constant 0 : i32
    %c0_i32_1 = arith.constant 0 : i32
    return %c0_i32, %c0_i32_0 : i32, i32
  }
  func.func @transform_8(%arg0: i32) -> (i32, i32) {
    %c0_i32 = arith.constant 0 : i32
    %c0_i32_0 = arith.constant 0 : i32
    return %arg0, %c0_i32 : i32, i32
  }
}

</mosaic_0001>

<llo_original>
// kernel: tpu_custom_call.1
$region0: #{tpu_custom_call.1}
  #allocation0 [shape = 'u32[]', space=smem, size = 0x4, offset = 0x4, fixed_abs, tag = 'smem constant byte address 0x4 - core index']
  #allocation1 [shape = 'u32[144,128]{1,0:T(1,128)}', space=vmem, size = 0x12000, scoped, tag = 'internal scratch']
  #allocation2 [shape = 'f32[8,8,1024]{2,1,0:T(8,128)}', space=vmem, size = 0x40000, scoped, tag = 'scratch operand']
  %s0 = inlined_call_operand.hbm [shape: s32[8,8], index: 0, kind: input, shape index: {}]
  %s1 = inlined_call_operand.hbm [shape: f32[8,256], index: 1, kind: input, shape index: {}]
  %s2 = inlined_call_operand.hbm [shape: bf16[128,1024], index: 2, kind: input, shape index: {}]
  %s3 = inlined_call_operand.hbm [shape: bf16[256,1024], index: 3, kind: input, shape index: {}]
  %s4 = inlined_call_operand.vmem [shape: f32[1,1024], index: 4, kind: input, shape index: {}]
  %s5 = inlined_call_operand.hbm [shape: bf16[256,256], index: 5, kind: input, shape index: {}]
  %s6 = inlined_call_operand.hbm [shape: bf16[256,256], index: 6, kind: input, shape index: {}]
  %s7 = inlined_call_operand.vmem [shape: f32[1,256], index: 7, kind: input, shape index: {}]
  %s8 = inlined_call_operand.hbm [shape: f32[8,256], index: 8, kind: output, shape index: {}]
  %s9 = sld [smem:[#allocation0]]
  $region66: #{tpu_custom_call.1} parent=0
    _
  %s11 = ssub.s32 1, %s9
  %s12 = scalar_select 0, %s11, %s9
  $region1: #{tpu_custom_call.1} parent=0
    #allocation3 [shape = 'u8[4096]{0}', space=vmem, size = 0x1000, scoped, tag = 'input window, operand 0, single buffered']
    #allocation4 [shape = 's32[1]{0}', space=sflag, size = 0x4, scoped, tag = 'scoped memory for tpu_custom_call.1']
    #allocation5 [shape = 's32[1]{0}', space=sflag, size = 0x4, scoped, tag = 'scoped memory for tpu_custom_call.1']
    #allocation6 [shape = 'u8[8192]{0}', space=vmem, size = 0x2000, scoped, tag = 'input window, operand 1, single buffered']
    #allocation7 [shape = 's32[1]{0}', space=sflag, size = 0x4, scoped, tag = 'scoped memory for tpu_custom_call.1']
    #allocation8 [shape = 'u8[262144]{0}', space=vmem, size = 0x40000, scoped, tag = 'input window, operand 2, single buffered']
    #allocation9 [shape = 'u8[524288]{0}', space=vmem, size = 0x80000, scoped, tag = 'input window, operand 3, single buffered']
    #allocation10 [shape = 's32[1]{0}', space=sflag, size = 0x4, scoped, tag = 'scoped memory for tpu_custom_call.1']
    #allocation11 [shape = 'u8[131072]{0}', space=vmem, size = 0x20000, scoped, tag = 'input window, operand 5, single buffered']
    #allocation12 [shape = 'u8[131072]{0}', space=vmem, size = 0x20000, scoped, tag = 'input window, operand 6, single buffered']
    #allocation13 [shape = 's32[1]{0}', space=sflag, size = 0x4, scoped, tag = 'scoped memory for tpu_custom_call.1']
    #allocation14 [shape = 'u8[8192]{0}', space=vmem, size = 0x2000, scoped, tag = 'output window, operand 0, single buffered']
    %13 = vsyncpa [#allocation4], 0
    %14 = vsyncpa [#allocation7], 0
    %15 = vsyncpa [#allocation10], 0
    %16 = vsyncpa [#allocation13], 0
    %17 = vsyncpa [#allocation5], 0
    // Predicated region
    $region2: #{tpu_custom_call.1} parent=1 // pred_check
      _
    $region3: #{tpu_custom_call.1} parent=1 // pred_check_branch
      %19 = sbr.rel (0) target = $region5
    $region4: #{tpu_custom_call.1} parent=1 // pred_region
      %s21 = ssub.s32 128, 128
      %22 = vsyncadd [#allocation4], %s21
      %s24 = sshll.u32 [#allocation3], 4
      %s25 = int_to_ptr.vmem [resolvable:$true] %s24
      %27 = dma.hbm_to_vmem [thread:$0]  %s0, 128, %s25, [#allocation4]
    $region5: #{tpu_custom_call.1} parent=1 // pred_fallthru
      _
    // Predicated region
    $region6: #{tpu_custom_call.1} parent=1 // pred_check
      _
    $region7: #{tpu_custom_call.1} parent=1 // pred_check_branch
      %29 = sbr.rel (0) target = $region9
    $region8: #{tpu_custom_call.1} parent=1 // pred_region
      %s31 = ssub.s32 256, 256
      %32 = vsyncadd [#allocation7], %s31
      %s34 = sshll.u32 [#allocation6], 4
      %s35 = int_to_ptr.vmem [resolvable:$true] %s34
      %37 = dma.hbm_to_vmem [thread:$0]  %s1, 256, %s35, [#allocation7]
    $region9: #{tpu_custom_call.1} parent=1 // pred_fallthru
      _
    // Predicated region
    $region10: #{tpu_custom_call.1} parent=1 // pred_check
      _
    $region11: #{tpu_custom_call.1} parent=1 // pred_check_branch
      %39 = sbr.rel (0) target = $region13
    $region12: #{tpu_custom_call.1} parent=1 // pred_region
      %s41 = ssub.s32 8192, 8192
      %42 = vsyncadd [#allocation7], %s41
      %s43 = sshll.u32 [#allocation8], 4
      %s44 = int_to_ptr.vmem [resolvable:$true] %s43
      %49 = dma.hbm_to_vmem [thread:$0]  %s2, 8192, %s44, [#allocation7], 512, 512, 32
    $region13: #{tpu_custom_call.1} parent=1 // pred_fallthru
      _
    // Predicated region
    $region14: #{tpu_custom_call.1} parent=1 // pred_check
      _
    $region15: #{tpu_custom_call.1} parent=1 // pred_check_branch
      %51 = sbr.rel (0) target = $region17
    $region16: #{tpu_custom_call.1} parent=1 // pred_region
      %s53 = ssub.s32 16384, 16384
      %54 = vsyncadd [#allocation10], %s53
      %s55 = sshll.u32 [#allocation9], 4
      %s56 = int_to_ptr.vmem [resolvable:$true] %s55
      %61 = dma.hbm_to_vmem [thread:$0]  %s3, 16384, %s56, [#allocation10], 512, 512, 32
    $region17: #{tpu_custom_call.1} parent=1 // pred_fallthru
      _
    // Predicated region
    $region18: #{tpu_custom_call.1} parent=1 // pred_check
      _
    $region19: #{tpu_custom_call.1} parent=1 // pred_check_branch
      %63 = sbr.rel (0) target = $region21
    $region20: #{tpu_custom_call.1} parent=1 // pred_region
      _
    $region21: #{tpu_custom_call.1} parent=1 // pred_fallthru
      _
    // Predicated region
    $region22: #{tpu_custom_call.1} parent=1 // pred_check
      _
    $region23: #{tpu_custom_call.1} parent=1 // pred_check_branch
      %65 = sbr.rel (0) target = $region25
    $region24: #{tpu_custom_call.1} parent=1 // pred_region
      %s67 = ssub.s32 4096, 4096
      %68 = vsyncadd [#allocation10], %s67
      %s69 = sshll.u32 [#allocation11], 4
      %s70 = int_to_ptr.vmem [resolvable:$true] %s69
      %75 = dma.hbm_to_vmem [thread:$0]  %s5, 4096, %s70, [#allocation10], 128, 128, 8
    $region25: #{tpu_custom_call.1} parent=1 // pred_fallthru
      _
    // Predicated region
    $region26: #{tpu_custom_call.1} parent=1 // pred_check
      _
    $region27: #{tpu_custom_call.1} parent=1 // pred_check_branch
      %77 = sbr.rel (0) target = $region29
    $region28: #{tpu_custom_call.1} parent=1 // pred_region
      %s79 = ssub.s32 4096, 4096
      %80 = vsyncadd [#allocation13], %s79
      %s81 = sshll.u32 [#allocation12], 4
      %s82 = int_to_ptr.vmem [resolvable:$true] %s81
      %87 = dma.hbm_to_vmem [thread:$0]  %s6, 4096, %s82, [#allocation13], 128, 128, 8
    $region29: #{tpu_custom_call.1} parent=1 // pred_fallthru
      _
    // Predicated region
    $region30: #{tpu_custom_call.1} parent=1 // pred_check
      _
    $region31: #{tpu_custom_call.1} parent=1 // pred_check_branch
      %89 = sbr.rel (0) target = $region33
    $region32: #{tpu_custom_call.1} parent=1 // pred_region
      _
    $region33: #{tpu_custom_call.1} parent=1 // pred_fallthru
      _
    // Predicated region
    $region34: #{tpu_custom_call.1} parent=1 // pred_check
      _
    $region35: #{tpu_custom_call.1} parent=1 // pred_check_branch
      %91 = sbr.rel (0) target = $region37
    $region36: #{tpu_custom_call.1} parent=1 // pred_region
      %92 = dma.done [#allocation4], 128
    $region37: #{tpu_custom_call.1} parent=1 // pred_fallthru
      _
    // Predicated region
    $region38: #{tpu_custom_call.1} parent=1 // pred_check
      _
    $region39: #{tpu_custom_call.1} parent=1 // pred_check_branch
      %94 = sbr.rel (0) target = $region41
    $region40: #{tpu_custom_call.1} parent=1 // pred_region
      %95 = dma.done [#allocation7], 256
    $region41: #{tpu_custom_call.1} parent=1 // pred_fallthru
      _
    // Predicated region
    $region42: #{tpu_custom_call.1} parent=1 // pred_check
      _
    $region43: #{tpu_custom_call.1} parent=1 // pred_check_branch
      %97 = sbr.rel (0) target = $region45
    $region44: #{tpu_custom_call.1} parent=1 // pred_region
      %98 = dma.done [#allocation7], 8192
    $region45: #{tpu_custom_call.1} parent=1 // pred_fallthru
      _
    // Predicated region
    $region46: #{tpu_custom_call.1} parent=1 // pred_check
      _
    $region47: #{tpu_custom_call.1} parent=1 // pred_check_branch
      %100 = sbr.rel (0) target = $region49
    $region48: #{tpu_custom_call.1} parent=1 // pred_region
      %101 = dma.done [#allocation10], 16384
    $region49: #{tpu_custom_call.1} parent=1 // pred_fallthru
      _
    // Predicated region
    $region50: #{tpu_custom_call.1} parent=1 // pred_check
      _
    $region51: #{tpu_custom_call.1} parent=1 // pred_check_branch
      %103 = sbr.rel (0) target = $region53
    $region52: #{tpu_custom_call.1} parent=1 // pred_region
      %104 = dma.done [#allocation10], 4096
    $region53: #{tpu_custom_call.1} parent=1 // pred_fallthru
      _
    // Predicated region
    $region54: #{tpu_custom_call.1} parent=1 // pred_check
      _
    $region55: #{tpu_custom_call.1} parent=1 // pred_check_branch
      %106 = sbr.rel (0) target = $region57
    $region56: #{tpu_custom_call.1} parent=1 // pred_region
      %107 = dma.done [#allocation13], 4096
    $region57: #{tpu_custom_call.1} parent=1 // pred_fallthru
      _
    %v109 = vld [vmem:[#allocation3] sm:$0xff]
    %110 = vrot.lane.b32.xlu0 %v109, 127
    %v111 = vpop.permute.xlu0 %110
    %112 = vrot.lane.b32.xlu0 %v109, 126
    %v113 = vpop.permute.xlu0 %112
    %114 = vrot.lane.b32.xlu0 %v109, 125
    %v115 = vpop.permute.xlu0 %114
    %116 = vrot.lane.b32.xlu0 %v109, 124
    %v117 = vpop.permute.xlu0 %116
    %118 = vrot.lane.b32.xlu0 %v109, 123
    %v119 = vpop.permute.xlu0 %118
    %120 = vrot.lane.b32.xlu0 %v109, 122
    %v121 = vpop.permute.xlu0 %120
    %122 = vrot.lane.b32.xlu0 %v109, 121
    %v123 = vpop.permute.xlu0 %122
    %v124 = vlaneseq
    %v125 = vand.u32 %v124, 127
    %126 = vset.pattern.permute.xlu0 0
    %127 = vperm.xlu0 %126, %v109
    %v128 = vpop.permute.xlu0 %127
    %129 = vset.pattern.permute.xlu0 0
    %130 = vperm.xlu0 %129, %v111
    %v131 = vpop.permute.xlu0 %130
    %132 = vset.pattern.permute.xlu0 0
    %133 = vperm.xlu0 %132, %v113
    %v134 = vpop.permute.xlu0 %133
    %135 = vset.pattern.permute.xlu0 0
    %136 = vperm.xlu0 %135, %v115
    %v137 = vpop.permute.xlu0 %136
    %138 = vset.pattern.permute.xlu0 0
    %139 = vperm.xlu0 %138, %v117
    %v140 = vpop.permute.xlu0 %139
    %141 = vset.pattern.permute.xlu0 0
    %142 = vperm.xlu0 %141, %v119
    %v143 = vpop.permute.xlu0 %142
    %144 = vset.pattern.permute.xlu0 0
    %145 = vperm.xlu0 %144, %v121
    %v146 = vpop.permute.xlu0 %145
    %147 = vset.pattern.permute.xlu0 0
    %148 = vperm.xlu0 %147, %v123
    %v149 = vpop.permute.xlu0 %148
    %vm150 = vcmp.eq.s32.totalorder %v128, %v125
    %vm151 = vcmp.eq.s32.totalorder %v131, %v125
    %vm152 = vcmp.eq.s32.totalorder %v134, %v125
    %vm153 = vcmp.eq.s32.totalorder %v137, %v125
    %vm154 = vcmp.eq.s32.totalorder %v140, %v125
    %vm155 = vcmp.eq.s32.totalorder %v143, %v125
    %vm156 = vcmp.eq.s32.totalorder %v146, %v125
    %vm157 = vcmp.eq.s32.totalorder %v149, %v125
    %v158 = vsel %vm150, 1, 0
    %v159 = vsel %vm151, 1, 0
    %v160 = vsel %vm152, 1, 0
    %v161 = vsel %vm153, 1, 0
    %v162 = vsel %vm154, 1, 0
    %v163 = vsel %vm155, 1, 0
    %v164 = vsel %vm156, 1, 0
    %v165 = vsel %vm157, 1, 0
    %v166 = vcvt.s32.f32 %v158
    %v167 = vcvt.s32.f32 %v159
    %v168 = vcvt.s32.f32 %v160
    %v169 = vcvt.s32.f32 %v161
    %v170 = vcvt.s32.f32 %v162
    %v171 = vcvt.s32.f32 %v163
    %v172 = vcvt.s32.f32 %v164
    %v173 = vcvt.s32.f32 %v165
    %v174 = vpack.c.bf16 %v167, %v166
    %v175 = vpack.c.bf16 %v169, %v168
    %v176 = vpack.c.bf16 %v171, %v170
    %v177 = vpack.c.bf16 %v173, %v172
    %v178 = vld [vmem:[#allocation8] sm:$0xff]
    %v179 = vld [vmem:[#allocation8 + $0x8] sm:$0xff]
    %v180 = vld [vmem:[#allocation8 + $0x10] sm:$0xff]
    %v181 = vld [vmem:[#allocation8 + $0x18] sm:$0xff]
    %v182 = vld [vmem:[#allocation8 + $0x20] sm:$0xff]
    %v183 = vld [vmem:[#allocation8 + $0x28] sm:$0xff]
    %v184 = vld [vmem:[#allocation8 + $0x30] sm:$0xff]
    %v185 = vld [vmem:[#allocation8 + $0x38] sm:$0xff]
    %v186 = vld [vmem:[#allocation8 + $0x40] sm:$0xff]
    %v187 = vld [vmem:[#allocation8 + $0x48] sm:$0xff]
    %v188 = vld [vmem:[#allocation8 + $0x50] sm:$0xff]
    %v189 = vld [vmem:[#allocation8 + $0x58] sm:$0xff]
    %v190 = vld [vmem:[#allocation8 + $0x60] sm:$0xff]
    %v191 = vld [vmem:[#allocation8 + $0x68] sm:$0xff]
    %v192 = vld [vmem:[#allocation8 + $0x70] sm:$0xff]
    %v193 = vld [vmem:[#allocation8 + $0x78] sm:$0xff]
    %v194 = vld [vmem:[#allocation8 + $0x80] sm:$0xff]
    %v195 = vld [vmem:[#allocation8 + $0x88] sm:$0xff]
    %v196 = vld [vmem:[#allocation8 + $0x90] sm:$0xff]
    %v197 = vld [vmem:[#allocation8 + $0x98] sm:$0xff]
    %v198 = vld [vmem:[#allocation8 + $0xa0] sm:$0xff]
    %v199 = vld [vmem:[#allocation8 + $0xa8] sm:$0xff]
    %v200 = vld [vmem:[#allocation8 + $0xb0] sm:$0xff]
    %v201 = vld [vmem:[#allocation8 + $0xb8] sm:$0xff]
    %v202 = vld [vmem:[#allocation8 + $0xc0] sm:$0xff]
    %v203 = vld [vmem:[#allocation8 + $0xc8] sm:$0xff]
    %v204 = vld [vmem:[#allocation8 + $0xd0] sm:$0xff]
    %v205 = vld [vmem:[#allocation8 + $0xd8] sm:$0xff]
    %v206 = vld [vmem:[#allocation8 + $0xe0] sm:$0xff]
    %v207 = vld [vmem:[#allocation8 + $0xe8] sm:$0xff]
    %v208 = vld [vmem:[#allocation8 + $0xf0] sm:$0xff]
    %v209 = vld [vmem:[#allocation8 + $0xf8] sm:$0xff]
    %v210 = vld [vmem:[#allocation8 + $0x100] sm:$0xff]
    %v211 = vld [vmem:[#allocation8 + $0x108] sm:$0xff]
    %v212 = vld [vmem:[#allocation8 + $0x110] sm:$0xff]
    %v213 = vld [vmem:[#allocation8 + $0x118] sm:$0xff]
    %v214 = vld [vmem:[#allocation8 + $0x120] sm:$0xff]
    %v215 = vld [vmem:[#allocation8 + $0x128] sm:$0xff]
    %v216 = vld [vmem:[#allocation8 + $0x130] sm:$0xff]
    %v217 = vld [vmem:[#allocation8 + $0x138] sm:$0xff]
    %v218 = vld [vmem:[#allocation8 + $0x140] sm:$0xff]
    %v219 = vld [vmem:[#allocation8 + $0x148] sm:$0xff]
    %v220 = vld [vmem:[#allocation8 + $0x150] sm:$0xff]
    %v221 = vld [vmem:[#allocation8 + $0x158] sm:$0xff]
    %v222 = vld [vmem:[#allocation8 + $0x160] sm:$0xff]
    %v223 = vld [vmem:[#allocation8 + $0x168] sm:$0xff]
    %v224 = vld [vmem:[#allocation8 + $0x170] sm:$0xff]
    %v225 = vld [vmem:[#allocation8 + $0x178] sm:$0xff]
    %v226 = vld [vmem:[#allocation8 + $0x180] sm:$0xff]
    %v227 = vld [vmem:[#allocation8 + $0x188] sm:$0xff]
    %v228 = vld [vmem:[#allocation8 + $0x190] sm:$0xff]
    %v229 = vld [vmem:[#allocation8 + $0x198] sm:$0xff]
    %v230 = vld [vmem:[#allocation8 + $0x1a0] sm:$0xff]
    %v231 = vld [vmem:[#allocation8 + $0x1a8] sm:$0xff]
    %v232 = vld [vmem:[#allocation8 + $0x1b0] sm:$0xff]
    %v233 = vld [vmem:[#allocation8 + $0x1b8] sm:$0xff]
    %v234 = vld [vmem:[#allocation8 + $0x1c0] sm:$0xff]
    %v235 = vld [vmem:[#allocation8 + $0x1c8] sm:$0xff]
    %v236 = vld [vmem:[#allocation8 + $0x1d0] sm:$0xff]
    %v237 = vld [vmem:[#allocation8 + $0x1d8] sm:$0xff]
    %v238 = vld [vmem:[#allocation8 + $0x1e0] sm:$0xff]
    %v239 = vld [vmem:[#allocation8 + $0x1e8] sm:$0xff]
    %v240 = vld [vmem:[#allocation8 + $0x1f0] sm:$0xff]
    %v241 = vld [vmem:[#allocation8 + $0x1f8] sm:$0xff]
    %v306 = vunpack.c.l.b16 %v178
    %v307 = vunpack.c.h.b16 %v178
    %v308 = vunpack.c.l.b16 %v179
    %v309 = vunpack.c.h.b16 %v179
    %v310 = vunpack.c.l.b16 %v180
    %v311 = vunpack.c.h.b16 %v180
    %v312 = vunpack.c.l.b16 %v181
    %v313 = vunpack.c.h.b16 %v181
    %v314 = vunpack.c.l.b16 %v182
    %v315 = vunpack.c.h.b16 %v182
    %v316 = vunpack.c.l.b16 %v183
    %v317 = vunpack.c.h.b16 %v183
    %v318 = vunpack.c.l.b16 %v184
    %v319 = vunpack.c.h.b16 %v184
    %v320 = vunpack.c.l.b16 %v185
    %v321 = vunpack.c.h.b16 %v185
    %v322 = vunpack.c.l.b16 %v186
    %v323 = vunpack.c.h.b16 %v186
    %v324 = vunpack.c.l.b16 %v187
    %v325 = vunpack.c.h.b16 %v187
    %v326 = vunpack.c.l.b16 %v188
    %v327 = vunpack.c.h.b16 %v188
    %v328 = vunpack.c.l.b16 %v189
    %v329 = vunpack.c.h.b16 %v189
    %v330 = vunpack.c.l.b16 %v190
    %v331 = vunpack.c.h.b16 %v190
    %v332 = vunpack.c.l.b16 %v191
    %v333 = vunpack.c.h.b16 %v191
    %v334 = vunpack.c.l.b16 %v192
    %v335 = vunpack.c.h.b16 %v192
    %v336 = vunpack.c.l.b16 %v193
    %v337 = vunpack.c.h.b16 %v193
    %v338 = vunpack.c.l.b16 %v194
    %v339 = vunpack.c.h.b16 %v194
    %v340 = vunpack.c.l.b16 %v195
    %v341 = vunpack.c.h.b16 %v195
    %v342 = vunpack.c.l.b16 %v196
    %v343 = vunpack.c.h.b16 %v196
    %v344 = vunpack.c.l.b16 %v197
    %v345 = vunpack.c.h.b16 %v197
    %v346 = vunpack.c.l.b16 %v198
    %v347 = vunpack.c.h.b16 %v198
    %v348 = vunpack.c.l.b16 %v199
    %v349 = vunpack.c.h.b16 %v199
    %v350 = vunpack.c.l.b16 %v200
    %v351 = vunpack.c.h.b16 %v200
    %v352 = vunpack.c.l.b16 %v201
    %v353 = vunpack.c.h.b16 %v201
    %v354 = vunpack.c.l.b16 %v202
    %v355 = vunpack.c.h.b16 %v202
    %v356 = vunpack.c.l.b16 %v203
    %v357 = vunpack.c.h.b16 %v203
    %v358 = vunpack.c.l.b16 %v204
    %v359 = vunpack.c.h.b16 %v204
    %v360 = vunpack.c.l.b16 %v205
    %v361 = vunpack.c.h.b16 %v205
    %v362 = vunpack.c.l.b16 %v206
    %v363 = vunpack.c.h.b16 %v206
    %v364 = vunpack.c.l.b16 %v207
    %v365 = vunpack.c.h.b16 %v207
    %v366 = vunpack.c.l.b16 %v208
    %v367 = vunpack.c.h.b16 %v208
    %v368 = vunpack.c.l.b16 %v209
    %v369 = vunpack.c.h.b16 %v209
    %v370 = vunpack.c.l.b16 %v210
    %v371 = vunpack.c.h.b16 %v210
    %v372 = vunpack.c.l.b16 %v211
    %v373 = vunpack.c.h.b16 %v211
    %v374 = vunpack.c.l.b16 %v212
    %v375 = vunpack.c.h.b16 %v212
    %v376 = vunpack.c.l.b16 %v213
    %v377 = vunpack.c.h.b16 %v213
    %v378 = vunpack.c.l.b16 %v214
    %v379 = vunpack.c.h.b16 %v214
    %v380 = vunpack.c.l.b16 %v215
    %v381 = vunpack.c.h.b16 %v215
    %v382 = vunpack.c.l.b16 %v216
    %v383 = vunpack.c.h.b16 %v216
    %v384 = vunpack.c.l.b16 %v217
    %v385 = vunpack.c.h.b16 %v217
    %v386 = vunpack.c.l.b16 %v218
    %v387 = vunpack.c.h.b16 %v218
    %v388 = vunpack.c.l.b16 %v219
    %v389 = vunpack.c.h.b16 %v219
    %v390 = vunpack.c.l.b16 %v220
    %v391 = vunpack.c.h.b16 %v220
    %v392 = vunpack.c.l.b16 %v221
    %v393 = vunpack.c.h.b16 %v221
    %v394 = vunpack.c.l.b16 %v222
    %v395 = vunpack.c.h.b16 %v222
    %v396 = vunpack.c.l.b16 %v223
    %v397 = vunpack.c.h.b16 %v223
    %v398 = vunpack.c.l.b16 %v224
    %v399 = vunpack.c.h.b16 %v224
    %v400 = vunpack.c.l.b16 %v225
    %v401 = vunpack.c.h.b16 %v225
    %v402 = vunpack.c.l.b16 %v226
    %v403 = vunpack.c.h.b16 %v226
    %v404 = vunpack.c.l.b16 %v227
    %v405 = vunpack.c.h.b16 %v227
    %v406 = vunpack.c.l.b16 %v228
    %v407 = vunpack.c.h.b16 %v228
    %v408 = vunpack.c.l.b16 %v229
    %v409 = vunpack.c.h.b16 %v229
    %v410 = vunpack.c.l.b16 %v230
    %v411 = vunpack.c.h.b16 %v230
    %v412 = vunpack.c.l.b16 %v231
    %v413 = vunpack.c.h.b16 %v231
    %v414 = vunpack.c.l.b16 %v232
    %v415 = vunpack.c.h.b16 %v232
    %v416 = vunpack.c.l.b16 %v233
    %v417 = vunpack.c.h.b16 %v233
    %v418 = vunpack.c.l.b16 %v234
    %v419 = vunpack.c.h.b16 %v234
    %v420 = vunpack.c.l.b16 %v235
    %v421 = vunpack.c.h.b16 %v235
    %v422 = vunpack.c.l.b16 %v236
    %v423 = vunpack.c.h.b16 %v236
    %v424 = vunpack.c.l.b16 %v237
    %v425 = vunpack.c.h.b16 %v237
    %v426 = vunpack.c.l.b16 %v238
    %v427 = vunpack.c.h.b16 %v238
    %v428 = vunpack.c.l.b16 %v239
    %v429 = vunpack.c.h.b16 %v239
    %v430 = vunpack.c.l.b16 %v240
    %v431 = vunpack.c.h.b16 %v240
    %v432 = vunpack.c.l.b16 %v241
    %v433 = vunpack.c.h.b16 %v241
    %v434 = vpack.c.b16 %v314, %v306
    %v435 = vpack.c.b16 %v315, %v307
    %v436 = vpack.c.b16 %v316, %v308
    %v437 = vpack.c.b16 %v317, %v309
    %v438 = vpack.c.b16 %v318, %v310
    %v439 = vpack.c.b16 %v319, %v311
    %v440 = vpack.c.b16 %v320, %v312
    %v441 = vpack.c.b16 %v321, %v313
    %v442 = vpack.c.b16 %v330, %v322
    %v443 = vpack.c.b16 %v331, %v323
    %v444 = vpack.c.b16 %v332, %v324
    %v445 = vpack.c.b16 %v333, %v325
    %v446 = vpack.c.b16 %v334, %v326
    %v447 = vpack.c.b16 %v335, %v327
    %v448 = vpack.c.b16 %v336, %v328
    %v449 = vpack.c.b16 %v337, %v329
    %v450 = vpack.c.b16 %v346, %v338
    %v451 = vpack.c.b16 %v347, %v339
    %v452 = vpack.c.b16 %v348, %v340
    %v453 = vpack.c.b16 %v349, %v341
    %v454 = vpack.c.b16 %v350, %v342
    %v455 = vpack.c.b16 %v351, %v343
    %v456 = vpack.c.b16 %v352, %v344
    %v457 = vpack.c.b16 %v353, %v345
    %v458 = vpack.c.b16 %v362, %v354
    %v459 = vpack.c.b16 %v363, %v355
    %v460 = vpack.c.b16 %v364, %v356
    %v461 = vpack.c.b16 %v365, %v357
    %v462 = vpack.c.b16 %v366, %v358
    %v463 = vpack.c.b16 %v367, %v359
    %v464 = vpack.c.b16 %v368, %v360
    %v465 = vpack.c.b16 %v369, %v361
    %v466 = vpack.c.b16 %v378, %v370
    %v467 = vpack.c.b16 %v379, %v371
    %v468 = vpack.c.b16 %v380, %v372
    %v469 = vpack.c.b16 %v381, %v373
    %v470 = vpack.c.b16 %v382, %v374
    %v471 = vpack.c.b16 %v383, %v375
    %v472 = vpack.c.b16 %v384, %v376
    %v473 = vpack.c.b16 %v385, %v377
    %v474 = vpack.c.b16 %v394, %v386
    %v475 = vpack.c.b16 %v395, %v387
    %v476 = vpack.c.b16 %v396, %v388
    %v477 = vpack.c.b16 %v397, %v389
    %v478 = vpack.c.b16 %v398, %v390
    %v479 = vpack.c.b16 %v399, %v391
    %v480 = vpack.c.b16 %v400, %v392
    %v481 = vpack.c.b16 %v401, %v393
    %v482 = vpack.c.b16 %v410, %v402
    %v483 = vpack.c.b16 %v411, %v403
    %v484 = vpack.c.b16 %v412, %v404
    %v485 = vpack.c.b16 %v413, %v405
    %v486 = vpack.c.b16 %v414, %v406
    %v487 = vpack.c.b16 %v415, %v407
    %v488 = vpack.c.b16 %v416, %v408
    %v489 = vpack.c.b16 %v417, %v409
    %v490 = vpack.c.b16 %v426, %v418
    %v491 = vpack.c.b16 %v427, %v419
    %v492 = vpack.c.b16 %v428, %v420
    %v493 = vpack.c.b16 %v429, %v421
    %v494 = vpack.c.b16 %v430, %v422
    %v495 = vpack.c.b16 %v431, %v423
    %v496 = vpack.c.b16 %v432, %v424
    %v497 = vpack.c.b16 %v433, %v425
    %562 = vmatprep.subr.bf16.mxu0 %v435
    %563 = vmatpush1.bf16.msra.mxu0 %v434
    %564 = vmatprep.subr.bf16.mxu0 %v443
    %565 = vmatpush1.bf16.msra.mxu0 %v442
    %566 = vmatprep.subr.bf16.mxu0 %v451
    %567 = vmatpush1.bf16.msra.mxu0 %v450
    %568 = vmatprep.subr.bf16.mxu0 %v459
    %569 = vmatpush1.bf16.msra.mxu0 %v458
    %570 = vmatprep.subr.bf16.mxu0 %v467
    %571 = vmatpush1.bf16.msra.mxu0 %v466
    %572 = vmatprep.subr.bf16.mxu0 %v475
    %573 = vmatpush1.bf16.msra.mxu0 %v474
    %574 = vmatprep.subr.bf16.mxu0 %v483
    %575 = vmatpush1.bf16.msra.mxu0 %v482
    %576 = vmatprep.subr.bf16.mxu0 %v491
    %577 = vmatpush1.bf16.msra.mxu0 %v490
    %578 = vmatprep.subr.bf16.mxu0 0
    %579 = vmatpush1.bf16.msra.mxu0 0
    %580 = vmatprep.subr.bf16.mxu0 0
    %581 = vmatpush1.bf16.msra.mxu0 0
    %582 = vmatprep.subr.bf16.mxu0 0
    %583 = vmatpush1.bf16.msra.mxu0 0
    %584 = vmatprep.subr.bf16.mxu0 0
    %585 = vmatpush1.bf16.msra.mxu0 0
    %586 = vmatprep.subr.bf16.mxu0 0
    %587 = vmatpush1.bf16.msra.mxu0 0
    %588 = vmatprep.subr.bf16.mxu0 0
    %589 = vmatpush1.bf16.msra.mxu0 0
    %590 = vmatprep.subr.bf16.mxu0 0
    %591 = vmatpush1.bf16.msra.mxu0 0
    %592 = vmatprep.subr.bf16.mxu0 0
    %593 = vmatpush1.bf16.msra.mxu0 0
    %594 = vmatprep.mubr.bf16.mxu0 0
    %595 = vmatmul.mubr.bf16.gmra.mrb[0].mxu0 %v174
    %v596 = vpop.f32.mrb[0].mxu0
    %v597 = vadd.f32 0.0, %v596
    %v598 = vpop.f32.mrb[0].mxu0
    %v599 = vadd.f32 0.0, %v598
    %v600 = vpop.f32.mrb[0].mxu0
    %v601 = vadd.f32 0.0, %v600
    %v602 = vpop.f32.mrb[0].mxu0
    %v603 = vadd.f32 0.0, %v602
    %604 = vmatprep.mubr.bf16.mxu0 0
    %605 = vmatmul.mubr.bf16.gmra.mrb[0].mxu0 %v175
    %v606 = vpop.f32.mrb[0].mxu0
    %v607 = vadd.f32 0.0, %v606
    %v608 = vpop.f32.mrb[0].mxu0
    %v609 = vadd.f32 0.0, %v608
    %v610 = vpop.f32.mrb[0].mxu0
    %v611 = vadd.f32 0.0, %v610
    %v612 = vpop.f32.mrb[0].mxu0
    %v613 = vadd.f32 0.0, %v612
    %614 = vmatprep.mubr.bf16.mxu0 0
    %615 = vmatmul.mubr.bf16.gmra.mrb[0].mxu0 %v176
    %v616 = vpop.f32.mrb[0].mxu0
    %v617 = vadd.f32 0.0, %v616
    %v618 = vpop.f32.mrb[0].mxu0
    %v619 = vadd.f32 0.0, %v618
    %v620 = vpop.f32.mrb[0].mxu0
    %v621 = vadd.f32 0.0, %v620
    %v622 = vpop.f32.mrb[0].mxu0
    %v623 = vadd.f32 0.0, %v622
    %624 = vmatprep.mubr.bf16.mxu0 0
    %625 = vmatmul.mubr.bf16.gmra.mrb[0].mxu0 %v177
    %v626 = vpop.f32.mrb[0].mxu0
    %v627 = vadd.f32 0.0, %v626
    %v628 = vpop.f32.mrb[0].mxu0
    %v629 = vadd.f32 0.0, %v628
    %v630 = vpop.f32.mrb[0].mxu0
    %v631 = vadd.f32 0.0, %v630
    %v632 = vpop.f32.mrb[0].mxu0
    %v633 = vadd.f32 0.0, %v632
    %634 = vdwg.mxu0
    %635 = vmatprep.subr.bf16.mxu0 %v437
    %636 = vmatpush1.bf16.msra.mxu0 %v436
    %637 = vmatprep.subr.bf16.mxu0 %v445
    %638 = vmatpush1.bf16.msra.mxu0 %v444
    %639 = vmatprep.subr.bf16.mxu0 %v453
    %640 = vmatpush1.bf16.msra.mxu0 %v452
    %641 = vmatprep.subr.bf16.mxu0 %v461
    %642 = vmatpush1.bf16.msra.mxu0 %v460
    %643 = vmatprep.subr.bf16.mxu0 %v469
    %644 = vmatpush1.bf16.msra.mxu0 %v468
    %645 = vmatprep.subr.bf16.mxu0 %v477
    %646 = vmatpush1.bf16.msra.mxu0 %v476
    %647 = vmatprep.subr.bf16.mxu0 %v485
    %648 = vmatpush1.bf16.msra.mxu0 %v484
    %649 = vmatprep.subr.bf16.mxu0 %v493
    %650 = vmatpush1.bf16.msra.mxu0 %v492
    %651 = vmatprep.subr.bf16.mxu0 0
    %652 = vmatpush1.bf16.msra.mxu0 0
    %653 = vmatprep.subr.bf16.mxu0 0
    %654 = vmatpush1.bf16.msra.mxu0 0
    %655 = vmatprep.subr.bf16.mxu0 0
    %656 = vmatpush1.bf16.msra.mxu0 0
    %657 = vmatprep.subr.bf16.mxu0 0
    %658 = vmatpush1.bf16.msra.mxu0 0
    %659 = vmatprep.subr.bf16.mxu0 0
    %660 = vmatpush1.bf16.msra.mxu0 0
    %661 = vmatprep.subr.bf16.mxu0 0
    %662 = vmatpush1.bf16.msra.mxu0 0
    %663 = vmatprep.subr.bf16.mxu0 0
    %664 = vmatpush1.bf16.msra.mxu0 0
    %665 = vmatprep.subr.bf16.mxu0 0
    %666 = vmatpush1.bf16.msra.mxu0 0
    %667 = vmatprep.mubr.bf16.mxu0 0
    %668 = vmatmul.mubr.bf16.gmra.mrb[0].mxu0 %v174
    %v669 = vpop.f32.mrb[0].mxu0
    %v670 = vadd.f32 0.0, %v669
    %v671 = vpop.f32.mrb[0].mxu0
    %v672 = vadd.f32 0.0, %v671
    %v673 = vpop.f32.mrb[0].mxu0
    %v674 = vadd.f32 0.0, %v673
    %v675 = vpop.f32.mrb[0].mxu0
    %v676 = vadd.f32 0.0, %v675
    %677 = vmatprep.mubr.bf16.mxu0 0
    %678 = vmatmul.mubr.bf16.gmra.mrb[0].mxu0 %v175
    %v679 = vpop.f32.mrb[0].mxu0
    %v680 = vadd.f32 0.0, %v679
    %v681 = vpop.f32.mrb[0].mxu0
    %v682 = vadd.f32 0.0, %v681
    %v683 = vpop.f32.mrb[0].mxu0
    %v684 = vadd.f32 0.0, %v683
    %v685 = vpop.f32.mrb[0].mxu0
    %v686 = vadd.f32 0.0, %v685
    %687 = vmatprep.mubr.bf16.mxu0 0
    %688 = vmatmul.mubr.bf16.gmra.mrb[0].mxu0 %v176
    %v689 = vpop.f32.mrb[0].mxu0
    %v690 = vadd.f32 0.0, %v689
    %v691 = vpop.f32.mrb[0].mxu0
    %v692 = vadd.f32 0.0, %v691
    %v693 = vpop.f32.mrb[0].mxu0
    %v694 = vadd.f32 0.0, %v693
    %v695 = vpop.f32.mrb[0].mxu0
    %v696 = vadd.f32 0.0, %v695
    %697 = vmatprep.mubr.bf16.mxu0 0
    %698 = vmatmul.mubr.bf16.gmra.mrb[0].mxu0 %v177
    %v699 = vpop.f32.mrb[0].mxu0
    %v700 = vadd.f32 0.0, %v699
    %v701 = vpop.f32.mrb[0].mxu0
    %v702 = vadd.f32 0.0, %v701
    %v703 = vpop.f32.mrb[0].mxu0
    %v704 = vadd.f32 0.0, %v703
    %v705 = vpop.f32.mrb[0].mxu0
    %v706 = vadd.f32 0.0, %v705
    %707 = vdwg.mxu0
    %708 = vmatprep.subr.bf16.mxu0 %v439
    %709 = vmatpush1.bf16.msra.mxu0 %v438
    %710 = vmatprep.subr.bf16.mxu0 %v447
    %711 = vmatpush1.bf16.msra.mxu0 %v446
    %712 = vmatprep.subr.bf16.mxu0 %v455
    %713 = vmatpush1.bf16.msra.mxu0 %v454
    %714 = vmatprep.subr.bf16.mxu0 %v463
    %715 = vmatpush1.bf16.msra.mxu0 %v462
    %716 = vmatprep.subr.bf16.mxu0 %v471
    %717 = vmatpush1.bf16.msra.mxu0 %v470
    %718 = vmatprep.subr.bf16.mxu0 %v479
    %719 = vmatpush1.bf16.msra.mxu0 %v478
    %720 = vmatprep.subr.bf16.mxu0 %v487
    %721 = vmatpush1.bf16.msra.mxu0 %v486
    %722 = vmatprep.subr.bf16.mxu0 %v495
    %723 = vmatpush1.bf16.msra.mxu0 %v494
    %724 = vmatprep.subr.bf16.mxu0 0
    %725 = vmatpush1.bf16.msra.mxu0 0
    %726 = vmatprep.subr.bf16.mxu0 0
    %727 = vmatpush1.bf16.msra.mxu0 0
    %728 = vmatprep.subr.bf16.mxu0 0
    %729 = vmatpush1.bf16.msra.mxu0 0
    %730 = vmatprep.subr.bf16.mxu0 0
    %731 = vmatpush1.bf16.msra.mxu0 0
    %732 = vmatprep.subr.bf16.mxu0 0
    %733 = vmatpush1.bf16.msra.mxu0 0
    %734 = vmatprep.subr.bf16.mxu0 0
    %735 = vmatpush1.bf16.msra.mxu0 0
    %736 = vmatprep.subr.bf16.mxu0 0
    %737 = vmatpush1.bf16.msra.mxu0 0
    %738 = vmatprep.subr.bf16.mxu0 0
    %739 = vmatpush1.bf16.msra.mxu0 0
    %740 = vmatprep.mubr.bf16.mxu0 0
    %741 = vmatmul.mubr.bf16.gmra.mrb[0].mxu0 %v174
    %v742 = vpop.f32.mrb[0].mxu0
    %v743 = vadd.f32 0.0, %v742
    %v744 = vpop.f32.mrb[0].mxu0
    %v745 = vadd.f32 0.0, %v744
    %v746 = vpop.f32.mrb[0].mxu0
    %v747 = vadd.f32 0.0, %v746
    %v748 = vpop.f32.mrb[0].mxu0
    %v749 = vadd.f32 0.0, %v748
    %750 = vmatprep.mubr.bf16.mxu0 0
    %751 = vmatmul.mubr.bf16.gmra.mrb[0].mxu0 %v175
    %v752 = vpop.f32.mrb[0].mxu0
    %v753 = vadd.f32 0.0, %v752
    %v754 = vpop.f32.mrb[0].mxu0
    %v755 = vadd.f32 0.0, %v754
    %v756 = vpop.f32.mrb[0].mxu0
    %v757 = vadd.f32 0.0, %v756
    %v758 = vpop.f32.mrb[0].mxu0
    %v759 = vadd.f32 0.0, %v758
    %760 = vmatprep.mubr.bf16.mxu0 0
    %761 = vmatmul.mubr.bf16.gmra.mrb[0].mxu0 %v176
    %v762 = vpop.f32.mrb[0].mxu0
    %v763 = vadd.f32 0.0, %v762
    %v764 = vpop.f32.mrb[0].mxu0
    %v765 = vadd.f32 0.0, %v764
    %v766 = vpop.f32.mrb[0].mxu0
    %v767 = vadd.f32 0.0, %v766
    %v768 = vpop.f32.mrb[0].mxu0
    %v769 = vadd.f32 0.0, %v768
    %770 = vmatprep.mubr.bf16.mxu0 0
    %771 = vmatmul.mubr.bf16.gmra.mrb[0].mxu0 %v177
    %v772 = vpop.f32.mrb[0].mxu0
    %v773 = vadd.f32 0.0, %v772
    %v774 = vpop.f32.mrb[0].mxu0
    %v775 = vadd.f32 0.0, %v774
    %v776 = vpop.f32.mrb[0].mxu0
    %v777 = vadd.f32 0.0, %v776
    %v778 = vpop.f32.mrb[0].mxu0
    %v779 = vadd.f32 0.0, %v778
    %780 = vdwg.mxu0
    %781 = vmatprep.subr.bf16.mxu0 %v441
    %782 = vmatpush1.bf16.msra.mxu0 %v440
    %783 = vmatprep.subr.bf16.mxu0 %v449
    %784 = vmatpush1.bf16.msra.mxu0 %v448
    %785 = vmatprep.subr.bf16.mxu0 %v457
    %786 = vmatpush1.bf16.msra.mxu0 %v456
    %787 = vmatprep.subr.bf16.mxu0 %v465
    %788 = vmatpush1.bf16.msra.mxu0 %v464
    %789 = vmatprep.subr.bf16.mxu0 %v473
    %790 = vmatpush1.bf16.msra.mxu0 %v472
    %791 = vmatprep.subr.bf16.mxu0 %v481
    %792 = vmatpush1.bf16.msra.mxu0 %v480
    %793 = vmatprep.subr.bf16.mxu0 %v489
    %794 = vmatpush1.bf16.msra.mxu0 %v488
    %795 = vmatprep.subr.bf16.mxu0 %v497
    %796 = vmatpush1.bf16.msra.mxu0 %v496
    %797 = vmatprep.subr.bf16.mxu0 0
    %798 = vmatpush1.bf16.msra.mxu0 0
    %799 = vmatprep.subr.bf16.mxu0 0
    %800 = vmatpush1.bf16.msra.mxu0 0
    %801 = vmatprep.subr.bf16.mxu0 0
    %802 = vmatpush1.bf16.msra.mxu0 0
    %803 = vmatprep.subr.bf16.mxu0 0
    %804 = vmatpush1.bf16.msra.mxu0 0
    %805 = vmatprep.subr.bf16.mxu0 0
    %806 = vmatpush1.bf16.msra.mxu0 0
    %807 = vmatprep.subr.bf16.mxu0 0
    %808 = vmatpush1.bf16.msra.mxu0 0
    %809 = vmatprep.subr.bf16.mxu0 0
    %810 = vmatpush1.bf16.msra.mxu0 0
    %811 = vmatprep.subr.bf16.mxu0 0
    %812 = vmatpush1.bf16.msra.mxu0 0
    %813 = vmatprep.mubr.bf16.mxu0 0
    %814 = vmatmul.mubr.bf16.gmra.mrb[0].mxu0 %v174
    %v815 = vpop.f32.mrb[0].mxu0
    %v816 = vadd.f32 0.0, %v815
    %v817 = vpop.f32.mrb[0].mxu0
    %v818 = vadd.f32 0.0, %v817
    %v819 = vpop.f32.mrb[0].mxu0
    %v820 = vadd.f32 0.0, %v819
    %v821 = vpop.f32.mrb[0].mxu0
    %v822 = vadd.f32 0.0, %v821
    %823 = vmatprep.mubr.bf16.mxu0 0
    %824 = vmatmul.mubr.bf16.gmra.mrb[0].mxu0 %v175
    %v825 = vpop.f32.mrb[0].mxu0
    %v826 = vadd.f32 0.0, %v825
    %v827 = vpop.f32.mrb[0].mxu0
    %v828 = vadd.f32 0.0, %v827
    %v829 = vpop.f32.mrb[0].mxu0
    %v830 = vadd.f32 0.0, %v829
    %v831 = vpop.f32.mrb[0].mxu0
    %v832 = vadd.f32 0.0, %v831
    %833 = vmatprep.mubr.bf16.mxu0 0
    %834 = vmatmul.mubr.bf16.gmra.mrb[0].mxu0 %v176
    %v835 = vpop.f32.mrb[0].mxu0
    %v836 = vadd.f32 0.0, %v835
    %v837 = vpop.f32.mrb[0].mxu0
    %v838 = vadd.f32 0.0, %v837
    %v839 = vpop.f32.mrb[0].mxu0
    %v840 = vadd.f32 0.0, %v839
    %v841 = vpop.f32.mrb[0].mxu0
    %v842 = vadd.f32 0.0, %v841
    %843 = vmatprep.mubr.bf16.mxu0 0
    %844 = vmatmul.mubr.bf16.gmra.mrb[0].mxu0 %v177
    %v845 = vpop.f32.mrb[0].mxu0
    %v846 = vadd.f32 0.0, %v845
    %v847 = vpop.f32.mrb[0].mxu0
    %v848 = vadd.f32 0.0, %v847
    %v849 = vpop.f32.mrb[0].mxu0
    %v850 = vadd.f32 0.0, %v849
    %v851 = vpop.f32.mrb[0].mxu0
    %v852 = vadd.f32 0.0, %v851
    %853 = vdwg.mxu0
    %v854 = vld [vmem:[%s4] sm:$0xff]
    %v856 = vlaneseq
    %v857 = vshrl.u32 %v856, 7
    %v858 = vsub.s32 0, %v857
    %v859 = vrot.slane %v854, %v858
    %v860 = vlaneseq
    %v861 = vshrl.u32 %v860, 7
    %v862 = vsub.s32 1, %v861
    %v863 = vrot.slane %v854, %v862
    %v864 = vlaneseq
    %v865 = vshrl.u32 %v864, 7
    %v866 = vsub.s32 2, %v865
    %v867 = vrot.slane %v854, %v866
    %v868 = vlaneseq
    %v869 = vshrl.u32 %v868, 7
    %v870 = vsub.s32 3, %v869
    %v871 = vrot.slane %v854, %v870
    %v872 = vlaneseq
    %v873 = vshrl.u32 %v872, 7
    %v874 = vsub.s32 4, %v873
    %v875 = vrot.slane %v854, %v874
    %v876 = vlaneseq
    %v877 = vshrl.u32 %v876, 7
    %v878 = vsub.s32 5, %v877
    %v879 = vrot.slane %v854, %v878
    %v880 = vlaneseq
    %v881 = vshrl.u32 %v880, 7
    %v882 = vsub.s32 6, %v881
    %v883 = vrot.slane %v854, %v882
    %v884 = vlaneseq
    %v885 = vshrl.u32 %v884, 7
    %v886 = vsub.s32 7, %v885
    %v887 = vrot.slane %v854, %v886
    %v896 = vadd.f32 %v597, %v859
    %v897 = vadd.f32 %v599, %v863
    %v898 = vadd.f32 %v670, %v867
    %v899 = vadd.f32 %v672, %v871
    %v900 = vadd.f32 %v743, %v875
    %v901 = vadd.f32 %v745, %v879
    %v902 = vadd.f32 %v816, %v883
    %v903 = vadd.f32 %v818, %v887
    %v904 = vadd.f32 %v601, %v859
    %v905 = vadd.f32 %v603, %v863
    %v906 = vadd.f32 %v674, %v867
    %v907 = vadd.f32 %v676, %v871
    %v908 = vadd.f32 %v747, %v875
    %v909 = vadd.f32 %v749, %v879
    %v910 = vadd.f32 %v820, %v883
    %v911 = vadd.f32 %v822, %v887
    %v912 = vadd.f32 %v607, %v859
    %v913 = vadd.f32 %v609, %v863
    %v914 = vadd.f32 %v680, %v867
    %v915 = vadd.f32 %v682, %v871
    %v916 = vadd.f32 %v753, %v875
    %v917 = vadd.f32 %v755, %v879
    %v918 = vadd.f32 %v826, %v883
    %v919 = vadd.f32 %v828, %v887
    %v920 = vadd.f32 %v611, %v859
    %v921 = vadd.f32 %v613, %v863
    %v922 = vadd.f32 %v684, %v867
    %v923 = vadd.f32 %v686, %v871
    %v924 = vadd.f32 %v757, %v875
    %v925 = vadd.f32 %v759, %v879
    %v926 = vadd.f32 %v830, %v883
    %v927 = vadd.f32 %v832, %v887
    %v928 = vadd.f32 %v617, %v859
    %v929 = vadd.f32 %v619, %v863
    %v930 = vadd.f32 %v690, %v867
    %v931 = vadd.f32 %v692, %v871
    %v932 = vadd.f32 %v763, %v875
    %v933 = vadd.f32 %v765, %v879
    %v934 = vadd.f32 %v836, %v883
    %v935 = vadd.f32 %v838, %v887
    %v936 = vadd.f32 %v621, %v859
    %v937 = vadd.f32 %v623, %v863
    %v938 = vadd.f32 %v694, %v867
    %v939 = vadd.f32 %v696, %v871
    %v940 = vadd.f32 %v767, %v875
    %v941 = vadd.f32 %v769, %v879
    %v942 = vadd.f32 %v840, %v883
    %v943 = vadd.f32 %v842, %v887
    %v944 = vadd.f32 %v627, %v859
    %v945 = vadd.f32 %v629, %v863
    %v946 = vadd.f32 %v700, %v867
    %v947 = vadd.f32 %v702, %v871
    %v948 = vadd.f32 %v773, %v875
    %v949 = vadd.f32 %v775, %v879
    %v950 = vadd.f32 %v846, %v883
    %v951 = vadd.f32 %v848, %v887
    %v952 = vadd.f32 %v631, %v859
    %v953 = vadd.f32 %v633, %v863
    %v954 = vadd.f32 %v704, %v867
    %v955 = vadd.f32 %v706, %v871
    %v956 = vadd.f32 %v777, %v875
    %v957 = vadd.f32 %v779, %v879
    %v958 = vadd.f32 %v850, %v883
    %v959 = vadd.f32 %v852, %v887
    %960 = vst [vmem:[#allocation2] sm:$0xff] %v896
    %961 = vst [vmem:[#allocation2 + $0x8] sm:$0xff] %v897
    %962 = vst [vmem:[#allocation2 + $0x10] sm:$0xff] %v898
    %963 = vst [vmem:[#allocation2 + $0x18] sm:$0xff] %v899
    %964 = vst [vmem:[#allocation2 + $0x20] sm:$0xff] %v900
    %965 = vst [vmem:[#allocation2 + $0x28] sm:$0xff] %v901
    %966 = vst [vmem:[#allocation2 + $0x30] sm:$0xff] %v902
    %967 = vst [vmem:[#allocation2 + $0x38] sm:$0xff] %v903
    %968 = vst [vmem:[#allocation2 + $0x40] sm:$0xff] %v904
    %969 = vst [vmem:[#allocation2 + $0x48] sm:$0xff] %v905
    %970 = vst [vmem:[#allocation2 + $0x50] sm:$0xff] %v906
    %971 = vst [vmem:[#allocation2 + $0x58] sm:$0xff] %v907
    %972 = vst [vmem:[#allocation2 + $0x60] sm:$0xff] %v908
    %973 = vst [vmem:[#allocation2 + $0x68] sm:$0xff] %v909
    %974 = vst [vmem:[#allocation2 + $0x70] sm:$0xff] %v910
    %975 = vst [vmem:[#allocation2 + $0x78] sm:$0xff] %v911
    %976 = vst [vmem:[#allocation2 + $0x80] sm:$0xff] %v912
    %977 = vst [vmem:[#allocation2 + $0x88] sm:$0xff] %v913
    %978 = vst [vmem:[#allocation2 + $0x90] sm:$0xff] %v914
    %979 = vst [vmem:[#allocation2 + $0x98] sm:$0xff] %v915
    %980 = vst [vmem:[#allocation2 + $0xa0] sm:$0xff] %v916
    %981 = vst [vmem:[#allocation2 + $0xa8] sm:$0xff] %v917
    %982 = vst [vmem:[#allocation2 + $0xb0] sm:$0xff] %v918
    %983 = vst [vmem:[#allocation2 + $0xb8] sm:$0xff] %v919
    %984 = vst [vmem:[#allocation2 + $0xc0] sm:$0xff] %v920
    %985 = vst [vmem:[#allocation2 + $0xc8] sm:$0xff] %v921
    %986 = vst [vmem:[#allocation2 + $0xd0] sm:$0xff] %v922
    %987 = vst [vmem:[#allocation2 + $0xd8] sm:$0xff] %v923
    %988 = vst [vmem:[#allocation2 + $0xe0] sm:$0xff] %v924
    %989 = vst [vmem:[#allocation2 + $0xe8] sm:$0xff] %v925
    %990 = vst [vmem:[#allocation2 + $0xf0] sm:$0xff] %v926
    %991 = vst [vmem:[#allocation2 + $0xf8] sm:$0xff] %v927
    %992 = vst [vmem:[#allocation2 + $0x100] sm:$0xff] %v928
    %993 = vst [vmem:[#allocation2 + $0x108] sm:$0xff] %v929
    %994 = vst [vmem:[#allocation2 + $0x110] sm:$0xff] %v930
    %995 = vst [vmem:[#allocation2 + $0x118] sm:$0xff] %v931
    %996 = vst [vmem:[#allocation2 + $0x120] sm:$0xff] %v932
    %997 = vst [vmem:[#allocation2 + $0x128] sm:$0xff] %v933
    %998 = vst [vmem:[#allocation2 + $0x130] sm:$0xff] %v934
    %999 = vst [vmem:[#allocation2 + $0x138] sm:$0xff] %v935
    %1000 = vst [vmem:[#allocation2 + $0x140] sm:$0xff] %v936
    %1001 = vst [vmem:[#allocation2 + $0x148] sm:$0xff] %v937
    %1002 = vst [vmem:[#allocation2 + $0x150] sm:$0xff] %v938
    %1003 = vst [vmem:[#allocation2 + $0x158] sm:$0xff] %v939
    %1004 = vst [vmem:[#allocation2 + $0x160] sm:$0xff] %v940
    %1005 = vst [vmem:[#allocation2 + $0x168] sm:$0xff] %v941
    %1006 = vst [vmem:[#allocation2 + $0x170] sm:$0xff] %v942
    %1007 = vst [vmem:[#allocation2 + $0x178] sm:$0xff] %v943
    %1008 = vst [vmem:[#allocation2 + $0x180] sm:$0xff] %v944
    %1009 = vst [vmem:[#allocation2 + $0x188] sm:$0xff] %v945
    %1010 = vst [vmem:[#allocation2 + $0x190] sm:$0xff] %v946
    %1011 = vst [vmem:[#allocation2 + $0x198] sm:$0xff] %v947
    %1012 = vst [vmem:[#allocation2 + $0x1a0] sm:$0xff] %v948
    %1013 = vst [vmem:[#allocation2 + $0x1a8] sm:$0xff] %v949
    %1014 = vst [vmem:[#allocation2 + $0x1b0] sm:$0xff] %v950
    %1015 = vst [vmem:[#allocation2 + $0x1b8] sm:$0xff] %v951
    %1016 = vst [vmem:[#allocation2 + $0x1c0] sm:$0xff] %v952
    %1017 = vst [vmem:[#allocation2 + $0x1c8] sm:$0xff] %v953
    %1018 = vst [vmem:[#allocation2 + $0x1d0] sm:$0xff] %v954
    %1019 = vst [vmem:[#allocation2 + $0x1d8] sm:$0xff] %v955
    %1020 = vst [vmem:[#allocation2 + $0x1e0] sm:$0xff] %v956
    %1021 = vst [vmem:[#allocation2 + $0x1e8] sm:$0xff] %v957
    %1022 = vst [vmem:[#allocation2 + $0x1f0] sm:$0xff] %v958
    %1023 = vst [vmem:[#allocation2 + $0x1f8] sm:$0xff] %v959
    %v1024 = vld [vmem:[#allocation9] sm:$0xff]
    %v1025 = vld [vmem:[#allocation9 + $0x8] sm:$0xff]
    %v1026 = vld [vmem:[#allocation9 + $0x10] sm:$0xff]
    %v1027 = vld [vmem:[#allocation9 + $0x18] sm:$0xff]
    %v1028 = vld [vmem:[#allocation9 + $0x20] sm:$0xff]
    %v1029 = vld [vmem:[#allocation9 + $0x28] sm:$0xff]
    %v1030 = vld [vmem:[#allocation9 + $0x30] sm:$0xff]
    %v1031 = vld [vmem:[#allocation9 + $0x38] sm:$0xff]
    %v1032 = vld [vmem:[#allocation9 + $0x40] sm:$0xff]
    %v1033 = vld [vmem:[#allocation9 + $0x48] sm:$0xff]
    %v1034 = vld [vmem:[#allocation9 + $0x50] sm:$0xff]
    %v1035 = vld [vmem:[#allocation9 + $0x58] sm:$0xff]
    %v1036 = vld [vmem:[#allocation9 + $0x60] sm:$0xff]
    %v1037 = vld [vmem:[#allocation9 + $0x68] sm:$0xff]
    %v1038 = vld [vmem:[#allocation9 + $0x70] sm:$0xff]
    %v1039 = vld [vmem:[#allocation9 + $0x78] sm:$0xff]
    %v1040 = vld [vmem:[#allocation9 + $0x80] sm:$0xff]
    %v1041 = vld [vmem:[#allocation9 + $0x88] sm:$0xff]
    %v1042 = vld [vmem:[#allocation9 + $0x90] sm:$0xff]
    %v1043 = vld [vmem:[#allocation9 + $0x98] sm:$0xff]
    %v1044 = vld [vmem:[#allocation9 + $0xa0] sm:$0xff]
    %v1045 = vld [vmem:[#allocation9 + $0xa8] sm:$0xff]
    %v1046 = vld [vmem:[#allocation9 + $0xb0] sm:$0xff]
    %v1047 = vld [vmem:[#allocation9 + $0xb8] sm:$0xff]
    %v1048 = vld [vmem:[#allocation9 + $0xc0] sm:$0xff]
    %v1049 = vld [vmem:[#allocation9 + $0xc8] sm:$0xff]
    %v1050 = vld [vmem:[#allocation9 + $0xd0] sm:$0xff]
    %v1051 = vld [vmem:[#allocation9 + $0xd8] sm:$0xff]
    %v1052 = vld [vmem:[#allocation9 + $0xe0] sm:$0xff]
    %v1053 = vld [vmem:[#allocation9 + $0xe8] sm:$0xff]
    %v1054 = vld [vmem:[#allocation9 + $0xf0] sm:$0xff]
    %v1055 = vld [vmem:[#allocation9 + $0xf8] sm:$0xff]
    %v1056 = vld [vmem:[#allocation9 + $0x100] sm:$0xff]
    %v1057 = vld [vmem:[#allocation9 + $0x108] sm:$0xff]
    %v1058 = vld [vmem:[#allocation9 + $0x110] sm:$0xff]
    %v1059 = vld [vmem:[#allocation9 + $0x118] sm:$0xff]
    %v1060 = vld [vmem:[#allocation9 + $0x120] sm:$0xff]
    %v1061 = vld [vmem:[#allocation9 + $0x128] sm:$0xff]
    %v1062 = vld [vmem:[#allocation9 + $0x130] sm:$0xff]
    %v1063 = vld [vmem:[#allocation9 + $0x138] sm:$0xff]
    %v1064 = vld [vmem:[#allocation9 + $0x140] sm:$0xff]
    %v1065 = vld [vmem:[#allocation9 + $0x148] sm:$0xff]
    %v1066 = vld [vmem:[#allocation9 + $0x150] sm:$0xff]
    %v1067 = vld [vmem:[#allocation9 + $0x158] sm:$0xff]
    %v1068 = vld [vmem:[#allocation9 + $0x160] sm:$0xff]
    %v1069 = vld [vmem:[#allocation9 + $0x168] sm:$0xff]
    %v1070 = vld [vmem:[#allocation9 + $0x170] sm:$0xff]
    %v1071 = vld [vmem:[#allocation9 + $0x178] sm:$0xff]
    %v1072 = vld [vmem:[#allocation9 + $0x180] sm:$0xff]
    %v1073 = vld [vmem:[#allocation9 + $0x188] sm:$0xff]
    %v1074 = vld [vmem:[#allocation9 + $0x190] sm:$0xff]
    %v1075 = vld [vmem:[#allocation9 + $0x198] sm:$0xff]
    %v1076 = vld [vmem:[#allocation9 + $0x1a0] sm:$0xff]
    %v1077 = vld [vmem:[#allocation9 + $0x1a8] sm:$0xff]
    %v1078 = vld [vmem:[#allocation9 + $0x1b0] sm:$0xff]
    %v1079 = vld [vmem:[#allocation9 + $0x1b8] sm:$0xff]
    %v1080 = vld [vmem:[#allocation9 + $0x1c0] sm:$0xff]
    %v1081 = vld [vmem:[#allocation9 + $0x1c8] sm:$0xff]
    %v1082 = vld [vmem:[#allocation9 + $0x1d0] sm:$0xff]
    %v1083 = vld [vmem:[#allocation9 + $0x1d8] sm:$0xff]
    %v1084 = vld [vmem:[#allocation9 + $0x1e0] sm:$0xff]
    %v1085 = vld [vmem:[#allocation9 + $0x1e8] sm:$0xff]
    %v1086 = vld [vmem:[#allocation9 + $0x1f0] sm:$0xff]
    %v1087 = vld [vmem:[#allocation9 + $0x1f8] sm:$0xff]
    %v1088 = vld [vmem:[#allocation9 + $0x200] sm:$0xff]
    %v1089 = vld [vmem:[#allocation9 + $0x208] sm:$0xff]
    %v1090 = vld [vmem:[#allocation9 + $0x210] sm:$0xff]
    %v1091 = vld [vmem:[#allocation9 + $0x218] sm:$0xff]
    %v1092 = vld [vmem:[#allocation9 + $0x220] sm:$0xff]
    %v1093 = vld [vmem:[#allocation9 + $0x228] sm:$0xff]
    %v1094 = vld [vmem:[#allocation9 + $0x230] sm:$0xff]
    %v1095 = vld [vmem:[#allocation9 + $0x238] sm:$0xff]
    %v1096 = vld [vmem:[#allocation9 + $0x240] sm:$0xff]
    %v1097 = vld [vmem:[#allocation9 + $0x248] sm:$0xff]
    %v1098 = vld [vmem:[#allocation9 + $0x250] sm:$0xff]
    %v1099 = vld [vmem:[#allocation9 + $0x258] sm:$0xff]
    %v1100 = vld [vmem:[#allocation9 + $0x260] sm:$0xff]
    %v1101 = vld [vmem:[#allocation9 + $0x268] sm:$0xff]
    %v1102 = vld [vmem:[#allocation9 + $0x270] sm:$0xff]
    %v1103 = vld [vmem:[#allocation9 + $0x278] sm:$0xff]
    %v1104 = vld [vmem:[#allocation9 + $0x280] sm:$0xff]
    %v1105 = vld [vmem:[#allocation9 + $0x288] sm:$0xff]
    %v1106 = vld [vmem:[#allocation9 + $0x290] sm:$0xff]
    %v1107 = vld [vmem:[#allocation9 + $0x298] sm:$0xff]
    %v1108 = vld [vmem:[#allocation9 + $0x2a0] sm:$0xff]
    %v1109 = vld [vmem:[#allocation9 + $0x2a8] sm:$0xff]
    %v1110 = vld [vmem:[#allocation9 + $0x2b0] sm:$0xff]
    %v1111 = vld [vmem:[#allocation9 + $0x2b8] sm:$0xff]
    %v1112 = vld [vmem:[#allocation9 + $0x2c0] sm:$0xff]
    %v1113 = vld [vmem:[#allocation9 + $0x2c8] sm:$0xff]
    %v1114 = vld [vmem:[#allocation9 + $0x2d0] sm:$0xff]
    %v1115 = vld [vmem:[#allocation9 + $0x2d8] sm:$0xff]
    %v1116 = vld [vmem:[#allocation9 + $0x2e0] sm:$0xff]
    %v1117 = vld [vmem:[#allocation9 + $0x2e8] sm:$0xff]
    %v1118 = vld [vmem:[#allocation9 + $0x2f0] sm:$0xff]
    %v1119 = vld [vmem:[#allocation9 + $0x2f8] sm:$0xff]
    %v1120 = vld [vmem:[#allocation9 + $0x300] sm:$0xff]
    %v1121 = vld [vmem:[#allocation9 + $0x308] sm:$0xff]
    %v1122 = vld [vmem:[#allocation9 + $0x310] sm:$0xff]
    %v1123 = vld [vmem:[#allocation9 + $0x318] sm:$0xff]
    %v1124 = vld [vmem:[#allocation9 + $0x320] sm:$0xff]
    %v1125 = vld [vmem:[#allocation9 + $0x328] sm:$0xff]
    %v1126 = vld [vmem:[#allocation9 + $0x330] sm:$0xff]
    %v1127 = vld [vmem:[#allocation9 + $0x338] sm:$0xff]
    %v1128 = vld [vmem:[#allocation9 + $0x340] sm:$0xff]
    %v1129 = vld [vmem:[#allocation9 + $0x348] sm:$0xff]
    %v1130 = vld [vmem:[#allocation9 + $0x350] sm:$0xff]
    %v1131 = vld [vmem:[#allocation9 + $0x358] sm:$0xff]
    %v1132 = vld [vmem:[#allocation9 + $0x360] sm:$0xff]
    %v1133 = vld [vmem:[#allocation9 + $0x368] sm:$0xff]
    %v1134 = vld [vmem:[#allocation9 + $0x370] sm:$0xff]
    %v1135 = vld [vmem:[#allocation9 + $0x378] sm:$0xff]
    %v1136 = vld [vmem:[#allocation9 + $0x380] sm:$0xff]
    %v1137 = vld [vmem:[#allocation9 + $0x388] sm:$0xff]
    %v1138 = vld [vmem:[#allocation9 + $0x390] sm:$0xff]
    %v1139 = vld [vmem:[#allocation9 + $0x398] sm:$0xff]
    %v1140 = vld [vmem:[#allocation9 + $0x3a0] sm:$0xff]
    %v1141 = vld [vmem:[#allocation9 + $0x3a8] sm:$0xff]
    %v1142 = vld [vmem:[#allocation9 + $0x3b0] sm:$0xff]
    %v1143 = vld [vmem:[#allocation9 + $0x3b8] sm:$0xff]
    %v1144 = vld [vmem:[#allocation9 + $0x3c0] sm:$0xff]
    %v1145 = vld [vmem:[#allocation9 + $0x3c8] sm:$0xff]
    %v1146 = vld [vmem:[#allocation9 + $0x3d0] sm:$0xff]
    %v1147 = vld [vmem:[#allocation9 + $0x3d8] sm:$0xff]
    %v1148 = vld [vmem:[#allocation9 + $0x3e0] sm:$0xff]
    %v1149 = vld [vmem:[#allocation9 + $0x3e8] sm:$0xff]
    %v1150 = vld [vmem:[#allocation9 + $0x3f0] sm:$0xff]
    %v1151 = vld [vmem:[#allocation9 + $0x3f8] sm:$0xff]
    %v1152 = vld [vmem:[#allocation2] sm:$0xff]
    %v1153 = vld [vmem:[#allocation2 + $0x8] sm:$0xff]
    %v1154 = vld [vmem:[#allocation2 + $0x10] sm:$0xff]
    %v1155 = vld [vmem:[#allocation2 + $0x18] sm:$0xff]
    %v1156 = vld [vmem:[#allocation2 + $0x20] sm:$0xff]
    %v1157 = vld [vmem:[#allocation2 + $0x28] sm:$0xff]
    %v1158 = vld [vmem:[#allocation2 + $0x30] sm:$0xff]
    %v1159 = vld [vmem:[#allocation2 + $0x38] sm:$0xff]
    %v1288 = vunpack.c.l.b16 %v1024
    %v1289 = vunpack.c.h.b16 %v1024
    %v1290 = vunpack.c.l.b16 %v1025
    %v1291 = vunpack.c.h.b16 %v1025
    %v1292 = vunpack.c.l.b16 %v1026
    %v1293 = vunpack.c.h.b16 %v1026
    %v1294 = vunpack.c.l.b16 %v1027
    %v1295 = vunpack.c.h.b16 %v1027
    %v1296 = vunpack.c.l.b16 %v1028
    %v1297 = vunpack.c.h.b16 %v1028
    %v1298 = vunpack.c.l.b16 %v1029
    %v1299 = vunpack.c.h.b16 %v1029
    %v1300 = vunpack.c.l.b16 %v1030
    %v1301 = vunpack.c.h.b16 %v1030
    %v1302 = vunpack.c.l.b16 %v1031
    %v1303 = vunpack.c.h.b16 %v1031
    %v1304 = vunpack.c.l.b16 %v1032
    %v1305 = vunpack.c.h.b16 %v1032
    %v1306 = vunpack.c.l.b16 %v1033
    %v1307 = vunpack.c.h.b16 %v1033
    %v1308 = vunpack.c.l.b16 %v1034
    %v1309 = vunpack.c.h.b16 %v1034
    %v1310 = vunpack.c.l.b16 %v1035
    %v1311 = vunpack.c.h.b16 %v1035
    %v1312 = vunpack.c.l.b16 %v1036
    %v1313 = vunpack.c.h.b16 %v1036
    %v1314 = vunpack.c.l.b16 %v1037
    %v1315 = vunpack.c.h.b16 %v1037
    %v1316 = vunpack.c.l.b16 %v1038
    %v1317 = vunpack.c.h.b16 %v1038
    %v1318 = vunpack.c.l.b16 %v1039
    %v1319 = vunpack.c.h.b16 %v1039
    %v1320 = vunpack.c.l.b16 %v1040
    %v1321 = vunpack.c.h.b16 %v1040
    %v1322 = vunpack.c.l.b16 %v1041
    %v1323 = vunpack.c.h.b16 %v1041
    %v1324 = vunpack.c.l.b16 %v1042
    %v1325 = vunpack.c.h.b16 %v1042
    %v1326 = vunpack.c.l.b16 %v1043
    %v1327 = vunpack.c.h.b16 %v1043
    %v1328 = vunpack.c.l.b16 %v1044
    %v1329 = vunpack.c.h.b16 %v1044
    %v1330 = vunpack.c.l.b16 %v1045
    %v1331 = vunpack.c.h.b16 %v1045
    %v1332 = vunpack.c.l.b16 %v1046
    %v1333 = vunpack.c.h.b16 %v1046
    %v1334 = vunpack.c.l.b16 %v1047
    %v1335 = vunpack.c.h.b16 %v1047
    %v1336 = vunpack.c.l.b16 %v1048
    %v1337 = vunpack.c.h.b16 %v1048
    %v1338 = vunpack.c.l.b16 %v1049
    %v1339 = vunpack.c.h.b16 %v1049
    %v1340 = vunpack.c.l.b16 %v1050
    %v1341 = vunpack.c.h.b16 %v1050
    %v1342 = vunpack.c.l.b16 %v1051
    %v1343 = vunpack.c.h.b16 %v1051
    %v1344 = vunpack.c.l.b16 %v1052
    %v1345 = vunpack.c.h.b16 %v1052
    %v1346 = vunpack.c.l.b16 %v1053
    %v1347 = vunpack.c.h.b16 %v1053
    %v1348 = vunpack.c.l.b16 %v1054
    %v1349 = vunpack.c.h.b16 %v1054
    %v1350 = vunpack.c.l.b16 %v1055
    %v1351 = vunpack.c.h.b16 %v1055
    %v1352 = vunpack.c.l.b16 %v1056
    %v1353 = vunpack.c.h.b16 %v1056
    %v1354 = vunpack.c.l.b16 %v1057
    %v1355 = vunpack.c.h.b16 %v1057
    %v1356 = vunpack.c.l.b16 %v1058
    %v1357 = vunpack.c.h.b16 %v1058
    %v1358 = vunpack.c.l.b16 %v1059
    %v1359 = vunpack.c.h.b16 %v1059
    %v1360 = vunpack.c.l.b16 %v1060
    %v1361 = vunpack.c.h.b16 %v1060
    %v1362 = vunpack.c.l.b16 %v1061
    %v1363 = vunpack.c.h.b16 %v1061
    %v1364 = vunpack.c.l.b16 %v1062
    %v1365 = vunpack.c.h.b16 %v1062
    %v1366 = vunpack.c.l.b16 %v1063
    %v1367 = vunpack.c.h.b16 %v1063
    %v1368 = vunpack.c.l.b16 %v1064
    %v1369 = vunpack.c.h.b16 %v1064
    %v1370 = vunpack.c.l.b16 %v1065
    %v1371 = vunpack.c.h.b16 %v1065
    %v1372 = vunpack.c.l.b16 %v1066
    %v1373 = vunpack.c.h.b16 %v1066
    %v1374 = vunpack.c.l.b16 %v1067
    %v1375 = vunpack.c.h.b16 %v1067
    %v1376 = vunpack.c.l.b16 %v1068
    %v1377 = vunpack.c.h.b16 %v1068
    %v1378 = vunpack.c.l.b16 %v1069
    %v1379 = vunpack.c.h.b16 %v1069
    %v1380 = vunpack.c.l.b16 %v1070
    %v1381 = vunpack.c.h.b16 %v1070
    %v1382 = vunpack.c.l.b16 %v1071
    %v1383 = vunpack.c.h.b16 %v1071
    %v1384 = vunpack.c.l.b16 %v1072
    %v1385 = vunpack.c.h.b16 %v1072
    %v1386 = vunpack.c.l.b16 %v1073
    %v1387 = vunpack.c.h.b16 %v1073
    %v1388 = vunpack.c.l.b16 %v1074
    %v1389 = vunpack.c.h.b16 %v1074
    %v1390 = vunpack.c.l.b16 %v1075
    %v1391 = vunpack.c.h.b16 %v1075
    %v1392 = vunpack.c.l.b16 %v1076
    %v1393 = vunpack.c.h.b16 %v1076
    %v1394 = vunpack.c.l.b16 %v1077
    %v1395 = vunpack.c.h.b16 %v1077
    %v1396 = vunpack.c.l.b16 %v1078
    %v1397 = vunpack.c.h.b16 %v1078
    %v1398 = vunpack.c.l.b16 %v1079
    %v1399 = vunpack.c.h.b16 %v1079
    %v1400 = vunpack.c.l.b16 %v1080
    %v1401 = vunpack.c.h.b16 %v1080
    %v1402 = vunpack.c.l.b16 %v1081
    %v1403 = vunpack.c.h.b16 %v1081
    %v1404 = vunpack.c.l.b16 %v1082
    %v1405 = vunpack.c.h.b16 %v1082
    %v1406 = vunpack.c.l.b16 %v1083
    %v1407 = vunpack.c.h.b16 %v1083
    %v1408 = vunpack.c.l.b16 %v1084
    %v1409 = vunpack.c.h.b16 %v1084
    %v1410 = vunpack.c.l.b16 %v1085
    %v1411 = vunpack.c.h.b16 %v1085
    %v1412 = vunpack.c.l.b16 %v1086
    %v1413 = vunpack.c.h.b16 %v1086
    %v1414 = vunpack.c.l.b16 %v1087
    %v1415 = vunpack.c.h.b16 %v1087
    %v1416 = vunpack.c.l.b16 %v1088
    %v1417 = vunpack.c.h.b16 %v1088
    %v1418 = vunpack.c.l.b16 %v1089
    %v1419 = vunpack.c.h.b16 %v1089
    %v1420 = vunpack.c.l.b16 %v1090
    %v1421 = vunpack.c.h.b16 %v1090
    %v1422 = vunpack.c.l.b16 %v1091
    %v1423 = vunpack.c.h.b16 %v1091
    %v1424 = vunpack.c.l.b16 %v1092
    %v1425 = vunpack.c.h.b16 %v1092
    %v1426 = vunpack.c.l.b16 %v1093
    %v1427 = vunpack.c.h.b16 %v1093
    %v1428 = vunpack.c.l.b16 %v1094
    %v1429 = vunpack.c.h.b16 %v1094
    %v1430 = vunpack.c.l.b16 %v1095
    %v1431 = vunpack.c.h.b16 %v1095
    %v1432 = vunpack.c.l.b16 %v1096
    %v1433 = vunpack.c.h.b16 %v1096
    %v1434 = vunpack.c.l.b16 %v1097
    %v1435 = vunpack.c.h.b16 %v1097
    %v1436 = vunpack.c.l.b16 %v1098
    %v1437 = vunpack.c.h.b16 %v1098
    %v1438 = vunpack.c.l.b16 %v1099
    %v1439 = vunpack.c.h.b16 %v1099
    %v1440 = vunpack.c.l.b16 %v1100
    %v1441 = vunpack.c.h.b16 %v1100
    %v1442 = vunpack.c.l.b16 %v1101
    %v1443 = vunpack.c.h.b16 %v1101
    %v1444 = vunpack.c.l.b16 %v1102
    %v1445 = vunpack.c.h.b16 %v1102
    %v1446 = vunpack.c.l.b16 %v1103
    %v1447 = vunpack.c.h.b16 %v1103
    %v1448 = vunpack.c.l.b16 %v1104
    %v1449 = vunpack.c.h.b16 %v1104
    %v1450 = vunpack.c.l.b16 %v1105
    %v1451 = vunpack.c.h.b16 %v1105
    %v1452 = vunpack.c.l.b16 %v1106
    %v1453 = vunpack.c.h.b16 %v1106
    %v1454 = vunpack.c.l.b16 %v1107
    %v1455 = vunpack.c.h.b16 %v1107
    %v1456 = vunpack.c.l.b16 %v1108
    %v1457 = vunpack.c.h.b16 %v1108
    %v1458 = vunpack.c.l.b16 %v1109
    %v1459 = vunpack.c.h.b16 %v1109
    %v1460 = vunpack.c.l.b16 %v1110
    %v1461 = vunpack.c.h.b16 %v1110
    %v1462 = vunpack.c.l.b16 %v1111
    %v1463 = vunpack.c.h.b16 %v1111
    %v1464 = vunpack.c.l.b16 %v1112
    %v1465 = vunpack.c.h.b16 %v1112
    %v1466 = vunpack.c.l.b16 %v1113
    %v1467 = vunpack.c.h.b16 %v1113
    %v1468 = vunpack.c.l.b16 %v1114
    %v1469 = vunpack.c.h.b16 %v1114
    %v1470 = vunpack.c.l.b16 %v1115
    %v1471 = vunpack.c.h.b16 %v1115
    %v1472 = vunpack.c.l.b16 %v1116
    %v1473 = vunpack.c.h.b16 %v1116
    %v1474 = vunpack.c.l.b16 %v1117
    %v1475 = vunpack.c.h.b16 %v1117
    %v1476 = vunpack.c.l.b16 %v1118
    %v1477 = vunpack.c.h.b16 %v1118
    %v1478 = vunpack.c.l.b16 %v1119
    %v1479 = vunpack.c.h.b16 %v1119
    %v1480 = vunpack.c.l.b16 %v1120
    %v1481 = vunpack.c.h.b16 %v1120
    %v1482 = vunpack.c.l.b16 %v1121
    %v1483 = vunpack.c.h.b16 %v1121
    %v1484 = vunpack.c.l.b16 %v1122
    %v1485 = vunpack.c.h.b16 %v1122
    %v1486 = vunpack.c.l.b16 %v1123
    %v1487 = vunpack.c.h.b16 %v1123
    %v1488 = vunpack.c.l.b16 %v1124
    %v1489 = vunpack.c.h.b16 %v1124
    %v1490 = vunpack.c.l.b16 %v1125
    %v1491 = vunpack.c.h.b16 %v1125
    %v1492 = vunpack.c.l.b16 %v1126
    %v1493 = vunpack.c.h.b16 %v1126
    %v1494 = vunpack.c.l.b16 %v1127
    %v1495 = vunpack.c.h.b16 %v1127
    %v1496 = vunpack.c.l.b16 %v1128
    %v1497 = vunpack.c.h.b16 %v1128
    %v1498 = vunpack.c.l.b16 %v1129
    %v1499 = vunpack.c.h.b16 %v1129
    %v1500 = vunpack.c.l.b16 %v1130
    %v1501 = vunpack.c.h.b16 %v1130
    %v1502 = vunpack.c.l.b16 %v1131
    %v1503 = vunpack.c.h.b16 %v1131
    %v1504 = vunpack.c.l.b16 %v1132
    %v1505 = vunpack.c.h.b16 %v1132
    %v1506 = vunpack.c.l.b16 %v1133
    %v1507 = vunpack.c.h.b16 %v1133
    %v1508 = vunpack.c.l.b16 %v1134
    %v1509 = vunpack.c.h.b16 %v1134
    %v1510 = vunpack.c.l.b16 %v1135
    %v1511 = vunpack.c.h.b16 %v1135
    %v1512 = vunpack.c.l.b16 %v1136
    %v1513 = vunpack.c.h.b16 %v1136
    %v1514 = vunpack.c.l.b16 %v1137
    %v1515 = vunpack.c.h.b16 %v1137
    %v1516 = vunpack.c.l.b16 %v1138
    %v1517 = vunpack.c.h.b16 %v1138
    %v1518 = vunpack.c.l.b16 %v1139
    %v1519 = vunpack.c.h.b16 %v1139
    %v1520 = vunpack.c.l.b16 %v1140
    %v1521 = vunpack.c.h.b16 %v1140
    %v1522 = vunpack.c.l.b16 %v1141
    %v1523 = vunpack.c.h.b16 %v1141
    %v1524 = vunpack.c.l.b16 %v1142
    %v1525 = vunpack.c.h.b16 %v1142
    %v1526 = vunpack.c.l.b16 %v1143
    %v1527 = vunpack.c.h.b16 %v1143
    %v1528 = vunpack.c.l.b16 %v1144
    %v1529 = vunpack.c.h.b16 %v1144
    %v1530 = vunpack.c.l.b16 %v1145
    %v1531 = vunpack.c.h.b16 %v1145
    %v1532 = vunpack.c.l.b16 %v1146
    %v1533 = vunpack.c.h.b16 %v1146
    %v1534 = vunpack.c.l.b16 %v1147
    %v1535 = vunpack.c.h.b16 %v1147
    %v1536 = vunpack.c.l.b16 %v1148
    %v1537 = vunpack.c.h.b16 %v1148
    %v1538 = vunpack.c.l.b16 %v1149
    %v1539 = vunpack.c.h.b16 %v1149
    %v1540 = vunpack.c.l.b16 %v1150
    %v1541 = vunpack.c.h.b16 %v1150
    %v1542 = vunpack.c.l.b16 %v1151
    %v1543 = vunpack.c.h.b16 %v1151
    %v1544 = vpack.c.b16 %v1296, %v1288
    %v1545 = vpack.c.b16 %v1297, %v1289
    %v1546 = vpack.c.b16 %v1298, %v1290
    %v1547 = vpack.c.b16 %v1299, %v1291
    %v1548 = vpack.c.b16 %v1300, %v1292
    %v1549 = vpack.c.b16 %v1301, %v1293
    %v1550 = vpack.c.b16 %v1302, %v1294
    %v1551 = vpack.c.b16 %v1303, %v1295
    %v1552 = vpack.c.b16 %v1312, %v1304
    %v1553 = vpack.c.b16 %v1313, %v1305
    %v1554 = vpack.c.b16 %v1314, %v1306
    %v1555 = vpack.c.b16 %v1315, %v1307
    %v1556 = vpack.c.b16 %v1316, %v1308
    %v1557 = vpack.c.b16 %v1317, %v1309
    %v1558 = vpack.c.b16 %v1318, %v1310
    %v1559 = vpack.c.b16 %v1319, %v1311
    %v1560 = vpack.c.b16 %v1328, %v1320
    %v1561 = vpack.c.b16 %v1329, %v1321
    %v1562 = vpack.c.b16 %v1330, %v1322
    %v1563 = vpack.c.b16 %v1331, %v1323
    %v1564 = vpack.c.b16 %v1332, %v1324
    %v1565 = vpack.c.b16 %v1333, %v1325
    %v1566 = vpack.c.b16 %v1334, %v1326
    %v1567 = vpack.c.b16 %v1335, %v1327
    %v1568 = vpack.c.b16 %v1344, %v1336
    %v1569 = vpack.c.b16 %v1345, %v1337
    %v1570 = vpack.c.b16 %v1346, %v1338
    %v1571 = vpack.c.b16 %v1347, %v1339
    %v1572 = vpack.c.b16 %v1348, %v1340
    %v1573 = vpack.c.b16 %v1349, %v1341
    %v1574 = vpack.c.b16 %v1350, %v1342
    %v1575 = vpack.c.b16 %v1351, %v1343
    %v1576 = vpack.c.b16 %v1360, %v1352
    %v1577 = vpack.c.b16 %v1361, %v1353
    %v1578 = vpack.c.b16 %v1362, %v1354
    %v1579 = vpack.c.b16 %v1363, %v1355
    %v1580 = vpack.c.b16 %v1364, %v1356
    %v1581 = vpack.c.b16 %v1365, %v1357
    %v1582 = vpack.c.b16 %v1366, %v1358
    %v1583 = vpack.c.b16 %v1367, %v1359
    %v1584 = vpack.c.b16 %v1376, %v1368
    %v1585 = vpack.c.b16 %v1377, %v1369
    %v1586 = vpack.c.b16 %v1378, %v1370
    %v1587 = vpack.c.b16 %v1379, %v1371
    %v1588 = vpack.c.b16 %v1380, %v1372
    %v1589 = vpack.c.b16 %v1381, %v1373
    %v1590 = vpack.c.b16 %v1382, %v1374
    %v1591 = vpack.c.b16 %v1383, %v1375
    %v1592 = vpack.c.b16 %v1392, %v1384
    %v1593 = vpack.c.b16 %v1393, %v1385
    %v1594 = vpack.c.b16 %v1394, %v1386
    %v1595 = vpack.c.b16 %v1395, %v1387
    %v1596 = vpack.c.b16 %v1396, %v1388
    %v1597 = vpack.c.b16 %v1397, %v1389
    %v1598 = vpack.c.b16 %v1398, %v1390
    %v1599 = vpack.c.b16 %v1399, %v1391
    %v1600 = vpack.c.b16 %v1408, %v1400
    %v1601 = vpack.c.b16 %v1409, %v1401
    %v1602 = vpack.c.b16 %v1410, %v1402
    %v1603 = vpack.c.b16 %v1411, %v1403
    %v1604 = vpack.c.b16 %v1412, %v1404
    %v1605 = vpack.c.b16 %v1413, %v1405
    %v1606 = vpack.c.b16 %v1414, %v1406
    %v1607 = vpack.c.b16 %v1415, %v1407
    %v1608 = vpack.c.b16 %v1424, %v1416
    %v1609 = vpack.c.b16 %v1425, %v1417
    %v1610 = vpack.c.b16 %v1426, %v1418
    %v1611 = vpack.c.b16 %v1427, %v1419
    %v1612 = vpack.c.b16 %v1428, %v1420
    %v1613 = vpack.c.b16 %v1429, %v1421
    %v1614 = vpack.c.b16 %v1430, %v1422
    %v1615 = vpack.c.b16 %v1431, %v1423
    %v1616 = vpack.c.b16 %v1440, %v1432
    %v1617 = vpack.c.b16 %v1441, %v1433
    %v1618 = vpack.c.b16 %v1442, %v1434
    %v1619 = vpack.c.b16 %v1443, %v1435
    %v1620 = vpack.c.b16 %v1444, %v1436
    %v1621 = vpack.c.b16 %v1445, %v1437
    %v1622 = vpack.c.b16 %v1446, %v1438
    %v1623 = vpack.c.b16 %v1447, %v1439
    %v1624 = vpack.c.b16 %v1456, %v1448
    %v1625 = vpack.c.b16 %v1457, %v1449
    %v1626 = vpack.c.b16 %v1458, %v1450
    %v1627 = vpack.c.b16 %v1459, %v1451
    %v1628 = vpack.c.b16 %v1460, %v1452
    %v1629 = vpack.c.b16 %v1461, %v1453
    %v1630 = vpack.c.b16 %v1462, %v1454
    %v1631 = vpack.c.b16 %v1463, %v1455
    %v1632 = vpack.c.b16 %v1472, %v1464
    %v1633 = vpack.c.b16 %v1473, %v1465
    %v1634 = vpack.c.b16 %v1474, %v1466
    %v1635 = vpack.c.b16 %v1475, %v1467
    %v1636 = vpack.c.b16 %v1476, %v1468
    %v1637 = vpack.c.b16 %v1477, %v1469
    %v1638 = vpack.c.b16 %v1478, %v1470
    %v1639 = vpack.c.b16 %v1479, %v1471
    %v1640 = vpack.c.b16 %v1488, %v1480
    %v1641 = vpack.c.b16 %v1489, %v1481
    %v1642 = vpack.c.b16 %v1490, %v1482
    %v1643 = vpack.c.b16 %v1491, %v1483
    %v1644 = vpack.c.b16 %v1492, %v1484
    %v1645 = vpack.c.b16 %v1493, %v1485
    %v1646 = vpack.c.b16 %v1494, %v1486
    %v1647 = vpack.c.b16 %v1495, %v1487
    %v1648 = vpack.c.b16 %v1504, %v1496
    %v1649 = vpack.c.b16 %v1505, %v1497
    %v1650 = vpack.c.b16 %v1506, %v1498
    %v1651 = vpack.c.b16 %v1507, %v1499
    %v1652 = vpack.c.b16 %v1508, %v1500
    %v1653 = vpack.c.b16 %v1509, %v1501
    %v1654 = vpack.c.b16 %v1510, %v1502
    %v1655 = vpack.c.b16 %v1511, %v1503
    %v1656 = vpack.c.b16 %v1520, %v1512
    %v1657 = vpack.c.b16 %v1521, %v1513
    %v1658 = vpack.c.b16 %v1522, %v1514
    %v1659 = vpack.c.b16 %v1523, %v1515
    %v1660 = vpack.c.b16 %v1524, %v1516
    %v1661 = vpack.c.b16 %v1525, %v1517
    %v1662 = vpack.c.b16 %v1526, %v1518
    %v1663 = vpack.c.b16 %v1527, %v1519
    %v1664 = vpack.c.b16 %v1536, %v1528
    %v1665 = vpack.c.b16 %v1537, %v1529
    %v1666 = vpack.c.b16 %v1538, %v1530
    %v1667 = vpack.c.b16 %v1539, %v1531
    %v1668 = vpack.c.b16 %v1540, %v1532
    %v1669 = vpack.c.b16 %v1541, %v1533
    %v1670 = vpack.c.b16 %v1542, %v1534
    %v1671 = vpack.c.b16 %v1543, %v1535
    %1800 = vmatprep.subr.bf16.mxu0 %v1545
    %1801 = vmatpush1.bf16.msra.mxu0 %v1544
    %1802 = vmatprep.subr.bf16.mxu0 %v1553
    %1803 = vmatpush1.bf16.msra.mxu0 %v1552
    %1804 = vmatprep.subr.bf16.mxu0 %v1561
    %1805 = vmatpush1.bf16.msra.mxu0 %v1560
    %1806 = vmatprep.subr.bf16.mxu0 %v1569
    %1807 = vmatpush1.bf16.msra.mxu0 %v1568
    %1808 = vmatprep.subr.bf16.mxu0 %v1577
    %1809 = vmatpush1.bf16.msra.mxu0 %v1576
    %1810 = vmatprep.subr.bf16.mxu0 %v1585
    %1811 = vmatpush1.bf16.msra.mxu0 %v1584
    %1812 = vmatprep.subr.bf16.mxu0 %v1593
    %1813 = vmatpush1.bf16.msra.mxu0 %v1592
    %1814 = vmatprep.subr.bf16.mxu0 %v1601
    %1815 = vmatpush1.bf16.msra.mxu0 %v1600
    %1816 = vmatprep.subr.bf16.mxu0 %v1609
    %1817 = vmatpush1.bf16.msra.mxu0 %v1608
    %1818 = vmatprep.subr.bf16.mxu0 %v1617
    %1819 = vmatpush1.bf16.msra.mxu0 %v1616
    %1820 = vmatprep.subr.bf16.mxu0 %v1625
    %1821 = vmatpush1.bf16.msra.mxu0 %v1624
    %1822 = vmatprep.subr.bf16.mxu0 %v1633
    %1823 = vmatpush1.bf16.msra.mxu0 %v1632
    %1824 = vmatprep.subr.bf16.mxu0 %v1641
    %1825 = vmatpush1.bf16.msra.mxu0 %v1640
    %1826 = vmatprep.subr.bf16.mxu0 %v1649
    %1827 = vmatpush1.bf16.msra.mxu0 %v1648
    %1828 = vmatprep.subr.bf16.mxu0 %v1657
    %1829 = vmatpush1.bf16.msra.mxu0 %v1656
    %1830 = vmatprep.subr.bf16.mxu0 %v1665
    %1831 = vmatpush1.bf16.msra.mxu0 %v1664
    %1832 = vmatprep.mubr.bf16.mxu0 0
    %1833 = vmatmul.mubr.bf16.gmra.mrb[0].mxu0 0
    %v1834 = vpop.f32.mrb[0].mxu0
    %v1835 = vadd.f32 0.0, %v1834
    %v1836 = vpop.f32.mrb[0].mxu0
    %v1837 = vadd.f32 0.0, %v1836
    %v1838 = vpop.f32.mrb[0].mxu0
    %v1839 = vpop.f32.mrb[0].mxu0
    %1840 = vdwg.mxu0
    %1841 = vmatprep.subr.bf16.mxu0 %v1547
    %1842 = vmatpush1.bf16.msra.mxu0 %v1546
    %1843 = vmatprep.subr.bf16.mxu0 %v1555
    %1844 = vmatpush1.bf16.msra.mxu0 %v1554
    %1845 = vmatprep.subr.bf16.mxu0 %v1563
    %1846 = vmatpush1.bf16.msra.mxu0 %v1562
    %1847 = vmatprep.subr.bf16.mxu0 %v1571
    %1848 = vmatpush1.bf16.msra.mxu0 %v1570
    %1849 = vmatprep.subr.bf16.mxu0 %v1579
    %1850 = vmatpush1.bf16.msra.mxu0 %v1578
    %1851 = vmatprep.subr.bf16.mxu0 %v1587
    %1852 = vmatpush1.bf16.msra.mxu0 %v1586
    %1853 = vmatprep.subr.bf16.mxu0 %v1595
    %1854 = vmatpush1.bf16.msra.mxu0 %v1594
    %1855 = vmatprep.subr.bf16.mxu0 %v1603
    %1856 = vmatpush1.bf16.msra.mxu0 %v1602
    %1857 = vmatprep.subr.bf16.mxu0 %v1611
    %1858 = vmatpush1.bf16.msra.mxu0 %v1610
    %1859 = vmatprep.subr.bf16.mxu0 %v1619
    %1860 = vmatpush1.bf16.msra.mxu0 %v1618
    %1861 = vmatprep.subr.bf16.mxu0 %v1627
    %1862 = vmatpush1.bf16.msra.mxu0 %v1626
    %1863 = vmatprep.subr.bf16.mxu0 %v1635
    %1864 = vmatpush1.bf16.msra.mxu0 %v1634
    %1865 = vmatprep.subr.bf16.mxu0 %v1643
    %1866 = vmatpush1.bf16.msra.mxu0 %v1642
    %1867 = vmatprep.subr.bf16.mxu0 %v1651
    %1868 = vmatpush1.bf16.msra.mxu0 %v1650
    %1869 = vmatprep.subr.bf16.mxu0 %v1659
    %1870 = vmatpush1.bf16.msra.mxu0 %v1658
    %1871 = vmatprep.subr.bf16.mxu0 %v1667
    %1872 = vmatpush1.bf16.msra.mxu0 %v1666
    %1873 = vmatprep.mubr.bf16.mxu0 0
    %1874 = vmatmul.mubr.bf16.gmra.mrb[0].mxu0 0
    %v1875 = vpop.f32.mrb[0].mxu0
    %v1876 = vadd.f32 0.0, %v1875
    %v1877 = vpop.f32.mrb[0].mxu0
    %v1878 = vadd.f32 0.0, %v1877
    %v1879 = vpop.f32.mrb[0].mxu0
    %v1880 = vpop.f32.mrb[0].mxu0
    %1881 = vdwg.mxu0
    %1882 = vmatprep.subr.bf16.mxu0 %v1549
    %1883 = vmatpush1.bf16.msra.mxu0 %v1548
    %1884 = vmatprep.subr.bf16.mxu0 %v1557
    %1885 = vmatpush1.bf16.msra.mxu0 %v1556
    %1886 = vmatprep.subr.bf16.mxu0 %v1565
    %1887 = vmatpush1.bf16.msra.mxu0 %v1564
    %1888 = vmatprep.subr.bf16.mxu0 %v1573
    %1889 = vmatpush1.bf16.msra.mxu0 %v1572
    %1890 = vmatprep.subr.bf16.mxu0 %v1581
    %1891 = vmatpush1.bf16.msra.mxu0 %v1580
    %1892 = vmatprep.subr.bf16.mxu0 %v1589
    %1893 = vmatpush1.bf16.msra.mxu0 %v1588
    %1894 = vmatprep.subr.bf16.mxu0 %v1597
    %1895 = vmatpush1.bf16.msra.mxu0 %v1596
    %1896 = vmatprep.subr.bf16.mxu0 %v1605
    %1897 = vmatpush1.bf16.msra.mxu0 %v1604
    %1898 = vmatprep.subr.bf16.mxu0 %v1613
    %1899 = vmatpush1.bf16.msra.mxu0 %v1612
    %1900 = vmatprep.subr.bf16.mxu0 %v1621
    %1901 = vmatpush1.bf16.msra.mxu0 %v1620
    %1902 = vmatprep.subr.bf16.mxu0 %v1629
    %1903 = vmatpush1.bf16.msra.mxu0 %v1628
    %1904 = vmatprep.subr.bf16.mxu0 %v1637
    %1905 = vmatpush1.bf16.msra.mxu0 %v1636
    %1906 = vmatprep.subr.bf16.mxu0 %v1645
    %1907 = vmatpush1.bf16.msra.mxu0 %v1644
    %1908 = vmatprep.subr.bf16.mxu0 %v1653
    %1909 = vmatpush1.bf16.msra.mxu0 %v1652
    %1910 = vmatprep.subr.bf16.mxu0 %v1661
    %1911 = vmatpush1.bf16.msra.mxu0 %v1660
    %1912 = vmatprep.subr.bf16.mxu0 %v1669
    %1913 = vmatpush1.bf16.msra.mxu0 %v1668
    %1914 = vmatprep.mubr.bf16.mxu0 0
    %1915 = vmatmul.mubr.bf16.gmra.mrb[0].mxu0 0
    %v1916 = vpop.f32.mrb[0].mxu0
    %v1917 = vadd.f32 0.0, %v1916
    %v1918 = vpop.f32.mrb[0].mxu0
    %v1919 = vadd.f32 0.0, %v1918
    %v1920 = vpop.f32.mrb[0].mxu0
    %v1921 = vpop.f32.mrb[0].mxu0
    %1922 = vdwg.mxu0
    %1923 = vmatprep.subr.bf16.mxu0 %v1551
    %1924 = vmatpush1.bf16.msra.mxu0 %v1550
    %1925 = vmatprep.subr.bf16.mxu0 %v1559
    %1926 = vmatpush1.bf16.msra.mxu0 %v1558
    %1927 = vmatprep.subr.bf16.mxu0 %v1567
    %1928 = vmatpush1.bf16.msra.mxu0 %v1566
    %1929 = vmatprep.subr.bf16.mxu0 %v1575
    %1930 = vmatpush1.bf16.msra.mxu0 %v1574
    %1931 = vmatprep.subr.bf16.mxu0 %v1583
    %1932 = vmatpush1.bf16.msra.mxu0 %v1582
    %1933 = vmatprep.subr.bf16.mxu0 %v1591
    %1934 = vmatpush1.bf16.msra.mxu0 %v1590
    %1935 = vmatprep.subr.bf16.mxu0 %v1599
    %1936 = vmatpush1.bf16.msra.mxu0 %v1598
    %1937 = vmatprep.subr.bf16.mxu0 %v1607
    %1938 = vmatpush1.bf16.msra.mxu0 %v1606
    %1939 = vmatprep.subr.bf16.mxu0 %v1615
    %1940 = vmatpush1.bf16.msra.mxu0 %v1614
    %1941 = vmatprep.subr.bf16.mxu0 %v1623
    %1942 = vmatpush1.bf16.msra.mxu0 %v1622
    %1943 = vmatprep.subr.bf16.mxu0 %v1631
    %1944 = vmatpush1.bf16.msra.mxu0 %v1630
    %1945 = vmatprep.subr.bf16.mxu0 %v1639
    %1946 = vmatpush1.bf16.msra.mxu0 %v1638
    %1947 = vmatprep.subr.bf16.mxu0 %v1647
    %1948 = vmatpush1.bf16.msra.mxu0 %v1646
    %1949 = vmatprep.subr.bf16.mxu0 %v1655
    %1950 = vmatpush1.bf16.msra.mxu0 %v1654
    %1951 = vmatprep.subr.bf16.mxu0 %v1663
    %1952 = vmatpush1.bf16.msra.mxu0 %v1662
    %1953 = vmatprep.subr.bf16.mxu0 %v1671
    %1954 = vmatpush1.bf16.msra.mxu0 %v1670
    %1955 = vmatprep.mubr.bf16.mxu0 0
    %1956 = vmatmul.mubr.bf16.gmra.mrb[0].mxu0 0
    %v1957 = vpop.f32.mrb[0].mxu0
    %v1958 = vadd.f32 0.0, %v1957
    %v1959 = vpop.f32.mrb[0].mxu0
    %v1960 = vadd.f32 0.0, %v1959
    %v1961 = vpop.f32.mrb[0].mxu0
    %v1962 = vpop.f32.mrb[0].mxu0
    %1963 = vdwg.mxu0
    %v1964 = vadd.f32 %v1152, %v1835
    %v1965 = vadd.f32 %v1153, %v1837
    %v1966 = vadd.f32 %v1154, %v1876
    %v1967 = vadd.f32 %v1155, %v1878
    %v1968 = vadd.f32 %v1156, %v1917
    %v1969 = vadd.f32 %v1157, %v1919
    %v1970 = vadd.f32 %v1158, %v1958
    %v1971 = vadd.f32 %v1159, %v1960
    %v1972 = vmul.f32 %v1964, 0.5
    %v1973 = vmul.f32 %v1965, 0.5
    %v1974 = vtanh.pop %v1972
    %v1975 = vtanh.pop %v1973
    %v1976 = vadd.f32 %v1974, 1.0
    %v1977 = vadd.f32 %v1975, 1.0
    %v1978 = vmul.f32 %v1976, 0.5
    %v1979 = vmul.f32 %v1977, 0.5
    %v1980 = vmul.f32 %v1966, 0.5
    %v1981 = vmul.f32 %v1967, 0.5
    %v1982 = vtanh.pop %v1980
    %v1983 = vtanh.pop %v1981
    %v1984 = vadd.f32 %v1982, 1.0
    %v1985 = vadd.f32 %v1983, 1.0
    %v1986 = vmul.f32 %v1984, 0.5
    %v1987 = vmul.f32 %v1985, 0.5
    %v1988 = vtanh.pop %v1968
    %v1989 = vtanh.pop %v1969
    %v1990 = vmul.f32 %v1970, 0.5
    %v1991 = vmul.f32 %v1971, 0.5
    %v1992 = vtanh.pop %v1990
    %v1993 = vtanh.pop %v1991
    %v1994 = vadd.f32 %v1992, 1.0
    %v1995 = vadd.f32 %v1993, 1.0
    %v1996 = vmul.f32 %v1994, 0.5
    %v1997 = vmul.f32 %v1995, 0.5
    %v1998 = vmul.f32 %v1986, 0.0
    %v1999 = vmul.f32 %v1987, 0.0
    %v2000 = vmul.f32 %v1978, %v1988
    %v2001 = vmul.f32 %v1979, %v1989
    %v2002 = vadd.f32 %v1998, %v2000
    %v2003 = vadd.f32 %v1999, %v2001
    %v2004 = vtanh.pop %v2002
    %v2005 = vtanh.pop %v2003
    %v2006 = vmul.f32 %v1996, %v2004
    %v2007 = vmul.f32 %v1997, %v2005
    %s2008 = scalar_lea.vmem [#allocation2], 64
    %v2009 = vld [vmem:[%s2008] sm:$0xff]
    %v2010 = vld [vmem:[%s2008 + $0x8] sm:$0xff]
    %v2011 = vld [vmem:[%s2008 + $0x10] sm:$0xff]
    %v2012 = vld [vmem:[%s2008 + $0x18] sm:$0xff]
    %v2013 = vld [vmem:[%s2008 + $0x20] sm:$0xff]
    %v2014 = vld [vmem:[%s2008 + $0x28] sm:$0xff]
    %v2015 = vld [vmem:[%s2008 + $0x30] sm:$0xff]
    %v2016 = vld [vmem:[%s2008 + $0x38] sm:$0xff]
    %v2017 = vpack.c.bf16 %v2006, %v2006
    %v2018 = vpack.c.bf16 %v2007, %v2007
    %2019 = vmatprep.subr.bf16.mxu0 %v1545
    %2020 = vmatpush1.bf16.msra.mxu0 %v1544
    %2021 = vmatprep.subr.bf16.mxu0 %v1553
    %2022 = vmatpush1.bf16.msra.mxu0 %v1552
    %2023 = vmatprep.subr.bf16.mxu0 %v1561
    %2024 = vmatpush1.bf16.msra.mxu0 %v1560
    %2025 = vmatprep.subr.bf16.mxu0 %v1569
    %2026 = vmatpush1.bf16.msra.mxu0 %v1568
    %2027 = vmatprep.subr.bf16.mxu0 %v1577
    %2028 = vmatpush1.bf16.msra.mxu0 %v1576
    %2029 = vmatprep.subr.bf16.mxu0 %v1585
    %2030 = vmatpush1.bf16.msra.mxu0 %v1584
    %2031 = vmatprep.subr.bf16.mxu0 %v1593
    %2032 = vmatpush1.bf16.msra.mxu0 %v1592
    %2033 = vmatprep.subr.bf16.mxu0 %v1601
    %2034 = vmatpush1.bf16.msra.mxu0 %v1600
    %2035 = vmatprep.subr.bf16.mxu0 %v1609
    %2036 = vmatpush1.bf16.msra.mxu0 %v1608
    %2037 = vmatprep.subr.bf16.mxu0 %v1617
    %2038 = vmatpush1.bf16.msra.mxu0 %v1616
    %2039 = vmatprep.subr.bf16.mxu0 %v1625
    %2040 = vmatpush1.bf16.msra.mxu0 %v1624
    %2041 = vmatprep.subr.bf16.mxu0 %v1633
    %2042 = vmatpush1.bf16.msra.mxu0 %v1632
    %2043 = vmatprep.subr.bf16.mxu0 %v1641
    %2044 = vmatpush1.bf16.msra.mxu0 %v1640
    %2045 = vmatprep.subr.bf16.mxu0 %v1649
    %2046 = vmatpush1.bf16.msra.mxu0 %v1648
    %2047 = vmatprep.subr.bf16.mxu0 %v1657
    %2048 = vmatpush1.bf16.msra.mxu0 %v1656
    %2049 = vmatprep.subr.bf16.mxu0 %v1665
    %2050 = vmatpush1.bf16.msra.mxu0 %v1664
    %2051 = vmatprep.mubr.bf16.mxu0 %v2018
    %2052 = vmatmul.mubr.bf16.gmra.mrb[0].mxu0 %v2017
    %v2053 = vpop.f32.mrb[0].mxu0
    %v2054 = vadd.f32 0.0, %v2053
    %v2055 = vpop.f32.mrb[0].mxu0
    %v2056 = vadd.f32 0.0, %v2055
    %v2057 = vpop.f32.mrb[0].mxu0
    %v2058 = vpop.f32.mrb[0].mxu0
    %2059 = vdwg.mxu0
    %2060 = vmatprep.subr.bf16.mxu0 %v1547
    %2061 = vmatpush1.bf16.msra.mxu0 %v1546
    %2062 = vmatprep.subr.bf16.mxu0 %v1555
    %2063 = vmatpush1.bf16.msra.mxu0 %v1554
    %2064 = vmatprep.subr.bf16.mxu0 %v1563
    %2065 = vmatpush1.bf16.msra.mxu0 %v1562
    %2066 = vmatprep.subr.bf16.mxu0 %v1571
    %2067 = vmatpush1.bf16.msra.mxu0 %v1570
    %2068 = vmatprep.subr.bf16.mxu0 %v1579
    %2069 = vmatpush1.bf16.msra.mxu0 %v1578
    %2070 = vmatprep.subr.bf16.mxu0 %v1587
    %2071 = vmatpush1.bf16.msra.mxu0 %v1586
    %2072 = vmatprep.subr.bf16.mxu0 %v1595
    %2073 = vmatpush1.bf16.msra.mxu0 %v1594
    %2074 = vmatprep.subr.bf16.mxu0 %v1603
    %2075 = vmatpush1.bf16.msra.mxu0 %v1602
    %2076 = vmatprep.subr.bf16.mxu0 %v1611
    %2077 = vmatpush1.bf16.msra.mxu0 %v1610
    %2078 = vmatprep.subr.bf16.mxu0 %v1619
    %2079 = vmatpush1.bf16.msra.mxu0 %v1618
    %2080 = vmatprep.subr.bf16.mxu0 %v1627
    %2081 = vmatpush1.bf16.msra.mxu0 %v1626
    %2082 = vmatprep.subr.bf16.mxu0 %v1635
    %2083 = vmatpush1.bf16.msra.mxu0 %v1634
    %2084 = vmatprep.subr.bf16.mxu0 %v1643
    %2085 = vmatpush1.bf16.msra.mxu0 %v1642
    %2086 = vmatprep.subr.bf16.mxu0 %v1651
    %2087 = vmatpush1.bf16.msra.mxu0 %v1650
    %2088 = vmatprep.subr.bf16.mxu0 %v1659
    %2089 = vmatpush1.bf16.msra.mxu0 %v1658
    %2090 = vmatprep.subr.bf16.mxu0 %v1667
    %2091 = vmatpush1.bf16.msra.mxu0 %v1666
    %2092 = vmatprep.mubr.bf16.mxu0 %v2018
    %2093 = vmatmul.mubr.bf16.gmra.mrb[0].mxu0 %v2017
    %v2094 = vpop.f32.mrb[0].mxu0
    %v2095 = vadd.f32 0.0, %v2094
    %v2096 = vpop.f32.mrb[0].mxu0
    %v2097 = vadd.f32 0.0, %v2096
    %v2098 = vpop.f32.mrb[0].mxu0
    %v2099 = vpop.f32.mrb[0].mxu0
    %2100 = vdwg.mxu0
    %2101 = vmatprep.subr.bf16.mxu0 %v1549
    %2102 = vmatpush1.bf16.msra.mxu0 %v1548
    %2103 = vmatprep.subr.bf16.mxu0 %v1557
    %2104 = vmatpush1.bf16.msra.mxu0 %v1556
    %2105 = vmatprep.subr.bf16.mxu0 %v1565
    %2106 = vmatpush1.bf16.msra.mxu0 %v1564
    %2107 = vmatprep.subr.bf16.mxu0 %v1573
    %2108 = vmatpush1.bf16.msra.mxu0 %v1572
    %2109 = vmatprep.subr.bf16.mxu0 %v1581
    %2110 = vmatpush1.bf16.msra.mxu0 %v1580
    %2111 = vmatprep.subr.bf16.mxu0 %v1589
    %2112 = vmatpush1.bf16.msra.mxu0 %v1588
    %2113 = vmatprep.subr.bf16.mxu0 %v1597
    %2114 = vmatpush1.bf16.msra.mxu0 %v1596
    %2115 = vmatprep.subr.bf16.mxu0 %v1605
    %2116 = vmatpush1.bf16.msra.mxu0 %v1604
    %2117 = vmatprep.subr.bf16.mxu0 %v1613
    %2118 = vmatpush1.bf16.msra.mxu0 %v1612
    %2119 = vmatprep.subr.bf16.mxu0 %v1621
    %2120 = vmatpush1.bf16.msra.mxu0 %v1620
    %2121 = vmatprep.subr.bf16.mxu0 %v1629
    %2122 = vmatpush1.bf16.msra.mxu0 %v1628
    %2123 = vmatprep.subr.bf16.mxu0 %v1637
    %2124 = vmatpush1.bf16.msra.mxu0 %v1636
    %2125 = vmatprep.subr.bf16.mxu0 %v1645
    %2126 = vmatpush1.bf16.msra.mxu0 %v1644
    %2127 = vmatprep.subr.bf16.mxu0 %v1653
    %2128 = vmatpush1.bf16.msra.mxu0 %v1652
    %2129 = vmatprep.subr.bf16.mxu0 %v1661
    %2130 = vmatpush1.bf16.msra.mxu0 %v1660
    %2131 = vmatprep.subr.bf16.mxu0 %v1669
    %2132 = vmatpush1.bf16.msra.mxu0 %v1668
    %2133 = vmatprep.mubr.bf16.mxu0 %v2018
    %2134 = vmatmul.mubr.bf16.gmra.mrb[0].mxu0 %v2017
    %v2135 = vpop.f32.mrb[0].mxu0
    %v2136 = vadd.f32 0.0, %v2135
    %v2137 = vpop.f32.mrb[0].mxu0
    %v2138 = vadd.f32 0.0, %v2137
    %v2139 = vpop.f32.mrb[0].mxu0
    %v2140 = vpop.f32.mrb[0].mxu0
    %2141 = vdwg.mxu0
    %2142 = vmatprep.subr.bf16.mxu0 %v1551
    %2143 = vmatpush1.bf16.msra.mxu0 %v1550
    %2144 = vmatprep.subr.bf16.mxu0 %v1559
    %2145 = vmatpush1.bf16.msra.mxu0 %v1558
    %2146 = vmatprep.subr.bf16.mxu0 %v1567
    %2147 = vmatpush1.bf16.msra.mxu0 %v1566
    %2148 = vmatprep.subr.bf16.mxu0 %v1575
    %2149 = vmatpush1.bf16.msra.mxu0 %v1574
    %2150 = vmatprep.subr.bf16.mxu0 %v1583
    %2151 = vmatpush1.bf16.msra.mxu0 %v1582
    %2152 = vmatprep.subr.bf16.mxu0 %v1591
    %2153 = vmatpush1.bf16.msra.mxu0 %v1590
    %2154 = vmatprep.subr.bf16.mxu0 %v1599
    %2155 = vmatpush1.bf16.msra.mxu0 %v1598
    %2156 = vmatprep.subr.bf16.mxu0 %v1607
    %2157 = vmatpush1.bf16.msra.mxu0 %v1606
    %2158 = vmatprep.subr.bf16.mxu0 %v1615
    %2159 = vmatpush1.bf16.msra.mxu0 %v1614
    %2160 = vmatprep.subr.bf16.mxu0 %v1623
    %2161 = vmatpush1.bf16.msra.mxu0 %v1622
    %2162 = vmatprep.subr.bf16.mxu0 %v1631
    %2163 = vmatpush1.bf16.msra.mxu0 %v1630
    %2164 = vmatprep.subr.bf16.mxu0 %v1639
    %2165 = vmatpush1.bf16.msra.mxu0 %v1638
    %2166 = vmatprep.subr.bf16.mxu0 %v1647
    %2167 = vmatpush1.bf16.msra.mxu0 %v1646
    %2168 = vmatprep.subr.bf16.mxu0 %v1655
    %2169 = vmatpush1.bf16.msra.mxu0 %v1654
    %2170 = vmatprep.subr.bf16.mxu0 %v1663
    %2171 = vmatpush1.bf16.msra.mxu0 %v1662
    %2172 = vmatprep.subr.bf16.mxu0 %v1671
    %2173 = vmatpush1.bf16.msra.mxu0 %v1670
    %2174 = vmatprep.mubr.bf16.mxu0 %v2018
    %2175 = vmatmul.mubr.bf16.gmra.mrb[0].mxu0 %v2017
    %v2176 = vpop.f32.mrb[0].mxu0
    %v2177 = vadd.f32 0.0, %v2176
    %v2178 = vpop.f32.mrb[0].mxu0
    %v2179 = vadd.f32 0.0, %v2178
    %v2180 = vpop.f32.mrb[0].mxu0
    %v2181 = vpop.f32.mrb[0].mxu0
    %2182 = vdwg.mxu0
    %v2183 = vadd.f32 %v2009, %v2054
    %v2184 = vadd.f32 %v2010, %v2056
    %v2185 = vadd.f32 %v2011, %v2095
    %v2186 = vadd.f32 %v2012, %v2097
    %v2187 = vadd.f32 %v2013, %v2136
    %v2188 = vadd.f32 %v2014, %v2138
    %v2189 = vadd.f32 %v2015, %v2177
    %v2190 = vadd.f32 %v2016, %v2179
    %v2191 = vmul.f32 %v2183, 0.5
    %v2192 = vmul.f32 %v2184, 0.5
    %v2193 = vtanh.pop %v2191
    %v2194 = vtanh.pop %v2192
    %v2195 = vadd.f32 %v2193, 1.0
    %v2196 = vadd.f32 %v2194, 1.0
    %v2197 = vmul.f32 %v2195, 0.5
    %v2198 = vmul.f32 %v2196, 0.5
    %v2199 = vmul.f32 %v2185, 0.5
    %v2200 = vmul.f32 %v2186, 0.5
    %v2201 = vtanh.pop %v2199
    %v2202 = vtanh.pop %v2200
    %v2203 = vadd.f32 %v2201, 1.0
    %v2204 = vadd.f32 %v2202, 1.0
    %v2205 = vmul.f32 %v2203, 0.5
    %v2206 = vmul.f32 %v2204, 0.5
    %v2207 = vtanh.pop %v2187
    %v2208 = vtanh.pop %v2188
    %v2209 = vmul.f32 %v2189, 0.5
    %v2210 = vmul.f32 %v2190, 0.5
    %v2211 = vtanh.pop %v2209
    %v2212 = vtanh.pop %v2210
    %v2213 = vadd.f32 %v2211, 1.0
    %v2214 = vadd.f32 %v2212, 1.0
    %v2215 = vmul.f32 %v2213, 0.5
    %v2216 = vmul.f32 %v2214, 0.5
    %v2217 = vmul.f32 %v2205, %v2002
    %v2218 = vmul.f32 %v2206, %v2003
    %v2219 = vmul.f32 %v2197, %v2207
    %v2220 = vmul.f32 %v2198, %v2208
    %v2221 = vadd.f32 %v2217, %v2219
    %v2222 = vadd.f32 %v2218, %v2220
    %v2223 = vtanh.pop %v2221
    %v2224 = vtanh.pop %v2222
    %v2225 = vmul.f32 %v2215, %v2223
    %v2226 = vmul.f32 %v2216, %v2224
    %s2227 = scalar_lea.vmem [#allocation2], 128
    %v2228 = vld [vmem:[%s2227] sm:$0xff]
    %v2229 = vld [vmem:[%s2227 + $0x8] sm:$0xff]
    %v2230 = vld [vmem:[%s2227 + $0x10] sm:$0xff]
    %v2231 = vld [vmem:[%s2227 + $0x18] sm:$0xff]
    %v2232 = vld [vmem:[%s2227 + $0x20] sm:$0xff]
    %v2233 = vld [vmem:[%s2227 + $0x28] sm:$0xff]
    %v2234 = vld [vmem:[%s2227 + $0x30] sm:$0xff]
    %v2235 = vld [vmem:[%s2227 + $0x38] sm:$0xff]
    %v2236 = vpack.c.bf16 %v2225, %v2225
    %v2237 = vpack.c.bf16 %v2226, %v2226
    %2238 = vmatprep.subr.bf16.mxu0 %v1545
    %2239 = vmatpush1.bf16.msra.mxu0 %v1544
    %2240 = vmatprep.subr.bf16.mxu0 %v1553
    %2241 = vmatpush1.bf16.msra.mxu0 %v1552
    %2242 = vmatprep.subr.bf16.mxu0 %v1561
    %2243 = vmatpush1.bf16.msra.mxu0 %v1560
    %2244 = vmatprep.subr.bf16.mxu0 %v1569
    %2245 = vmatpush1.bf16.msra.mxu0 %v1568
    %2246 = vmatprep.subr.bf16.mxu0 %v1577
    %2247 = vmatpush1.bf16.msra.mxu0 %v1576
    %2248 = vmatprep.subr.bf16.mxu0 %v1585
    %2249 = vmatpush1.bf16.msra.mxu0 %v1584
    %2250 = vmatprep.subr.bf16.mxu0 %v1593
    %2251 = vmatpush1.bf16.msra.mxu0 %v1592
    %2252 = vmatprep.subr.bf16.mxu0 %v1601
    %2253 = vmatpush1.bf16.msra.mxu0 %v1600
    %2254 = vmatprep.subr.bf16.mxu0 %v1609
    %2255 = vmatpush1.bf16.msra.mxu0 %v1608
    %2256 = vmatprep.subr.bf16.mxu0 %v1617
    %2257 = vmatpush1.bf16.msra.mxu0 %v1616
    %2258 = vmatprep.subr.bf16.mxu0 %v1625
    %2259 = vmatpush1.bf16.msra.mxu0 %v1624
    %2260 = vmatprep.subr.bf16.mxu0 %v1633
    %2261 = vmatpush1.bf16.msra.mxu0 %v1632
    %2262 = vmatprep.subr.bf16.mxu0 %v1641
    %2263 = vmatpush1.bf16.msra.mxu0 %v1640
    %2264 = vmatprep.subr.bf16.mxu0 %v1649
    %2265 = vmatpush1.bf16.msra.mxu0 %v1648
    %2266 = vmatprep.subr.bf16.mxu0 %v1657
    %2267 = vmatpush1.bf16.msra.mxu0 %v1656
    %2268 = vmatprep.subr.bf16.mxu0 %v1665
    %2269 = vmatpush1.bf16.msra.mxu0 %v1664
    %2270 = vmatprep.mubr.bf16.mxu0 %v2237
    %2271 = vmatmul.mubr.bf16.gmra.mrb[0].mxu0 %v2236
    %v2272 = vpop.f32.mrb[0].mxu0
    %v2273 = vadd.f32 0.0, %v2272
    %v2274 = vpop.f32.mrb[0].mxu0
    %v2275 = vadd.f32 0.0, %v2274
    %v2276 = vpop.f32.mrb[0].mxu0
    %v2277 = vpop.f32.mrb[0].mxu0
    %2278 = vdwg.mxu0
    %2279 = vmatprep.subr.bf16.mxu0 %v1547
    %2280 = vmatpush1.bf16.msra.mxu0 %v1546
    %2281 = vmatprep.subr.bf16.mxu0 %v1555
    %2282 = vmatpush1.bf16.msra.mxu0 %v1554
    %2283 = vmatprep.subr.bf16.mxu0 %v1563
    %2284 = vmatpush1.bf16.msra.mxu0 %v1562
    %2285 = vmatprep.subr.bf16.mxu0 %v1571
    %2286 = vmatpush1.bf16.msra.mxu0 %v1570
    %2287 = vmatprep.subr.bf16.mxu0 %v1579
    %2288 = vmatpush1.bf16.msra.mxu0 %v1578
    %2289 = vmatprep.subr.bf16.mxu0 %v1587
    %2290 = vmatpush1.bf16.msra.mxu0 %v1586
    %2291 = vmatprep.subr.bf16.mxu0 %v1595
    %2292 = vmatpush1.bf16.msra.mxu0 %v1594
    %2293 = vmatprep.subr.bf16.mxu0 %v1603
    %2294 = vmatpush1.bf16.msra.mxu0 %v1602
    %2295 = vmatprep.subr.bf16.mxu0 %v1611
    %2296 = vmatpush1.bf16.msra.mxu0 %v1610
    %2297 = vmatprep.subr.bf16.mxu0 %v1619
    %2298 = vmatpush1.bf16.msra.mxu0 %v1618
    %2299 = vmatprep.subr.bf16.mxu0 %v1627
    %2300 = vmatpush1.bf16.msra.mxu0 %v1626
    %2301 = vmatprep.subr.bf16.mxu0 %v1635
    %2302 = vmatpush1.bf16.msra.mxu0 %v1634
    %2303 = vmatprep.subr.bf16.mxu0 %v1643
    %2304 = vmatpush1.bf16.msra.mxu0 %v1642
    %2305 = vmatprep.subr.bf16.mxu0 %v1651
    %2306 = vmatpush1.bf16.msra.mxu0 %v1650
    %2307 = vmatprep.subr.bf16.mxu0 %v1659
    %2308 = vmatpush1.bf16.msra.mxu0 %v1658
    %2309 = vmatprep.subr.bf16.mxu0 %v1667
    %2310 = vmatpush1.bf16.msra.mxu0 %v1666
    %2311 = vmatprep.mubr.bf16.mxu0 %v2237
    %2312 = vmatmul.mubr.bf16.gmra.mrb[0].mxu0 %v2236
    %v2313 = vpop.f32.mrb[0].mxu0
    %v2314 = vadd.f32 0.0, %v2313
    %v2315 = vpop.f32.mrb[0].mxu0
    %v2316 = vadd.f32 0.0, %v2315
    %v2317 = vpop.f32.mrb[0].mxu0
    %v2318 = vpop.f32.mrb[0].mxu0
    %2319 = vdwg.mxu0
    %2320 = vmatprep.subr.bf16.mxu0 %v1549
    %2321 = vmatpush1.bf16.msra.mxu0 %v1548
    %2322 = vmatprep.subr.bf16.mxu0 %v1557
    %2323 = vmatpush1.bf16.msra.mxu0 %v1556
    %2324 = vmatprep.subr.bf16.mxu0 %v1565
    %2325 = vmatpush1.bf16.msra.mxu0 %v1564
    %2326 = vmatprep.subr.bf16.mxu0 %v1573
    %2327 = vmatpush1.bf16.msra.mxu0 %v1572
    %2328 = vmatprep.subr.bf16.mxu0 %v1581
    %2329 = vmatpush1.bf16.msra.mxu0 %v1580
    %2330 = vmatprep.subr.bf16.mxu0 %v1589
    %2331 = vmatpush1.bf16.msra.mxu0 %v1588
    %2332 = vmatprep.subr.bf16.mxu0 %v1597
    %2333 = vmatpush1.bf16.msra.mxu0 %v1596
    %2334 = vmatprep.subr.bf16.mxu0 %v1605
    %2335 = vmatpush1.bf16.msra.mxu0 %v1604
    %2336 = vmatprep.subr.bf16.mxu0 %v1613
    %2337 = vmatpush1.bf16.msra.mxu0 %v1612
    %2338 = vmatprep.subr.bf16.mxu0 %v1621
    %2339 = vmatpush1.bf16.msra.mxu0 %v1620
    %2340 = vmatprep.subr.bf16.mxu0 %v1629
    %2341 = vmatpush1.bf16.msra.mxu0 %v1628
    %2342 = vmatprep.subr.bf16.mxu0 %v1637
    %2343 = vmatpush1.bf16.msra.mxu0 %v1636
    %2344 = vmatprep.subr.bf16.mxu0 %v1645
    %2345 = vmatpush1.bf16.msra.mxu0 %v1644
    %2346 = vmatprep.subr.bf16.mxu0 %v1653
    %2347 = vmatpush1.bf16.msra.mxu0 %v1652
    %2348 = vmatprep.subr.bf16.mxu0 %v1661
    %2349 = vmatpush1.bf16.msra.mxu0 %v1660
    %2350 = vmatprep.subr.bf16.mxu0 %v1669
    %2351 = vmatpush1.bf16.msra.mxu0 %v1668
    %2352 = vmatprep.mubr.bf16.mxu0 %v2237
    %2353 = vmatmul.mubr.bf16.gmra.mrb[0].mxu0 %v2236
    %v2354 = vpop.f32.mrb[0].mxu0
    %v2355 = vadd.f32 0.0, %v2354
    %v2356 = vpop.f32.mrb[0].mxu0
    %v2357 = vadd.f32 0.0, %v2356
    %v2358 = vpop.f32.mrb[0].mxu0
    %v2359 = vpop.f32.mrb[0].mxu0
    %2360 = vdwg.mxu0
    %2361 = vmatprep.subr.bf16.mxu0 %v1551
    %2362 = vmatpush1.bf16.msra.mxu0 %v1550
    %2363 = vmatprep.subr.bf16.mxu0 %v1559
    %2364 = vmatpush1.bf16.msra.mxu0 %v1558
    %2365 = vmatprep.subr.bf16.mxu0 %v1567
    %2366 = vmatpush1.bf16.msra.mxu0 %v1566
    %2367 = vmatprep.subr.bf16.mxu0 %v1575
    %2368 = vmatpush1.bf16.msra.mxu0 %v1574
    %2369 = vmatprep.subr.bf16.mxu0 %v1583
    %2370 = vmatpush1.bf16.msra.mxu0 %v1582
    %2371 = vmatprep.subr.bf16.mxu0 %v1591
    %2372 = vmatpush1.bf16.msra.mxu0 %v1590
    %2373 = vmatprep.subr.bf16.mxu0 %v1599
    %2374 = vmatpush1.bf16.msra.mxu0 %v1598
    %2375 = vmatprep.subr.bf16.mxu0 %v1607
    %2376 = vmatpush1.bf16.msra.mxu0 %v1606
    %2377 = vmatprep.subr.bf16.mxu0 %v1615
    %2378 = vmatpush1.bf16.msra.mxu0 %v1614
    %2379 = vmatprep.subr.bf16.mxu0 %v1623
    %2380 = vmatpush1.bf16.msra.mxu0 %v1622
    %2381 = vmatprep.subr.bf16.mxu0 %v1631
    %2382 = vmatpush1.bf16.msra.mxu0 %v1630
    %2383 = vmatprep.subr.bf16.mxu0 %v1639
    %2384 = vmatpush1.bf16.msra.mxu0 %v1638
    %2385 = vmatprep.subr.bf16.mxu0 %v1647
    %2386 = vmatpush1.bf16.msra.mxu0 %v1646
    %2387 = vmatprep.subr.bf16.mxu0 %v1655
    %2388 = vmatpush1.bf16.msra.mxu0 %v1654
    %2389 = vmatprep.subr.bf16.mxu0 %v1663
    %2390 = vmatpush1.bf16.msra.mxu0 %v1662
    %2391 = vmatprep.subr.bf16.mxu0 %v1671
    %2392 = vmatpush1.bf16.msra.mxu0 %v1670
    %2393 = vmatprep.mubr.bf16.mxu0 %v2237
    %2394 = vmatmul.mubr.bf16.gmra.mrb[0].mxu0 %v2236
    %v2395 = vpop.f32.mrb[0].mxu0
    %v2396 = vadd.f32 0.0, %v2395
    %v2397 = vpop.f32.mrb[0].mxu0
    %v2398 = vadd.f32 0.0, %v2397
    %v2399 = vpop.f32.mrb[0].mxu0
    %v2400 = vpop.f32.mrb[0].mxu0
    %2401 = vdwg.mxu0
    %v2402 = vadd.f32 %v2228, %v2273
    %v2403 = vadd.f32 %v2229, %v2275
    %v2404 = vadd.f32 %v2230, %v2314
    %v2405 = vadd.f32 %v2231, %v2316
    %v2406 = vadd.f32 %v2232, %v2355
    %v2407 = vadd.f32 %v2233, %v2357
    %v2408 = vadd.f32 %v2234, %v2396
    %v2409 = vadd.f32 %v2235, %v2398
    %v2410 = vmul.f32 %v2402, 0.5
    %v2411 = vmul.f32 %v2403, 0.5
    %v2412 = vtanh.pop %v2410
    %v2413 = vtanh.pop %v2411
    %v2414 = vadd.f32 %v2412, 1.0
    %v2415 = vadd.f32 %v2413, 1.0
    %v2416 = vmul.f32 %v2414, 0.5
    %v2417 = vmul.f32 %v2415, 0.5
    %v2418 = vmul.f32 %v2404, 0.5
    %v2419 = vmul.f32 %v2405, 0.5
    %v2420 = vtanh.pop %v2418
    %v2421 = vtanh.pop %v2419
    %v2422 = vadd.f32 %v2420, 1.0
    %v2423 = vadd.f32 %v2421, 1.0
    %v2424 = vmul.f32 %v2422, 0.5
    %v2425 = vmul.f32 %v2423, 0.5
    %v2426 = vtanh.pop %v2406
    %v2427 = vtanh.pop %v2407
    %v2428 = vmul.f32 %v2408, 0.5
    %v2429 = vmul.f32 %v2409, 0.5
    %v2430 = vtanh.pop %v2428
    %v2431 = vtanh.pop %v2429
    %v2432 = vadd.f32 %v2430, 1.0
    %v2433 = vadd.f32 %v2431, 1.0
    %v2434 = vmul.f32 %v2432, 0.5
    %v2435 = vmul.f32 %v2433, 0.5
    %v2436 = vmul.f32 %v2424, %v2221
    %v2437 = vmul.f32 %v2425, %v2222
    %v2438 = vmul.f32 %v2416, %v2426
    %v2439 = vmul.f32 %v2417, %v2427
    %v2440 = vadd.f32 %v2436, %v2438
    %v2441 = vadd.f32 %v2437, %v2439
    %v2442 = vtanh.pop %v2440
    %v2443 = vtanh.pop %v2441
    %v2444 = vmul.f32 %v2434, %v2442
    %v2445 = vmul.f32 %v2435, %v2443
    %s2446 = scalar_lea.vmem [#allocation2], 192
    %v2447 = vld [vmem:[%s2446] sm:$0xff]
    %v2448 = vld [vmem:[%s2446 + $0x8] sm:$0xff]
    %v2449 = vld [vmem:[%s2446 + $0x10] sm:$0xff]
    %v2450 = vld [vmem:[%s2446 + $0x18] sm:$0xff]
    %v2451 = vld [vmem:[%s2446 + $0x20] sm:$0xff]
    %v2452 = vld [vmem:[%s2446 + $0x28] sm:$0xff]
    %v2453 = vld [vmem:[%s2446 + $0x30] sm:$0xff]
    %v2454 = vld [vmem:[%s2446 + $0x38] sm:$0xff]
    %v2455 = vpack.c.bf16 %v2444, %v2444
    %v2456 = vpack.c.bf16 %v2445, %v2445
    %2457 = vmatprep.subr.bf16.mxu0 %v1545
    %2458 = vmatpush1.bf16.msra.mxu0 %v1544
    %2459 = vmatprep.subr.bf16.mxu0 %v1553
    %2460 = vmatpush1.bf16.msra.mxu0 %v1552
    %2461 = vmatprep.subr.bf16.mxu0 %v1561
    %2462 = vmatpush1.bf16.msra.mxu0 %v1560
    %2463 = vmatprep.subr.bf16.mxu0 %v1569
    %2464 = vmatpush1.bf16.msra.mxu0 %v1568
    %2465 = vmatprep.subr.bf16.mxu0 %v1577
    %2466 = vmatpush1.bf16.msra.mxu0 %v1576
    %2467 = vmatprep.subr.bf16.mxu0 %v1585
    %2468 = vmatpush1.bf16.msra.mxu0 %v1584
    %2469 = vmatprep.subr.bf16.mxu0 %v1593
    %2470 = vmatpush1.bf16.msra.mxu0 %v1592
    %2471 = vmatprep.subr.bf16.mxu0 %v1601
    %2472 = vmatpush1.bf16.msra.mxu0 %v1600
    %2473 = vmatprep.subr.bf16.mxu0 %v1609
    %2474 = vmatpush1.bf16.msra.mxu0 %v1608
    %2475 = vmatprep.subr.bf16.mxu0 %v1617
    %2476 = vmatpush1.bf16.msra.mxu0 %v1616
    %2477 = vmatprep.subr.bf16.mxu0 %v1625
    %2478 = vmatpush1.bf16.msra.mxu0 %v1624
    %2479 = vmatprep.subr.bf16.mxu0 %v1633
    %2480 = vmatpush1.bf16.msra.mxu0 %v1632
    %2481 = vmatprep.subr.bf16.mxu0 %v1641
    %2482 = vmatpush1.bf16.msra.mxu0 %v1640
    %2483 = vmatprep.subr.bf16.mxu0 %v1649
    %2484 = vmatpush1.bf16.msra.mxu0 %v1648
    %2485 = vmatprep.subr.bf16.mxu0 %v1657
    %2486 = vmatpush1.bf16.msra.mxu0 %v1656
    %2487 = vmatprep.subr.bf16.mxu0 %v1665
    %2488 = vmatpush1.bf16.msra.mxu0 %v1664
    %2489 = vmatprep.mubr.bf16.mxu0 %v2456
    %2490 = vmatmul.mubr.bf16.gmra.mrb[0].mxu0 %v2455
    %v2491 = vpop.f32.mrb[0].mxu0
    %v2492 = vadd.f32 0.0, %v2491
    %v2493 = vpop.f32.mrb[0].mxu0
    %v2494 = vadd.f32 0.0, %v2493
    %v2495 = vpop.f32.mrb[0].mxu0
    %v2496 = vpop.f32.mrb[0].mxu0
    %2497 = vdwg.mxu0
    %2498 = vmatprep.subr.bf16.mxu0 %v1547
    %2499 = vmatpush1.bf16.msra.mxu0 %v1546
    %2500 = vmatprep.subr.bf16.mxu0 %v1555
    %2501 = vmatpush1.bf16.msra.mxu0 %v1554
    %2502 = vmatprep.subr.bf16.mxu0 %v1563
    %2503 = vmatpush1.bf16.msra.mxu0 %v1562
    %2504 = vmatprep.subr.bf16.mxu0 %v1571
    %2505 = vmatpush1.bf16.msra.mxu0 %v1570
    %2506 = vmatprep.subr.bf16.mxu0 %v1579
    %2507 = vmatpush1.bf16.msra.mxu0 %v1578
    %2508 = vmatprep.subr.bf16.mxu0 %v1587
    %2509 = vmatpush1.bf16.msra.mxu0 %v1586
    %2510 = vmatprep.subr.bf16.mxu0 %v1595
    %2511 = vmatpush1.bf16.msra.mxu0 %v1594
    %2512 = vmatprep.subr.bf16.mxu0 %v1603
    %2513 = vmatpush1.bf16.msra.mxu0 %v1602
    %2514 = vmatprep.subr.bf16.mxu0 %v1611
    %2515 = vmatpush1.bf16.msra.mxu0 %v1610
    %2516 = vmatprep.subr.bf16.mxu0 %v1619
    %2517 = vmatpush1.bf16.msra.mxu0 %v1618
    %2518 = vmatprep.subr.bf16.mxu0 %v1627
    %2519 = vmatpush1.bf16.msra.mxu0 %v1626
    %2520 = vmatprep.subr.bf16.mxu0 %v1635
    %2521 = vmatpush1.bf16.msra.mxu0 %v1634
    %2522 = vmatprep.subr.bf16.mxu0 %v1643
    %2523 = vmatpush1.bf16.msra.mxu0 %v1642
    %2524 = vmatprep.subr.bf16.mxu0 %v1651
    %2525 = vmatpush1.bf16.msra.mxu0 %v1650
    %2526 = vmatprep.subr.bf16.mxu0 %v1659
    %2527 = vmatpush1.bf16.msra.mxu0 %v1658
    %2528 = vmatprep.subr.bf16.mxu0 %v1667
    %2529 = vmatpush1.bf16.msra.mxu0 %v1666
    %2530 = vmatprep.mubr.bf16.mxu0 %v2456
    %2531 = vmatmul.mubr.bf16.gmra.mrb[0].mxu0 %v2455
    %v2532 = vpop.f32.mrb[0].mxu0
    %v2533 = vadd.f32 0.0, %v2532
    %v2534 = vpop.f32.mrb[0].mxu0
    %v2535 = vadd.f32 0.0, %v2534
    %v2536 = vpop.f32.mrb[0].mxu0
    %v2537 = vpop.f32.mrb[0].mxu0
    %2538 = vdwg.mxu0
    %2539 = vmatprep.subr.bf16.mxu0 %v1549
    %2540 = vmatpush1.bf16.msra.mxu0 %v1548
    %2541 = vmatprep.subr.bf16.mxu0 %v1557
    %2542 = vmatpush1.bf16.msra.mxu0 %v1556
    %2543 = vmatprep.subr.bf16.mxu0 %v1565
    %2544 = vmatpush1.bf16.msra.mxu0 %v1564
    %2545 = vmatprep.subr.bf16.mxu0 %v1573
    %2546 = vmatpush1.bf16.msra.mxu0 %v1572
    %2547 = vmatprep.subr.bf16.mxu0 %v1581
    %2548 = vmatpush1.bf16.msra.mxu0 %v1580
    %2549 = vmatprep.subr.bf16.mxu0 %v1589
    %2550 = vmatpush1.bf16.msra.mxu0 %v1588
    %2551 = vmatprep.subr.bf16.mxu0 %v1597
    %2552 = vmatpush1.bf16.msra.mxu0 %v1596
    %2553 = vmatprep.subr.bf16.mxu0 %v1605
    %2554 = vmatpush1.bf16.msra.mxu0 %v1604
    %2555 = vmatprep.subr.bf16.mxu0 %v1613
    %2556 = vmatpush1.bf16.msra.mxu0 %v1612
    %2557 = vmatprep.subr.bf16.mxu0 %v1621
    %2558 = vmatpush1.bf16.msra.mxu0 %v1620
    %2559 = vmatprep.subr.bf16.mxu0 %v1629
    %2560 = vmatpush1.bf16.msra.mxu0 %v1628
    %2561 = vmatprep.subr.bf16.mxu0 %v1637
    %2562 = vmatpush1.bf16.msra.mxu0 %v1636
    %2563 = vmatprep.subr.bf16.mxu0 %v1645
    %2564 = vmatpush1.bf16.msra.mxu0 %v1644
    %2565 = vmatprep.subr.bf16.mxu0 %v1653
    %2566 = vmatpush1.bf16.msra.mxu0 %v1652
    %2567 = vmatprep.subr.bf16.mxu0 %v1661
    %2568 = vmatpush1.bf16.msra.mxu0 %v1660
    %2569 = vmatprep.subr.bf16.mxu0 %v1669
    %2570 = vmatpush1.bf16.msra.mxu0 %v1668
    %2571 = vmatprep.mubr.bf16.mxu0 %v2456
    %2572 = vmatmul.mubr.bf16.gmra.mrb[0].mxu0 %v2455
    %v2573 = vpop.f32.mrb[0].mxu0
    %v2574 = vadd.f32 0.0, %v2573
    %v2575 = vpop.f32.mrb[0].mxu0
    %v2576 = vadd.f32 0.0, %v2575
    %v2577 = vpop.f32.mrb[0].mxu0
    %v2578 = vpop.f32.mrb[0].mxu0
    %2579 = vdwg.mxu0
    %2580 = vmatprep.subr.bf16.mxu0 %v1551
    %2581 = vmatpush1.bf16.msra.mxu0 %v1550
    %2582 = vmatprep.subr.bf16.mxu0 %v1559
    %2583 = vmatpush1.bf16.msra.mxu0 %v1558
    %2584 = vmatprep.subr.bf16.mxu0 %v1567
    %2585 = vmatpush1.bf16.msra.mxu0 %v1566
    %2586 = vmatprep.subr.bf16.mxu0 %v1575
    %2587 = vmatpush1.bf16.msra.mxu0 %v1574
    %2588 = vmatprep.subr.bf16.mxu0 %v1583
    %2589 = vmatpush1.bf16.msra.mxu0 %v1582
    %2590 = vmatprep.subr.bf16.mxu0 %v1591
    %2591 = vmatpush1.bf16.msra.mxu0 %v1590
    %2592 = vmatprep.subr.bf16.mxu0 %v1599
    %2593 = vmatpush1.bf16.msra.mxu0 %v1598
    %2594 = vmatprep.subr.bf16.mxu0 %v1607
    %2595 = vmatpush1.bf16.msra.mxu0 %v1606
    %2596 = vmatprep.subr.bf16.mxu0 %v1615
    %2597 = vmatpush1.bf16.msra.mxu0 %v1614
    %2598 = vmatprep.subr.bf16.mxu0 %v1623
    %2599 = vmatpush1.bf16.msra.mxu0 %v1622
    %2600 = vmatprep.subr.bf16.mxu0 %v1631
    %2601 = vmatpush1.bf16.msra.mxu0 %v1630
    %2602 = vmatprep.subr.bf16.mxu0 %v1639
    %2603 = vmatpush1.bf16.msra.mxu0 %v1638
    %2604 = vmatprep.subr.bf16.mxu0 %v1647
    %2605 = vmatpush1.bf16.msra.mxu0 %v1646
    %2606 = vmatprep.subr.bf16.mxu0 %v1655
    %2607 = vmatpush1.bf16.msra.mxu0 %v1654
    %2608 = vmatprep.subr.bf16.mxu0 %v1663
    %2609 = vmatpush1.bf16.msra.mxu0 %v1662
    %2610 = vmatprep.subr.bf16.mxu0 %v1671
    %2611 = vmatpush1.bf16.msra.mxu0 %v1670
    %2612 = vmatprep.mubr.bf16.mxu0 %v2456
    %2613 = vmatmul.mubr.bf16.gmra.mrb[0].mxu0 %v2455
    %v2614 = vpop.f32.mrb[0].mxu0
    %v2615 = vadd.f32 0.0, %v2614
    %v2616 = vpop.f32.mrb[0].mxu0
    %v2617 = vadd.f32 0.0, %v2616
    %v2618 = vpop.f32.mrb[0].mxu0
    %v2619 = vpop.f32.mrb[0].mxu0
    %2620 = vdwg.mxu0
    %v2621 = vadd.f32 %v2447, %v2492
    %v2622 = vadd.f32 %v2448, %v2494
    %v2623 = vadd.f32 %v2449, %v2533
    %v2624 = vadd.f32 %v2450, %v2535
    %v2625 = vadd.f32 %v2451, %v2574
    %v2626 = vadd.f32 %v2452, %v2576
    %v2627 = vadd.f32 %v2453, %v2615
    %v2628 = vadd.f32 %v2454, %v2617
    %v2629 = vmul.f32 %v2621, 0.5
    %v2630 = vmul.f32 %v2622, 0.5
    %v2631 = vtanh.pop %v2629
    %v2632 = vtanh.pop %v2630
    %v2633 = vadd.f32 %v2631, 1.0
    %v2634 = vadd.f32 %v2632, 1.0
    %v2635 = vmul.f32 %v2633, 0.5
    %v2636 = vmul.f32 %v2634, 0.5
    %v2637 = vmul.f32 %v2623, 0.5
    %v2638 = vmul.f32 %v2624, 0.5
    %v2639 = vtanh.pop %v2637
    %v2640 = vtanh.pop %v2638
    %v2641 = vadd.f32 %v2639, 1.0
    %v2642 = vadd.f32 %v2640, 1.0
    %v2643 = vmul.f32 %v2641, 0.5
    %v2644 = vmul.f32 %v2642, 0.5
    %v2645 = vtanh.pop %v2625
    %v2646 = vtanh.pop %v2626
    %v2647 = vmul.f32 %v2627, 0.5
    %v2648 = vmul.f32 %v2628, 0.5
    %v2649 = vtanh.pop %v2647
    %v2650 = vtanh.pop %v2648
    %v2651 = vadd.f32 %v2649, 1.0
    %v2652 = vadd.f32 %v2650, 1.0
    %v2653 = vmul.f32 %v2651, 0.5
    %v2654 = vmul.f32 %v2652, 0.5
    %v2655 = vmul.f32 %v2643, %v2440
    %v2656 = vmul.f32 %v2644, %v2441
    %v2657 = vmul.f32 %v2635, %v2645
    %v2658 = vmul.f32 %v2636, %v2646
    %v2659 = vadd.f32 %v2655, %v2657
    %v2660 = vadd.f32 %v2656, %v2658
    %v2661 = vtanh.pop %v2659
    %v2662 = vtanh.pop %v2660
    %v2663 = vmul.f32 %v2653, %v2661
    %v2664 = vmul.f32 %v2654, %v2662
    %s2665 = scalar_lea.vmem [#allocation2], 256
    %v2666 = vld [vmem:[%s2665] sm:$0xff]
    %v2667 = vld [vmem:[%s2665 + $0x8] sm:$0xff]
    %v2668 = vld [vmem:[%s2665 + $0x10] sm:$0xff]
    %v2669 = vld [vmem:[%s2665 + $0x18] sm:$0xff]
    %v2670 = vld [vmem:[%s2665 + $0x20] sm:$0xff]
    %v2671 = vld [vmem:[%s2665 + $0x28] sm:$0xff]
    %v2672 = vld [vmem:[%s2665 + $0x30] sm:$0xff]
    %v2673 = vld [vmem:[%s2665 + $0x38] sm:$0xff]
    %v2674 = vpack.c.bf16 %v2663, %v2663
    %v2675 = vpack.c.bf16 %v2664, %v2664
    %2676 = vmatprep.subr.bf16.mxu0 %v1545
    %2677 = vmatpush1.bf16.msra.mxu0 %v1544
    %2678 = vmatprep.subr.bf16.mxu0 %v1553
    %2679 = vmatpush1.bf16.msra.mxu0 %v1552
    %2680 = vmatprep.subr.bf16.mxu0 %v1561
    %2681 = vmatpush1.bf16.msra.mxu0 %v1560
    %2682 = vmatprep.subr.bf16.mxu0 %v1569
    %2683 = vmatpush1.bf16.msra.mxu0 %v1568
    %2684 = vmatprep.subr.bf16.mxu0 %v1577
    %2685 = vmatpush1.bf16.msra.mxu0 %v1576
    %2686 = vmatprep.subr.bf16.mxu0 %v1585
    %2687 = vmatpush1.bf16.msra.mxu0 %v1584
    %2688 = vmatprep.subr.bf16.mxu0 %v1593
    %2689 = vmatpush1.bf16.msra.mxu0 %v1592
    %2690 = vmatprep.subr.bf16.mxu0 %v1601
    %2691 = vmatpush1.bf16.msra.mxu0 %v1600
    %2692 = vmatprep.subr.bf16.mxu0 %v1609
    %2693 = vmatpush1.bf16.msra.mxu0 %v1608
    %2694 = vmatprep.subr.bf16.mxu0 %v1617
    %2695 = vmatpush1.bf16.msra.mxu0 %v1616
    %2696 = vmatprep.subr.bf16.mxu0 %v1625
    %2697 = vmatpush1.bf16.msra.mxu0 %v1624
    %2698 = vmatprep.subr.bf16.mxu0 %v1633
    %2699 = vmatpush1.bf16.msra.mxu0 %v1632
    %2700 = vmatprep.subr.bf16.mxu0 %v1641
    %2701 = vmatpush1.bf16.msra.mxu0 %v1640
    %2702 = vmatprep.subr.bf16.mxu0 %v1649
    %2703 = vmatpush1.bf16.msra.mxu0 %v1648
    %2704 = vmatprep.subr.bf16.mxu0 %v1657
    %2705 = vmatpush1.bf16.msra.mxu0 %v1656
    %2706 = vmatprep.subr.bf16.mxu0 %v1665
    %2707 = vmatpush1.bf16.msra.mxu0 %v1664
    %2708 = vmatprep.mubr.bf16.mxu0 %v2675
    %2709 = vmatmul.mubr.bf16.gmra.mrb[0].mxu0 %v2674
    %v2710 = vpop.f32.mrb[0].mxu0
    %v2711 = vadd.f32 0.0, %v2710
    %v2712 = vpop.f32.mrb[0].mxu0
    %v2713 = vadd.f32 0.0, %v2712
    %v2714 = vpop.f32.mrb[0].mxu0
    %v2715 = vpop.f32.mrb[0].mxu0
    %2716 = vdwg.mxu0
    %2717 = vmatprep.subr.bf16.mxu0 %v1547
    %2718 = vmatpush1.bf16.msra.mxu0 %v1546
    %2719 = vmatprep.subr.bf16.mxu0 %v1555
    %2720 = vmatpush1.bf16.msra.mxu0 %v1554
    %2721 = vmatprep.subr.bf16.mxu0 %v1563
    %2722 = vmatpush1.bf16.msra.mxu0 %v1562
    %2723 = vmatprep.subr.bf16.mxu0 %v1571
    %2724 = vmatpush1.bf16.msra.mxu0 %v1570
    %2725 = vmatprep.subr.bf16.mxu0 %v1579
    %2726 = vmatpush1.bf16.msra.mxu0 %v1578
    %2727 = vmatprep.subr.bf16.mxu0 %v1587
    %2728 = vmatpush1.bf16.msra.mxu0 %v1586
    %2729 = vmatprep.subr.bf16.mxu0 %v1595
    %2730 = vmatpush1.bf16.msra.mxu0 %v1594
    %2731 = vmatprep.subr.bf16.mxu0 %v1603
    %2732 = vmatpush1.bf16.msra.mxu0 %v1602
    %2733 = vmatprep.subr.bf16.mxu0 %v1611
    %2734 = vmatpush1.bf16.msra.mxu0 %v1610
    %2735 = vmatprep.subr.bf16.mxu0 %v1619
    %2736 = vmatpush1.bf16.msra.mxu0 %v1618
    %2737 = vmatprep.subr.bf16.mxu0 %v1627
    %2738 = vmatpush1.bf16.msra.mxu0 %v1626
    %2739 = vmatprep.subr.bf16.mxu0 %v1635
    %2740 = vmatpush1.bf16.msra.mxu0 %v1634
    %2741 = vmatprep.subr.bf16.mxu0 %v1643
    %2742 = vmatpush1.bf16.msra.mxu0 %v1642
    %2743 = vmatprep.subr.bf16.mxu0 %v1651
    %2744 = vmatpush1.bf16.msra.mxu0 %v1650
    %2745 = vmatprep.subr.bf16.mxu0 %v1659
    %2746 = vmatpush1.bf16.msra.mxu0 %v1658
    %2747 = vmatprep.subr.bf16.mxu0 %v1667
    %2748 = vmatpush1.bf16.msra.mxu0 %v1666
    %2749 = vmatprep.mubr.bf16.mxu0 %v2675
    %2750 = vmatmul.mubr.bf16.gmra.mrb[0].mxu0 %v2674
    %v2751 = vpop.f32.mrb[0].mxu0
    %v2752 = vadd.f32 0.0, %v2751
    %v2753 = vpop.f32.mrb[0].mxu0
    %v2754 = vadd.f32 0.0, %v2753
    %v2755 = vpop.f32.mrb[0].mxu0
    %v2756 = vpop.f32.mrb[0].mxu0
    %2757 = vdwg.mxu0
    %2758 = vmatprep.subr.bf16.mxu0 %v1549
    %2759 = vmatpush1.bf16.msra.mxu0 %v1548
    %2760 = vmatprep.subr.bf16.mxu0 %v1557
    %2761 = vmatpush1.bf16.msra.mxu0 %v1556
    %2762 = vmatprep.subr.bf16.mxu0 %v1565
    %2763 = vmatpush1.bf16.msra.mxu0 %v1564
    %2764 = vmatprep.subr.bf16.mxu0 %v1573
    %2765 = vmatpush1.bf16.msra.mxu0 %v1572
    %2766 = vmatprep.subr.bf16.mxu0 %v1581
    %2767 = vmatpush1.bf16.msra.mxu0 %v1580
    %2768 = vmatprep.subr.bf16.mxu0 %v1589
    %2769 = vmatpush1.bf16.msra.mxu0 %v1588
    %2770 = vmatprep.subr.bf16.mxu0 %v1597
    %2771 = vmatpush1.bf16.msra.mxu0 %v1596
    %2772 = vmatprep.subr.bf16.mxu0 %v1605
    %2773 = vmatpush1.bf16.msra.mxu0 %v1604
    %2774 = vmatprep.subr.bf16.mxu0 %v1613
    %2775 = vmatpush1.bf16.msra.mxu0 %v1612
    %2776 = vmatprep.subr.bf16.mxu0 %v1621
    %2777 = vmatpush1.bf16.msra.mxu0 %v1620
    %2778 = vmatprep.subr.bf16.mxu0 %v1629
    %2779 = vmatpush1.bf16.msra.mxu0 %v1628
    %2780 = vmatprep.subr.bf16.mxu0 %v1637
    %2781 = vmatpush1.bf16.msra.mxu0 %v1636
    %2782 = vmatprep.subr.bf16.mxu0 %v1645
    %2783 = vmatpush1.bf16.msra.mxu0 %v1644
    %2784 = vmatprep.subr.bf16.mxu0 %v1653
    %2785 = vmatpush1.bf16.msra.mxu0 %v1652
    %2786 = vmatprep.subr.bf16.mxu0 %v1661
    %2787 = vmatpush1.bf16.msra.mxu0 %v1660
    %2788 = vmatprep.subr.bf16.mxu0 %v1669
    %2789 = vmatpush1.bf16.msra.mxu0 %v1668
    %2790 = vmatprep.mubr.bf16.mxu0 %v2675
    %2791 = vmatmul.mubr.bf16.gmra.mrb[0].mxu0 %v2674
    %v2792 = vpop.f32.mrb[0].mxu0
    %v2793 = vadd.f32 0.0, %v2792
    %v2794 = vpop.f32.mrb[0].mxu0
    %v2795 = vadd.f32 0.0, %v2794
    %v2796 = vpop.f32.mrb[0].mxu0
    %v2797 = vpop.f32.mrb[0].mxu0
    %2798 = vdwg.mxu0
    %2799 = vmatprep.subr.bf16.mxu0 %v1551
    %2800 = vmatpush1.bf16.msra.mxu0 %v1550
    %2801 = vmatprep.subr.bf16.mxu0 %v1559
    %2802 = vmatpush1.bf16.msra.mxu0 %v1558
    %2803 = vmatprep.subr.bf16.mxu0 %v1567
    %2804 = vmatpush1.bf16.msra.mxu0 %v1566
    %2805 = vmatprep.subr.bf16.mxu0 %v1575
    %2806 = vmatpush1.bf16.msra.mxu0 %v1574
    %2807 = vmatprep.subr.bf16.mxu0 %v1583
    %2808 = vmatpush1.bf16.msra.mxu0 %v1582
    %2809 = vmatprep.subr.bf16.mxu0 %v1591
    %2810 = vmatpush1.bf16.msra.mxu0 %v1590
    %2811 = vmatprep.subr.bf16.mxu0 %v1599
    %2812 = vmatpush1.bf16.msra.mxu0 %v1598
    %2813 = vmatprep.subr.bf16.mxu0 %v1607
    %2814 = vmatpush1.bf16.msra.mxu0 %v1606
    %2815 = vmatprep.subr.bf16.mxu0 %v1615
    %2816 = vmatpush1.bf16.msra.mxu0 %v1614
    %2817 = vmatprep.subr.bf16.mxu0 %v1623
    %2818 = vmatpush1.bf16.msra.mxu0 %v1622
    %2819 = vmatprep.subr.bf16.mxu0 %v1631
    %2820 = vmatpush1.bf16.msra.mxu0 %v1630
    %2821 = vmatprep.subr.bf16.mxu0 %v1639
    %2822 = vmatpush1.bf16.msra.mxu0 %v1638
    %2823 = vmatprep.subr.bf16.mxu0 %v1647
    %2824 = vmatpush1.bf16.msra.mxu0 %v1646
    %2825 = vmatprep.subr.bf16.mxu0 %v1655
    %2826 = vmatpush1.bf16.msra.mxu0 %v1654
    %2827 = vmatprep.subr.bf16.mxu0 %v1663
    %2828 = vmatpush1.bf16.msra.mxu0 %v1662
    %2829 = vmatprep.subr.bf16.mxu0 %v1671
    %2830 = vmatpush1.bf16.msra.mxu0 %v1670
    %2831 = vmatprep.mubr.bf16.mxu0 %v2675
    %2832 = vmatmul.mubr.bf16.gmra.mrb[0].mxu0 %v2674
    %v2833 = vpop.f32.mrb[0].mxu0
    %v2834 = vadd.f32 0.0, %v2833
    %v2835 = vpop.f32.mrb[0].mxu0
    %v2836 = vadd.f32 0.0, %v2835
    %v2837 = vpop.f32.mrb[0].mxu0
    %v2838 = vpop.f32.mrb[0].mxu0
    %2839 = vdwg.mxu0
    %v2840 = vadd.f32 %v2666, %v2711
    %v2841 = vadd.f32 %v2667, %v2713
    %v2842 = vadd.f32 %v2668, %v2752
    %v2843 = vadd.f32 %v2669, %v2754
    %v2844 = vadd.f32 %v2670, %v2793
    %v2845 = vadd.f32 %v2671, %v2795
    %v2846 = vadd.f32 %v2672, %v2834
    %v2847 = vadd.f32 %v2673, %v2836
    %v2848 = vmul.f32 %v2840, 0.5
    %v2849 = vmul.f32 %v2841, 0.5
    %v2850 = vtanh.pop %v2848
    %v2851 = vtanh.pop %v2849
    %v2852 = vadd.f32 %v2850, 1.0
    %v2853 = vadd.f32 %v2851, 1.0
    %v2854 = vmul.f32 %v2852, 0.5
    %v2855 = vmul.f32 %v2853, 0.5
    %v2856 = vmul.f32 %v2842, 0.5
    %v2857 = vmul.f32 %v2843, 0.5
    %v2858 = vtanh.pop %v2856
    %v2859 = vtanh.pop %v2857
    %v2860 = vadd.f32 %v2858, 1.0
    %v2861 = vadd.f32 %v2859, 1.0
    %v2862 = vmul.f32 %v2860, 0.5
    %v2863 = vmul.f32 %v2861, 0.5
    %v2864 = vtanh.pop %v2844
    %v2865 = vtanh.pop %v2845
    %v2866 = vmul.f32 %v2846, 0.5
    %v2867 = vmul.f32 %v2847, 0.5
    %v2868 = vtanh.pop %v2866
    %v2869 = vtanh.pop %v2867
    %v2870 = vadd.f32 %v2868, 1.0
    %v2871 = vadd.f32 %v2869, 1.0
    %v2872 = vmul.f32 %v2870, 0.5
    %v2873 = vmul.f32 %v2871, 0.5
    %v2874 = vmul.f32 %v2862, %v2659
    %v2875 = vmul.f32 %v2863, %v2660
    %v2876 = vmul.f32 %v2854, %v2864
    %v2877 = vmul.f32 %v2855, %v2865
    %v2878 = vadd.f32 %v2874, %v2876
    %v2879 = vadd.f32 %v2875, %v2877
    %v2880 = vtanh.pop %v2878
    %v2881 = vtanh.pop %v2879
    %v2882 = vmul.f32 %v2872, %v2880
    %v2883 = vmul.f32 %v2873, %v2881
    %s2884 = scalar_lea.vmem [#allocation2], 320
    %v2885 = vld [vmem:[%s2884] sm:$0xff]
    %v2886 = vld [vmem:[%s2884 + $0x8] sm:$0xff]
    %v2887 = vld [vmem:[%s2884 + $0x10] sm:$0xff]
    %v2888 = vld [vmem:[%s2884 + $0x18] sm:$0xff]
    %v2889 = vld [vmem:[%s2884 + $0x20] sm:$0xff]
    %v2890 = vld [vmem:[%s2884 + $0x28] sm:$0xff]
    %v2891 = vld [vmem:[%s2884 + $0x30] sm:$0xff]
    %v2892 = vld [vmem:[%s2884 + $0x38] sm:$0xff]
    %v2893 = vpack.c.bf16 %v2882, %v2882
    %v2894 = vpack.c.bf16 %v2883, %v2883
    %2895 = vmatprep.subr.bf16.mxu0 %v1545
    %2896 = vmatpush1.bf16.msra.mxu0 %v1544
    %2897 = vmatprep.subr.bf16.mxu0 %v1553
    %2898 = vmatpush1.bf16.msra.mxu0 %v1552
    %2899 = vmatprep.subr.bf16.mxu0 %v1561
    %2900 = vmatpush1.bf16.msra.mxu0 %v1560
    %2901 = vmatprep.subr.bf16.mxu0 %v1569
    %2902 = vmatpush1.bf16.msra.mxu0 %v1568
    %2903 = vmatprep.subr.bf16.mxu0 %v1577
    %2904 = vmatpush1.bf16.msra.mxu0 %v1576
    %2905 = vmatprep.subr.bf16.mxu0 %v1585
    %2906 = vmatpush1.bf16.msra.mxu0 %v1584
    %2907 = vmatprep.subr.bf16.mxu0 %v1593
    %2908 = vmatpush1.bf16.msra.mxu0 %v1592
    %2909 = vmatprep.subr.bf16.mxu0 %v1601
    %2910 = vmatpush1.bf16.msra.mxu0 %v1600
    %2911 = vmatprep.subr.bf16.mxu0 %v1609
    %2912 = vmatpush1.bf16.msra.mxu0 %v1608
    %2913 = vmatprep.subr.bf16.mxu0 %v1617
    %2914 = vmatpush1.bf16.msra.mxu0 %v1616
    %2915 = vmatprep.subr.bf16.mxu0 %v1625
    %2916 = vmatpush1.bf16.msra.mxu0 %v1624
    %2917 = vmatprep.subr.bf16.mxu0 %v1633
    %2918 = vmatpush1.bf16.msra.mxu0 %v1632
    %2919 = vmatprep.subr.bf16.mxu0 %v1641
    %2920 = vmatpush1.bf16.msra.mxu0 %v1640
    %2921 = vmatprep.subr.bf16.mxu0 %v1649
    %2922 = vmatpush1.bf16.msra.mxu0 %v1648
    %2923 = vmatprep.subr.bf16.mxu0 %v1657
    %2924 = vmatpush1.bf16.msra.mxu0 %v1656
    %2925 = vmatprep.subr.bf16.mxu0 %v1665
    %2926 = vmatpush1.bf16.msra.mxu0 %v1664
    %2927 = vmatprep.mubr.bf16.mxu0 %v2894
    %2928 = vmatmul.mubr.bf16.gmra.mrb[0].mxu0 %v2893
    %v2929 = vpop.f32.mrb[0].mxu0
    %v2930 = vadd.f32 0.0, %v2929
    %v2931 = vpop.f32.mrb[0].mxu0
    %v2932 = vadd.f32 0.0, %v2931
    %v2933 = vpop.f32.mrb[0].mxu0
    %v2934 = vpop.f32.mrb[0].mxu0
    %2935 = vdwg.mxu0
    %2936 = vmatprep.subr.bf16.mxu0 %v1547
    %2937 = vmatpush1.bf16.msra.mxu0 %v1546
    %2938 = vmatprep.subr.bf16.mxu0 %v1555
    %2939 = vmatpush1.bf16.msra.mxu0 %v1554
    %2940 = vmatprep.subr.bf16.mxu0 %v1563
    %2941 = vmatpush1.bf16.msra.mxu0 %v1562
    %2942 = vmatprep.subr.bf16.mxu0 %v1571
    %2943 = vmatpush1.bf16.msra.mxu0 %v1570
    %2944 = vmatprep.subr.bf16.mxu0 %v1579
    %2945 = vmatpush1.bf16.msra.mxu0 %v1578
    %2946 = vmatprep.subr.bf16.mxu0 %v1587
    %2947 = vmatpush1.bf16.msra.mxu0 %v1586
    %2948 = vmatprep.subr.bf16.mxu0 %v1595
    %2949 = vmatpush1.bf16.msra.mxu0 %v1594
    %2950 = vmatprep.subr.bf16.mxu0 %v1603
    %2951 = vmatpush1.bf16.msra.mxu0 %v1602
    %2952 = vmatprep.subr.bf16.mxu0 %v1611
    %2953 = vmatpush1.bf16.msra.mxu0 %v1610
    %2954 = vmatprep.subr.bf16.mxu0 %v1619
    %2955 = vmatpush1.bf16.msra.mxu0 %v1618
    %2956 = vmatprep.subr.bf16.mxu0 %v1627
    %2957 = vmatpush1.bf16.msra.mxu0 %v1626
    %2958 = vmatprep.subr.bf16.mxu0 %v1635
    %2959 = vmatpush1.bf16.msra.mxu0 %v1634
    %2960 = vmatprep.subr.bf16.mxu0 %v1643
    %2961 = vmatpush1.bf16.msra.mxu0 %v1642
    %2962 = vmatprep.subr.bf16.mxu0 %v1651
    %2963 = vmatpush1.bf16.msra.mxu0 %v1650
    %2964 = vmatprep.subr.bf16.mxu0 %v1659
    %2965 = vmatpush1.bf16.msra.mxu0 %v1658
    %2966 = vmatprep.subr.bf16.mxu0 %v1667
    %2967 = vmatpush1.bf16.msra.mxu0 %v1666
    %2968 = vmatprep.mubr.bf16.mxu0 %v2894
    %2969 = vmatmul.mubr.bf16.gmra.mrb[0].mxu0 %v2893
    %v2970 = vpop.f32.mrb[0].mxu0
    %v2971 = vadd.f32 0.0, %v2970
    %v2972 = vpop.f32.mrb[0].mxu0
    %v2973 = vadd.f32 0.0, %v2972
    %v2974 = vpop.f32.mrb[0].mxu0
    %v2975 = vpop.f32.mrb[0].mxu0
    %2976 = vdwg.mxu0
    %2977 = vmatprep.subr.bf16.mxu0 %v1549
    %2978 = vmatpush1.bf16.msra.mxu0 %v1548
    %2979 = vmatprep.subr.bf16.mxu0 %v1557
    %2980 = vmatpush1.bf16.msra.mxu0 %v1556
    %2981 = vmatprep.subr.bf16.mxu0 %v1565
    %2982 = vmatpush1.bf16.msra.mxu0 %v1564
    %2983 = vmatprep.subr.bf16.mxu0 %v1573
    %2984 = vmatpush1.bf16.msra.mxu0 %v1572
    %2985 = vmatprep.subr.bf16.mxu0 %v1581
    %2986 = vmatpush1.bf16.msra.mxu0 %v1580
    %2987 = vmatprep.subr.bf16.mxu0 %v1589
    %2988 = vmatpush1.bf16.msra.mxu0 %v1588
    %2989 = vmatprep.subr.bf16.mxu0 %v1597
    %2990 = vmatpush1.bf16.msra.mxu0 %v1596
    %2991 = vmatprep.subr.bf16.mxu0 %v1605
    %2992 = vmatpush1.bf16.msra.mxu0 %v1604
    %2993 = vmatprep.subr.bf16.mxu0 %v1613
    %2994 = vmatpush1.bf16.msra.mxu0 %v1612
    %2995 = vmatprep.subr.bf16.mxu0 %v1621
    %2996 = vmatpush1.bf16.msra.mxu0 %v1620
    %2997 = vmatprep.subr.bf16.mxu0 %v1629
    %2998 = vmatpush1.bf16.msra.mxu0 %v1628
    %2999 = vmatprep.subr.bf16.mxu0 %v1637
    %3000 = vmatpush1.bf16.msra.mxu0 %v1636
    %3001 = vmatprep.subr.bf16.mxu0 %v1645
    %3002 = vmatpush1.bf16.msra.mxu0 %v1644
    %3003 = vmatprep.subr.bf16.mxu0 %v1653
    %3004 = vmatpush1.bf16.msra.mxu0 %v1652
    %3005 = vmatprep.subr.bf16.mxu0 %v1661
    %3006 = vmatpush1.bf16.msra.mxu0 %v1660
    %3007 = vmatprep.subr.bf16.mxu0 %v1669
    %3008 = vmatpush1.bf16.msra.mxu0 %v1668
    %3009 = vmatprep.mubr.bf16.mxu0 %v2894
    %3010 = vmatmul.mubr.bf16.gmra.mrb[0].mxu0 %v2893
    %v3011 = vpop.f32.mrb[0].mxu0
    %v3012 = vadd.f32 0.0, %v3011
    %v3013 = vpop.f32.mrb[0].mxu0
    %v3014 = vadd.f32 0.0, %v3013
    %v3015 = vpop.f32.mrb[0].mxu0
    %v3016 = vpop.f32.mrb[0].mxu0
    %3017 = vdwg.mxu0
    %3018 = vmatprep.subr.bf16.mxu0 %v1551
    %3019 = vmatpush1.bf16.msra.mxu0 %v1550
    %3020 = vmatprep.subr.bf16.mxu0 %v1559
    %3021 = vmatpush1.bf16.msra.mxu0 %v1558
    %3022 = vmatprep.subr.bf16.mxu0 %v1567
    %3023 = vmatpush1.bf16.msra.mxu0 %v1566
    %3024 = vmatprep.subr.bf16.mxu0 %v1575
    %3025 = vmatpush1.bf16.msra.mxu0 %v1574
    %3026 = vmatprep.subr.bf16.mxu0 %v1583
    %3027 = vmatpush1.bf16.msra.mxu0 %v1582
    %3028 = vmatprep.subr.bf16.mxu0 %v1591
    %3029 = vmatpush1.bf16.msra.mxu0 %v1590
    %3030 = vmatprep.subr.bf16.mxu0 %v1599
    %3031 = vmatpush1.bf16.msra.mxu0 %v1598
    %3032 = vmatprep.subr.bf16.mxu0 %v1607
    %3033 = vmatpush1.bf16.msra.mxu0 %v1606
    %3034 = vmatprep.subr.bf16.mxu0 %v1615
    %3035 = vmatpush1.bf16.msra.mxu0 %v1614
    %3036 = vmatprep.subr.bf16.mxu0 %v1623
    %3037 = vmatpush1.bf16.msra.mxu0 %v1622
    %3038 = vmatprep.subr.bf16.mxu0 %v1631
    %3039 = vmatpush1.bf16.msra.mxu0 %v1630
    %3040 = vmatprep.subr.bf16.mxu0 %v1639
    %3041 = vmatpush1.bf16.msra.mxu0 %v1638
    %3042 = vmatprep.subr.bf16.mxu0 %v1647
    %3043 = vmatpush1.bf16.msra.mxu0 %v1646
    %3044 = vmatprep.subr.bf16.mxu0 %v1655
    %3045 = vmatpush1.bf16.msra.mxu0 %v1654
    %3046 = vmatprep.subr.bf16.mxu0 %v1663
    %3047 = vmatpush1.bf16.msra.mxu0 %v1662
    %3048 = vmatprep.subr.bf16.mxu0 %v1671
    %3049 = vmatpush1.bf16.msra.mxu0 %v1670
    %3050 = vmatprep.mubr.bf16.mxu0 %v2894
    %3051 = vmatmul.mubr.bf16.gmra.mrb[0].mxu0 %v2893
    %v3052 = vpop.f32.mrb[0].mxu0
    %v3053 = vadd.f32 0.0, %v3052
    %v3054 = vpop.f32.mrb[0].mxu0
    %v3055 = vadd.f32 0.0, %v3054
    %v3056 = vpop.f32.mrb[0].mxu0
    %v3057 = vpop.f32.mrb[0].mxu0
    %3058 = vdwg.mxu0
    %v3059 = vadd.f32 %v2885, %v2930
    %v3060 = vadd.f32 %v2886, %v2932
    %v3061 = vadd.f32 %v2887, %v2971
    %v3062 = vadd.f32 %v2888, %v2973
    %v3063 = vadd.f32 %v2889, %v3012
    %v3064 = vadd.f32 %v2890, %v3014
    %v3065 = vadd.f32 %v2891, %v3053
    %v3066 = vadd.f32 %v2892, %v3055
    %v3067 = vmul.f32 %v3059, 0.5
    %v3068 = vmul.f32 %v3060, 0.5
    %v3069 = vtanh.pop %v3067
    %v3070 = vtanh.pop %v3068
    %v3071 = vadd.f32 %v3069, 1.0
    %v3072 = vadd.f32 %v3070, 1.0
    %v3073 = vmul.f32 %v3071, 0.5
    %v3074 = vmul.f32 %v3072, 0.5
    %v3075 = vmul.f32 %v3061, 0.5
    %v3076 = vmul.f32 %v3062, 0.5
    %v3077 = vtanh.pop %v3075
    %v3078 = vtanh.pop %v3076
    %v3079 = vadd.f32 %v3077, 1.0
    %v3080 = vadd.f32 %v3078, 1.0
    %v3081 = vmul.f32 %v3079, 0.5
    %v3082 = vmul.f32 %v3080, 0.5
    %v3083 = vtanh.pop %v3063
    %v3084 = vtanh.pop %v3064
    %v3085 = vmul.f32 %v3065, 0.5
    %v3086 = vmul.f32 %v3066, 0.5
    %v3087 = vtanh.pop %v3085
    %v3088 = vtanh.pop %v3086
    %v3089 = vadd.f32 %v3087, 1.0
    %v3090 = vadd.f32 %v3088, 1.0
    %v3091 = vmul.f32 %v3089, 0.5
    %v3092 = vmul.f32 %v3090, 0.5
    %v3093 = vmul.f32 %v3081, %v2878
    %v3094 = vmul.f32 %v3082, %v2879
    %v3095 = vmul.f32 %v3073, %v3083
    %v3096 = vmul.f32 %v3074, %v3084
    %v3097 = vadd.f32 %v3093, %v3095
    %v3098 = vadd.f32 %v3094, %v3096
    %v3099 = vtanh.pop %v3097
    %v3100 = vtanh.pop %v3098
    %v3101 = vmul.f32 %v3091, %v3099
    %v3102 = vmul.f32 %v3092, %v3100
    %s3103 = scalar_lea.vmem [#allocation2], 384
    %v3104 = vld [vmem:[%s3103] sm:$0xff]
    %v3105 = vld [vmem:[%s3103 + $0x8] sm:$0xff]
    %v3106 = vld [vmem:[%s3103 + $0x10] sm:$0xff]
    %v3107 = vld [vmem:[%s3103 + $0x18] sm:$0xff]
    %v3108 = vld [vmem:[%s3103 + $0x20] sm:$0xff]
    %v3109 = vld [vmem:[%s3103 + $0x28] sm:$0xff]
    %v3110 = vld [vmem:[%s3103 + $0x30] sm:$0xff]
    %v3111 = vld [vmem:[%s3103 + $0x38] sm:$0xff]
    %v3112 = vpack.c.bf16 %v3101, %v3101
    %v3113 = vpack.c.bf16 %v3102, %v3102
    %3114 = vmatprep.subr.bf16.mxu0 %v1545
    %3115 = vmatpush1.bf16.msra.mxu0 %v1544
    %3116 = vmatprep.subr.bf16.mxu0 %v1553
    %3117 = vmatpush1.bf16.msra.mxu0 %v1552
    %3118 = vmatprep.subr.bf16.mxu0 %v1561
    %3119 = vmatpush1.bf16.msra.mxu0 %v1560
    %3120 = vmatprep.subr.bf16.mxu0 %v1569
    %3121 = vmatpush1.bf16.msra.mxu0 %v1568
    %3122 = vmatprep.subr.bf16.mxu0 %v1577
    %3123 = vmatpush1.bf16.msra.mxu0 %v1576
    %3124 = vmatprep.subr.bf16.mxu0 %v1585
    %3125 = vmatpush1.bf16.msra.mxu0 %v1584
    %3126 = vmatprep.subr.bf16.mxu0 %v1593
    %3127 = vmatpush1.bf16.msra.mxu0 %v1592
    %3128 = vmatprep.subr.bf16.mxu0 %v1601
    %3129 = vmatpush1.bf16.msra.mxu0 %v1600
    %3130 = vmatprep.subr.bf16.mxu0 %v1609
    %3131 = vmatpush1.bf16.msra.mxu0 %v1608
    %3132 = vmatprep.subr.bf16.mxu0 %v1617
    %3133 = vmatpush1.bf16.msra.mxu0 %v1616
    %3134 = vmatprep.subr.bf16.mxu0 %v1625
    %3135 = vmatpush1.bf16.msra.mxu0 %v1624
    %3136 = vmatprep.subr.bf16.mxu0 %v1633
    %3137 = vmatpush1.bf16.msra.mxu0 %v1632
    %3138 = vmatprep.subr.bf16.mxu0 %v1641
    %3139 = vmatpush1.bf16.msra.mxu0 %v1640
    %3140 = vmatprep.subr.bf16.mxu0 %v1649
    %3141 = vmatpush1.bf16.msra.mxu0 %v1648
    %3142 = vmatprep.subr.bf16.mxu0 %v1657
    %3143 = vmatpush1.bf16.msra.mxu0 %v1656
    %3144 = vmatprep.subr.bf16.mxu0 %v1665
    %3145 = vmatpush1.bf16.msra.mxu0 %v1664
    %3146 = vmatprep.mubr.bf16.mxu0 %v3113
    %3147 = vmatmul.mubr.bf16.gmra.mrb[0].mxu0 %v3112
    %v3148 = vpop.f32.mrb[0].mxu0
    %v3149 = vadd.f32 0.0, %v3148
    %v3150 = vpop.f32.mrb[0].mxu0
    %v3151 = vadd.f32 0.0, %v3150
    %v3152 = vpop.f32.mrb[0].mxu0
    %v3153 = vpop.f32.mrb[0].mxu0
    %3154 = vdwg.mxu0
    %3155 = vmatprep.subr.bf16.mxu0 %v1547
    %3156 = vmatpush1.bf16.msra.mxu0 %v1546
    %3157 = vmatprep.subr.bf16.mxu0 %v1555
    %3158 = vmatpush1.bf16.msra.mxu0 %v1554
    %3159 = vmatprep.subr.bf16.mxu0 %v1563
    %3160 = vmatpush1.bf16.msra.mxu0 %v1562
    %3161 = vmatprep.subr.bf16.mxu0 %v1571
    %3162 = vmatpush1.bf16.msra.mxu0 %v1570
    %3163 = vmatprep.subr.bf16.mxu0 %v1579
    %3164 = vmatpush1.bf16.msra.mxu0 %v1578
    %3165 = vmatprep.subr.bf16.mxu0 %v1587
    %3166 = vmatpush1.bf16.msra.mxu0 %v1586
    %3167 = vmatprep.subr.bf16.mxu0 %v1595
    %3168 = vmatpush1.bf16.msra.mxu0 %v1594
    %3169 = vmatprep.subr.bf16.mxu0 %v1603
    %3170 = vmatpush1.bf16.msra.mxu0 %v1602
    %3171 = vmatprep.subr.bf16.mxu0 %v1611
    %3172 = vmatpush1.bf16.msra.mxu0 %v1610
    %3173 = vmatprep.subr.bf16.mxu0 %v1619
    %3174 = vmatpush1.bf16.msra.mxu0 %v1618
    %3175 = vmatprep.subr.bf16.mxu0 %v1627
    %3176 = vmatpush1.bf16.msra.mxu0 %v1626
    %3177 = vmatprep.subr.bf16.mxu0 %v1635
    %3178 = vmatpush1.bf16.msra.mxu0 %v1634
    %3179 = vmatprep.subr.bf16.mxu0 %v1643
    %3180 = vmatpush1.bf16.msra.mxu0 %v1642
    %3181 = vmatprep.subr.bf16.mxu0 %v1651
    %3182 = vmatpush1.bf16.msra.mxu0 %v1650
    %3183 = vmatprep.subr.bf16.mxu0 %v1659
    %3184 = vmatpush1.bf16.msra.mxu0 %v1658
    %3185 = vmatprep.subr.bf16.mxu0 %v1667
    %3186 = vmatpush1.bf16.msra.mxu0 %v1666
    %3187 = vmatprep.mubr.bf16.mxu0 %v3113
    %3188 = vmatmul.mubr.bf16.gmra.mrb[0].mxu0 %v3112
    %v3189 = vpop.f32.mrb[0].mxu0
    %v3190 = vadd.f32 0.0, %v3189
    %v3191 = vpop.f32.mrb[0].mxu0
    %v3192 = vadd.f32 0.0, %v3191
    %v3193 = vpop.f32.mrb[0].mxu0
    %v3194 = vpop.f32.mrb[0].mxu0
    %3195 = vdwg.mxu0
    %3196 = vmatprep.subr.bf16.mxu0 %v1549
    %3197 = vmatpush1.bf16.msra.mxu0 %v1548
    %3198 = vmatprep.subr.bf16.mxu0 %v1557
    %3199 = vmatpush1.bf16.msra.mxu0 %v1556
    %3200 = vmatprep.subr.bf16.mxu0 %v1565
    %3201 = vmatpush1.bf16.msra.mxu0 %v1564
    %3202 = vmatprep.subr.bf16.mxu0 %v1573
    %3203 = vmatpush1.bf16.msra.mxu0 %v1572
    %3204 = vmatprep.subr.bf16.mxu0 %v1581
    %3205 = vmatpush1.bf16.msra.mxu0 %v1580
    %3206 = vmatprep.subr.bf16.mxu0 %v1589
    %3207 = vmatpush1.bf16.msra.mxu0 %v1588
    %3208 = vmatprep.subr.bf16.mxu0 %v1597
    %3209 = vmatpush1.bf16.msra.mxu0 %v1596
    %3210 = vmatprep.subr.bf16.mxu0 %v1605
    %3211 = vmatpush1.bf16.msra.mxu0 %v1604
    %3212 = vmatprep.subr.bf16.mxu0 %v1613
    %3213 = vmatpush1.bf16.msra.mxu0 %v1612
    %3214 = vmatprep.subr.bf16.mxu0 %v1621
    %3215 = vmatpush1.bf16.msra.mxu0 %v1620
    %3216 = vmatprep.subr.bf16.mxu0 %v1629
    %3217 = vmatpush1.bf16.msra.mxu0 %v1628
    %3218 = vmatprep.subr.bf16.mxu0 %v1637
    %3219 = vmatpush1.bf16.msra.mxu0 %v1636
    %3220 = vmatprep.subr.bf16.mxu0 %v1645
    %3221 = vmatpush1.bf16.msra.mxu0 %v1644
    %3222 = vmatprep.subr.bf16.mxu0 %v1653
    %3223 = vmatpush1.bf16.msra.mxu0 %v1652
    %3224 = vmatprep.subr.bf16.mxu0 %v1661
    %3225 = vmatpush1.bf16.msra.mxu0 %v1660
    %3226 = vmatprep.subr.bf16.mxu0 %v1669
    %3227 = vmatpush1.bf16.msra.mxu0 %v1668
    %3228 = vmatprep.mubr.bf16.mxu0 %v3113
    %3229 = vmatmul.mubr.bf16.gmra.mrb[0].mxu0 %v3112
    %v3230 = vpop.f32.mrb[0].mxu0
    %v3231 = vadd.f32 0.0, %v3230
    %v3232 = vpop.f32.mrb[0].mxu0
    %v3233 = vadd.f32 0.0, %v3232
    %v3234 = vpop.f32.mrb[0].mxu0
    %v3235 = vpop.f32.mrb[0].mxu0
    %3236 = vdwg.mxu0
    %3237 = vmatprep.subr.bf16.mxu0 %v1551
    %3238 = vmatpush1.bf16.msra.mxu0 %v1550
    %3239 = vmatprep.subr.bf16.mxu0 %v1559
    %3240 = vmatpush1.bf16.msra.mxu0 %v1558
    %3241 = vmatprep.subr.bf16.mxu0 %v1567
    %3242 = vmatpush1.bf16.msra.mxu0 %v1566
    %3243 = vmatprep.subr.bf16.mxu0 %v1575
    %3244 = vmatpush1.bf16.msra.mxu0 %v1574
    %3245 = vmatprep.subr.bf16.mxu0 %v1583
    %3246 = vmatpush1.bf16.msra.mxu0 %v1582
    %3247 = vmatprep.subr.bf16.mxu0 %v1591
    %3248 = vmatpush1.bf16.msra.mxu0 %v1590
    %3249 = vmatprep.subr.bf16.mxu0 %v1599
    %3250 = vmatpush1.bf16.msra.mxu0 %v1598
    %3251 = vmatprep.subr.bf16.mxu0 %v1607
    %3252 = vmatpush1.bf16.msra.mxu0 %v1606
    %3253 = vmatprep.subr.bf16.mxu0 %v1615
    %3254 = vmatpush1.bf16.msra.mxu0 %v1614
    %3255 = vmatprep.subr.bf16.mxu0 %v1623
    %3256 = vmatpush1.bf16.msra.mxu0 %v1622
    %3257 = vmatprep.subr.bf16.mxu0 %v1631
    %3258 = vmatpush1.bf16.msra.mxu0 %v1630
    %3259 = vmatprep.subr.bf16.mxu0 %v1639
    %3260 = vmatpush1.bf16.msra.mxu0 %v1638
    %3261 = vmatprep.subr.bf16.mxu0 %v1647
    %3262 = vmatpush1.bf16.msra.mxu0 %v1646
    %3263 = vmatprep.subr.bf16.mxu0 %v1655
    %3264 = vmatpush1.bf16.msra.mxu0 %v1654
    %3265 = vmatprep.subr.bf16.mxu0 %v1663
    %3266 = vmatpush1.bf16.msra.mxu0 %v1662
    %3267 = vmatprep.subr.bf16.mxu0 %v1671
    %3268 = vmatpush1.bf16.msra.mxu0 %v1670
    %3269 = vmatprep.mubr.bf16.mxu0 %v3113
    %3270 = vmatmul.mubr.bf16.gmra.mrb[0].mxu0 %v3112
    %v3271 = vpop.f32.mrb[0].mxu0
    %v3272 = vadd.f32 0.0, %v3271
    %v3273 = vpop.f32.mrb[0].mxu0
    %v3274 = vadd.f32 0.0, %v3273
    %v3275 = vpop.f32.mrb[0].mxu0
    %v3276 = vpop.f32.mrb[0].mxu0
    %3277 = vdwg.mxu0
    %v3278 = vadd.f32 %v3104, %v3149
    %v3279 = vadd.f32 %v3105, %v3151
    %v3280 = vadd.f32 %v3106, %v3190
    %v3281 = vadd.f32 %v3107, %v3192
    %v3282 = vadd.f32 %v3108, %v3231
    %v3283 = vadd.f32 %v3109, %v3233
    %v3284 = vadd.f32 %v3110, %v3272
    %v3285 = vadd.f32 %v3111, %v3274
    %v3286 = vmul.f32 %v3278, 0.5
    %v3287 = vmul.f32 %v3279, 0.5
    %v3288 = vtanh.pop %v3286
    %v3289 = vtanh.pop %v3287
    %v3290 = vadd.f32 %v3288, 1.0
    %v3291 = vadd.f32 %v3289, 1.0
    %v3292 = vmul.f32 %v3290, 0.5
    %v3293 = vmul.f32 %v3291, 0.5
    %v3294 = vmul.f32 %v3280, 0.5
    %v3295 = vmul.f32 %v3281, 0.5
    %v3296 = vtanh.pop %v3294
    %v3297 = vtanh.pop %v3295
    %v3298 = vadd.f32 %v3296, 1.0
    %v3299 = vadd.f32 %v3297, 1.0
    %v3300 = vmul.f32 %v3298, 0.5
    %v3301 = vmul.f32 %v3299, 0.5
    %v3302 = vtanh.pop %v3282
    %v3303 = vtanh.pop %v3283
    %v3304 = vmul.f32 %v3284, 0.5
    %v3305 = vmul.f32 %v3285, 0.5
    %v3306 = vtanh.pop %v3304
    %v3307 = vtanh.pop %v3305
    %v3308 = vadd.f32 %v3306, 1.0
    %v3309 = vadd.f32 %v3307, 1.0
    %v3310 = vmul.f32 %v3308, 0.5
    %v3311 = vmul.f32 %v3309, 0.5
    %v3312 = vmul.f32 %v3300, %v3097
    %v3313 = vmul.f32 %v3301, %v3098
    %v3314 = vmul.f32 %v3292, %v3302
    %v3315 = vmul.f32 %v3293, %v3303
    %v3316 = vadd.f32 %v3312, %v3314
    %v3317 = vadd.f32 %v3313, %v3315
    %v3318 = vtanh.pop %v3316
    %v3319 = vtanh.pop %v3317
    %v3320 = vmul.f32 %v3310, %v3318
    %v3321 = vmul.f32 %v3311, %v3319
    %s3322 = scalar_lea.vmem [#allocation2], 448
    %v3323 = vld [vmem:[%s3322] sm:$0xff]
    %v3324 = vld [vmem:[%s3322 + $0x8] sm:$0xff]
    %v3325 = vld [vmem:[%s3322 + $0x10] sm:$0xff]
    %v3326 = vld [vmem:[%s3322 + $0x18] sm:$0xff]
    %v3327 = vld [vmem:[%s3322 + $0x20] sm:$0xff]
    %v3328 = vld [vmem:[%s3322 + $0x28] sm:$0xff]
    %v3329 = vld [vmem:[%s3322 + $0x30] sm:$0xff]
    %v3330 = vld [vmem:[%s3322 + $0x38] sm:$0xff]
    %v3331 = vpack.c.bf16 %v3320, %v3320
    %v3332 = vpack.c.bf16 %v3321, %v3321
    %3333 = vmatprep.subr.bf16.mxu0 %v1545
    %3334 = vmatpush1.bf16.msra.mxu0 %v1544
    %3335 = vmatprep.subr.bf16.mxu0 %v1553
    %3336 = vmatpush1.bf16.msra.mxu0 %v1552
    %3337 = vmatprep.subr.bf16.mxu0 %v1561
    %3338 = vmatpush1.bf16.msra.mxu0 %v1560
    %3339 = vmatprep.subr.bf16.mxu0 %v1569
    %3340 = vmatpush1.bf16.msra.mxu0 %v1568
    %3341 = vmatprep.subr.bf16.mxu0 %v1577
    %3342 = vmatpush1.bf16.msra.mxu0 %v1576
    %3343 = vmatprep.subr.bf16.mxu0 %v1585
    %3344 = vmatpush1.bf16.msra.mxu0 %v1584
    %3345 = vmatprep.subr.bf16.mxu0 %v1593
    %3346 = vmatpush1.bf16.msra.mxu0 %v1592
    %3347 = vmatprep.subr.bf16.mxu0 %v1601
    %3348 = vmatpush1.bf16.msra.mxu0 %v1600
    %3349 = vmatprep.subr.bf16.mxu0 %v1609
    %3350 = vmatpush1.bf16.msra.mxu0 %v1608
    %3351 = vmatprep.subr.bf16.mxu0 %v1617
    %3352 = vmatpush1.bf16.msra.mxu0 %v1616
    %3353 = vmatprep.subr.bf16.mxu0 %v1625
    %3354 = vmatpush1.bf16.msra.mxu0 %v1624
    %3355 = vmatprep.subr.bf16.mxu0 %v1633
    %3356 = vmatpush1.bf16.msra.mxu0 %v1632
    %3357 = vmatprep.subr.bf16.mxu0 %v1641
    %3358 = vmatpush1.bf16.msra.mxu0 %v1640
    %3359 = vmatprep.subr.bf16.mxu0 %v1649
    %3360 = vmatpush1.bf16.msra.mxu0 %v1648
    %3361 = vmatprep.subr.bf16.mxu0 %v1657
    %3362 = vmatpush1.bf16.msra.mxu0 %v1656
    %3363 = vmatprep.subr.bf16.mxu0 %v1665
    %3364 = vmatpush1.bf16.msra.mxu0 %v1664
    %3365 = vmatprep.mubr.bf16.mxu0 %v3332
    %3366 = vmatmul.mubr.bf16.gmra.mrb[0].mxu0 %v3331
    %v3367 = vpop.f32.mrb[0].mxu0
    %v3368 = vadd.f32 0.0, %v3367
    %v3369 = vpop.f32.mrb[0].mxu0
    %v3370 = vadd.f32 0.0, %v3369
    %v3371 = vpop.f32.mrb[0].mxu0
    %v3372 = vpop.f32.mrb[0].mxu0
    %3373 = vdwg.mxu0
    %3374 = vmatprep.subr.bf16.mxu0 %v1547
    %3375 = vmatpush1.bf16.msra.mxu0 %v1546
    %3376 = vmatprep.subr.bf16.mxu0 %v1555
    %3377 = vmatpush1.bf16.msra.mxu0 %v1554
    %3378 = vmatprep.subr.bf16.mxu0 %v1563
    %3379 = vmatpush1.bf16.msra.mxu0 %v1562
    %3380 = vmatprep.subr.bf16.mxu0 %v1571
    %3381 = vmatpush1.bf16.msra.mxu0 %v1570
    %3382 = vmatprep.subr.bf16.mxu0 %v1579
    %3383 = vmatpush1.bf16.msra.mxu0 %v1578
    %3384 = vmatprep.subr.bf16.mxu0 %v1587
    %3385 = vmatpush1.bf16.msra.mxu0 %v1586
    %3386 = vmatprep.subr.bf16.mxu0 %v1595
    %3387 = vmatpush1.bf16.msra.mxu0 %v1594
    %3388 = vmatprep.subr.bf16.mxu0 %v1603
    %3389 = vmatpush1.bf16.msra.mxu0 %v1602
    %3390 = vmatprep.subr.bf16.mxu0 %v1611
    %3391 = vmatpush1.bf16.msra.mxu0 %v1610
    %3392 = vmatprep.subr.bf16.mxu0 %v1619
    %3393 = vmatpush1.bf16.msra.mxu0 %v1618
    %3394 = vmatprep.subr.bf16.mxu0 %v1627
    %3395 = vmatpush1.bf16.msra.mxu0 %v1626
    %3396 = vmatprep.subr.bf16.mxu0 %v1635
    %3397 = vmatpush1.bf16.msra.mxu0 %v1634
    %3398 = vmatprep.subr.bf16.mxu0 %v1643
    %3399 = vmatpush1.bf16.msra.mxu0 %v1642
    %3400 = vmatprep.subr.bf16.mxu0 %v1651
    %3401 = vmatpush1.bf16.msra.mxu0 %v1650
    %3402 = vmatprep.subr.bf16.mxu0 %v1659
    %3403 = vmatpush1.bf16.msra.mxu0 %v1658
    %3404 = vmatprep.subr.bf16.mxu0 %v1667
    %3405 = vmatpush1.bf16.msra.mxu0 %v1666
    %3406 = vmatprep.mubr.bf16.mxu0 %v3332
    %3407 = vmatmul.mubr.bf16.gmra.mrb[0].mxu0 %v3331
    %v3408 = vpop.f32.mrb[0].mxu0
    %v3409 = vadd.f32 0.0, %v3408
    %v3410 = vpop.f32.mrb[0].mxu0
    %v3411 = vadd.f32 0.0, %v3410
    %v3412 = vpop.f32.mrb[0].mxu0
    %v3413 = vpop.f32.mrb[0].mxu0
    %3414 = vdwg.mxu0
    %3415 = vmatprep.subr.bf16.mxu0 %v1549
    %3416 = vmatpush1.bf16.msra.mxu0 %v1548
    %3417 = vmatprep.subr.bf16.mxu0 %v1557
    %3418 = vmatpush1.bf16.msra.mxu0 %v1556
    %3419 = vmatprep.subr.bf16.mxu0 %v1565
    %3420 = vmatpush1.bf16.msra.mxu0 %v1564
    %3421 = vmatprep.subr.bf16.mxu0 %v1573
    %3422 = vmatpush1.bf16.msra.mxu0 %v1572
    %3423 = vmatprep.subr.bf16.mxu0 %v1581
    %3424 = vmatpush1.bf16.msra.mxu0 %v1580
    %3425 = vmatprep.subr.bf16.mxu0 %v1589
    %3426 = vmatpush1.bf16.msra.mxu0 %v1588
    %3427 = vmatprep.subr.bf16.mxu0 %v1597
    %3428 = vmatpush1.bf16.msra.mxu0 %v1596
    %3429 = vmatprep.subr.bf16.mxu0 %v1605
    %3430 = vmatpush1.bf16.msra.mxu0 %v1604
    %3431 = vmatprep.subr.bf16.mxu0 %v1613
    %3432 = vmatpush1.bf16.msra.mxu0 %v1612
    %3433 = vmatprep.subr.bf16.mxu0 %v1621
    %3434 = vmatpush1.bf16.msra.mxu0 %v1620
    %3435 = vmatprep.subr.bf16.mxu0 %v1629
    %3436 = vmatpush1.bf16.msra.mxu0 %v1628
    %3437 = vmatprep.subr.bf16.mxu0 %v1637
    %3438 = vmatpush1.bf16.msra.mxu0 %v1636
    %3439 = vmatprep.subr.bf16.mxu0 %v1645
    %3440 = vmatpush1.bf16.msra.mxu0 %v1644
    %3441 = vmatprep.subr.bf16.mxu0 %v1653
    %3442 = vmatpush1.bf16.msra.mxu0 %v1652
    %3443 = vmatprep.subr.bf16.mxu0 %v1661
    %3444 = vmatpush1.bf16.msra.mxu0 %v1660
    %3445 = vmatprep.subr.bf16.mxu0 %v1669
    %3446 = vmatpush1.bf16.msra.mxu0 %v1668
    %3447 = vmatprep.mubr.bf16.mxu0 %v3332
    %3448 = vmatmul.mubr.bf16.gmra.mrb[0].mxu0 %v3331
    %v3449 = vpop.f32.mrb[0].mxu0
    %v3450 = vadd.f32 0.0, %v3449
    %v3451 = vpop.f32.mrb[0].mxu0
    %v3452 = vadd.f32 0.0, %v3451
    %v3453 = vpop.f32.mrb[0].mxu0
    %v3454 = vpop.f32.mrb[0].mxu0
    %3455 = vdwg.mxu0
    %3456 = vmatprep.subr.bf16.mxu0 %v1551
    %3457 = vmatpush1.bf16.msra.mxu0 %v1550
    %3458 = vmatprep.subr.bf16.mxu0 %v1559
    %3459 = vmatpush1.bf16.msra.mxu0 %v1558
    %3460 = vmatprep.subr.bf16.mxu0 %v1567
    %3461 = vmatpush1.bf16.msra.mxu0 %v1566
    %3462 = vmatprep.subr.bf16.mxu0 %v1575
    %3463 = vmatpush1.bf16.msra.mxu0 %v1574
    %3464 = vmatprep.subr.bf16.mxu0 %v1583
    %3465 = vmatpush1.bf16.msra.mxu0 %v1582
    %3466 = vmatprep.subr.bf16.mxu0 %v1591
    %3467 = vmatpush1.bf16.msra.mxu0 %v1590
    %3468 = vmatprep.subr.bf16.mxu0 %v1599
    %3469 = vmatpush1.bf16.msra.mxu0 %v1598
    %3470 = vmatprep.subr.bf16.mxu0 %v1607
    %3471 = vmatpush1.bf16.msra.mxu0 %v1606
    %3472 = vmatprep.subr.bf16.mxu0 %v1615
    %3473 = vmatpush1.bf16.msra.mxu0 %v1614
    %3474 = vmatprep.subr.bf16.mxu0 %v1623
    %3475 = vmatpush1.bf16.msra.mxu0 %v1622
    %3476 = vmatprep.subr.bf16.mxu0 %v1631
    %3477 = vmatpush1.bf16.msra.mxu0 %v1630
    %3478 = vmatprep.subr.bf16.mxu0 %v1639
    %3479 = vmatpush1.bf16.msra.mxu0 %v1638
    %3480 = vmatprep.subr.bf16.mxu0 %v1647
    %3481 = vmatpush1.bf16.msra.mxu0 %v1646
    %3482 = vmatprep.subr.bf16.mxu0 %v1655
    %3483 = vmatpush1.bf16.msra.mxu0 %v1654
    %3484 = vmatprep.subr.bf16.mxu0 %v1663
    %3485 = vmatpush1.bf16.msra.mxu0 %v1662
    %3486 = vmatprep.subr.bf16.mxu0 %v1671
    %3487 = vmatpush1.bf16.msra.mxu0 %v1670
    %3488 = vmatprep.mubr.bf16.mxu0 %v3332
    %3489 = vmatmul.mubr.bf16.gmra.mrb[0].mxu0 %v3331
    %v3490 = vpop.f32.mrb[0].mxu0
    %v3491 = vadd.f32 0.0, %v3490
    %v3492 = vpop.f32.mrb[0].mxu0
    %v3493 = vadd.f32 0.0, %v3492
    %v3494 = vpop.f32.mrb[0].mxu0
    %v3495 = vpop.f32.mrb[0].mxu0
    %3496 = vdwg.mxu0
    %v3497 = vadd.f32 %v3323, %v3368
    %v3498 = vadd.f32 %v3324, %v3370
    %v3499 = vadd.f32 %v3325, %v3409
    %v3500 = vadd.f32 %v3326, %v3411
    %v3501 = vadd.f32 %v3327, %v3450
    %v3502 = vadd.f32 %v3328, %v3452
    %v3503 = vadd.f32 %v3329, %v3491
    %v3504 = vadd.f32 %v3330, %v3493
    %v3505 = vmul.f32 %v3497, 0.5
    %v3506 = vmul.f32 %v3498, 0.5
    %v3507 = vtanh.pop %v3505
    %v3508 = vtanh.pop %v3506
    %v3509 = vadd.f32 %v3507, 1.0
    %v3510 = vadd.f32 %v3508, 1.0
    %v3511 = vmul.f32 %v3509, 0.5
    %v3512 = vmul.f32 %v3510, 0.5
    %v3513 = vmul.f32 %v3499, 0.5
    %v3514 = vmul.f32 %v3500, 0.5
    %v3515 = vtanh.pop %v3513
    %v3516 = vtanh.pop %v3514
    %v3517 = vadd.f32 %v3515, 1.0
    %v3518 = vadd.f32 %v3516, 1.0
    %v3519 = vmul.f32 %v3517, 0.5
    %v3520 = vmul.f32 %v3518, 0.5
    %v3521 = vtanh.pop %v3501
    %v3522 = vtanh.pop %v3502
    %v3523 = vmul.f32 %v3503, 0.5
    %v3524 = vmul.f32 %v3504, 0.5
    %v3525 = vtanh.pop %v3523
    %v3526 = vtanh.pop %v3524
    %v3527 = vadd.f32 %v3525, 1.0
    %v3528 = vadd.f32 %v3526, 1.0
    %v3529 = vmul.f32 %v3527, 0.5
    %v3530 = vmul.f32 %v3528, 0.5
    %v3531 = vmul.f32 %v3519, %v3316
    %v3532 = vmul.f32 %v3520, %v3317
    %v3533 = vmul.f32 %v3511, %v3521
    %v3534 = vmul.f32 %v3512, %v3522
    %v3535 = vadd.f32 %v3531, %v3533
    %v3536 = vadd.f32 %v3532, %v3534
    %v3537 = vtanh.pop %v3535
    %v3538 = vtanh.pop %v3536
    %v3539 = vmul.f32 %v3529, %v3537
    %v3540 = vmul.f32 %v3530, %v3538
    %v3541 = vpack.c.bf16 %v3539, %v3539
    %v3542 = vpack.c.bf16 %v3540, %v3540
    %v3543 = vld [vmem:[#allocation11] sm:$0xff]
    %v3544 = vld [vmem:[#allocation11 + $0x8] sm:$0xff]
    %v3545 = vld [vmem:[#allocation11 + $0x10] sm:$0xff]
    %v3546 = vld [vmem:[#allocation11 + $0x18] sm:$0xff]
    %v3547 = vld [vmem:[#allocation11 + $0x20] sm:$0xff]
    %v3548 = vld [vmem:[#allocation11 + $0x28] sm:$0xff]
    %v3549 = vld [vmem:[#allocation11 + $0x30] sm:$0xff]
    %v3550 = vld [vmem:[#allocation11 + $0x38] sm:$0xff]
    %v3551 = vld [vmem:[#allocation11 + $0x40] sm:$0xff]
    %v3552 = vld [vmem:[#allocation11 + $0x48] sm:$0xff]
    %v3553 = vld [vmem:[#allocation11 + $0x50] sm:$0xff]
    %v3554 = vld [vmem:[#allocation11 + $0x58] sm:$0xff]
    %v3555 = vld [vmem:[#allocation11 + $0x60] sm:$0xff]
    %v3556 = vld [vmem:[#allocation11 + $0x68] sm:$0xff]
    %v3557 = vld [vmem:[#allocation11 + $0x70] sm:$0xff]
    %v3558 = vld [vmem:[#allocation11 + $0x78] sm:$0xff]
    %v3559 = vld [vmem:[#allocation11 + $0x80] sm:$0xff]
    %v3560 = vld [vmem:[#allocation11 + $0x88] sm:$0xff]
    %v3561 = vld [vmem:[#allocation11 + $0x90] sm:$0xff]
    %v3562 = vld [vmem:[#allocation11 + $0x98] sm:$0xff]
    %v3563 = vld [vmem:[#allocation11 + $0xa0] sm:$0xff]
    %v3564 = vld [vmem:[#allocation11 + $0xa8] sm:$0xff]
    %v3565 = vld [vmem:[#allocation11 + $0xb0] sm:$0xff]
    %v3566 = vld [vmem:[#allocation11 + $0xb8] sm:$0xff]
    %v3567 = vld [vmem:[#allocation11 + $0xc0] sm:$0xff]
    %v3568 = vld [vmem:[#allocation11 + $0xc8] sm:$0xff]
    %v3569 = vld [vmem:[#allocation11 + $0xd0] sm:$0xff]
    %v3570 = vld [vmem:[#allocation11 + $0xd8] sm:$0xff]
    %v3571 = vld [vmem:[#allocation11 + $0xe0] sm:$0xff]
    %v3572 = vld [vmem:[#allocation11 + $0xe8] sm:$0xff]
    %v3573 = vld [vmem:[#allocation11 + $0xf0] sm:$0xff]
    %v3574 = vld [vmem:[#allocation11 + $0xf8] sm:$0xff]
    %v3575 = vld [vmem:[#allocation6] sm:$0xff]
    %v3576 = vld [vmem:[#allocation6 + $0x8] sm:$0xff]
    %v3577 = vpack.c.bf16 %v3575, %v3575
    %v3578 = vpack.c.bf16 %v3576, %v3576
    %v3579 = vld [vmem:[#allocation12] sm:$0xff]
    %v3580 = vld [vmem:[#allocation12 + $0x8] sm:$0xff]
    %v3581 = vld [vmem:[#allocation12 + $0x10] sm:$0xff]
    %v3582 = vld [vmem:[#allocation12 + $0x18] sm:$0xff]
    %v3583 = vld [vmem:[#allocation12 + $0x20] sm:$0xff]
    %v3584 = vld [vmem:[#allocation12 + $0x28] sm:$0xff]
    %v3585 = vld [vmem:[#allocation12 + $0x30] sm:$0xff]
    %v3586 = vld [vmem:[#allocation12 + $0x38] sm:$0xff]
    %v3587 = vld [vmem:[#allocation12 + $0x40] sm:$0xff]
    %v3588 = vld [vmem:[#allocation12 + $0x48] sm:$0xff]
    %v3589 = vld [vmem:[#allocation12 + $0x50] sm:$0xff]
    %v3590 = vld [vmem:[#allocation12 + $0x58] sm:$0xff]
    %v3591 = vld [vmem:[#allocation12 + $0x60] sm:$0xff]
    %v3592 = vld [vmem:[#allocation12 + $0x68] sm:$0xff]
    %v3593 = vld [vmem:[#allocation12 + $0x70] sm:$0xff]
    %v3594 = vld [vmem:[#allocation12 + $0x78] sm:$0xff]
    %v3595 = vld [vmem:[#allocation12 + $0x80] sm:$0xff]
    %v3596 = vld [vmem:[#allocation12 + $0x88] sm:$0xff]
    %v3597 = vld [vmem:[#allocation12 + $0x90] sm:$0xff]
    %v3598 = vld [vmem:[#allocation12 + $0x98] sm:$0xff]
    %v3599 = vld [vmem:[#allocation12 + $0xa0] sm:$0xff]
    %v3600 = vld [vmem:[#allocation12 + $0xa8] sm:$0xff]
    %v3601 = vld [vmem:[#allocation12 + $0xb0] sm:$0xff]
    %v3602 = vld [vmem:[#allocation12 + $0xb8] sm:$0xff]
    %v3603 = vld [vmem:[#allocation12 + $0xc0] sm:$0xff]
    %v3604 = vld [vmem:[#allocation12 + $0xc8] sm:$0xff]
    %v3605 = vld [vmem:[#allocation12 + $0xd0] sm:$0xff]
    %v3606 = vld [vmem:[#allocation12 + $0xd8] sm:$0xff]
    %v3607 = vld [vmem:[#allocation12 + $0xe0] sm:$0xff]
    %v3608 = vld [vmem:[#allocation12 + $0xe8] sm:$0xff]
    %v3609 = vld [vmem:[#allocation12 + $0xf0] sm:$0xff]
    %v3610 = vld [vmem:[#allocation12 + $0xf8] sm:$0xff]
    %v3643 = vunpack.c.l.b16 %v3579
    %v3644 = vunpack.c.h.b16 %v3579
    %v3645 = vunpack.c.l.b16 %v3580
    %v3646 = vunpack.c.h.b16 %v3580
    %v3647 = vunpack.c.l.b16 %v3581
    %v3648 = vunpack.c.h.b16 %v3581
    %v3649 = vunpack.c.l.b16 %v3582
    %v3650 = vunpack.c.h.b16 %v3582
    %v3651 = vunpack.c.l.b16 %v3583
    %v3652 = vunpack.c.h.b16 %v3583
    %v3653 = vunpack.c.l.b16 %v3584
    %v3654 = vunpack.c.h.b16 %v3584
    %v3655 = vunpack.c.l.b16 %v3585
    %v3656 = vunpack.c.h.b16 %v3585
    %v3657 = vunpack.c.l.b16 %v3586
    %v3658 = vunpack.c.h.b16 %v3586
    %v3659 = vunpack.c.l.b16 %v3587
    %v3660 = vunpack.c.h.b16 %v3587
    %v3661 = vunpack.c.l.b16 %v3588
    %v3662 = vunpack.c.h.b16 %v3588
    %v3663 = vunpack.c.l.b16 %v3589
    %v3664 = vunpack.c.h.b16 %v3589
    %v3665 = vunpack.c.l.b16 %v3590
    %v3666 = vunpack.c.h.b16 %v3590
    %v3667 = vunpack.c.l.b16 %v3591
    %v3668 = vunpack.c.h.b16 %v3591
    %v3669 = vunpack.c.l.b16 %v3592
    %v3670 = vunpack.c.h.b16 %v3592
    %v3671 = vunpack.c.l.b16 %v3593
    %v3672 = vunpack.c.h.b16 %v3593
    %v3673 = vunpack.c.l.b16 %v3594
    %v3674 = vunpack.c.h.b16 %v3594
    %v3675 = vunpack.c.l.b16 %v3595
    %v3676 = vunpack.c.h.b16 %v3595
    %v3677 = vunpack.c.l.b16 %v3596
    %v3678 = vunpack.c.h.b16 %v3596
    %v3679 = vunpack.c.l.b16 %v3597
    %v3680 = vunpack.c.h.b16 %v3597
    %v3681 = vunpack.c.l.b16 %v3598
    %v3682 = vunpack.c.h.b16 %v3598
    %v3683 = vunpack.c.l.b16 %v3599
    %v3684 = vunpack.c.h.b16 %v3599
    %v3685 = vunpack.c.l.b16 %v3600
    %v3686 = vunpack.c.h.b16 %v3600
    %v3687 = vunpack.c.l.b16 %v3601
    %v3688 = vunpack.c.h.b16 %v3601
    %v3689 = vunpack.c.l.b16 %v3602
    %v3690 = vunpack.c.h.b16 %v3602
    %v3691 = vunpack.c.l.b16 %v3603
    %v3692 = vunpack.c.h.b16 %v3603
    %v3693 = vunpack.c.l.b16 %v3604
    %v3694 = vunpack.c.h.b16 %v3604
    %v3695 = vunpack.c.l.b16 %v3605
    %v3696 = vunpack.c.h.b16 %v3605
    %v3697 = vunpack.c.l.b16 %v3606
    %v3698 = vunpack.c.h.b16 %v3606
    %v3699 = vunpack.c.l.b16 %v3607
    %v3700 = vunpack.c.h.b16 %v3607
    %v3701 = vunpack.c.l.b16 %v3608
    %v3702 = vunpack.c.h.b16 %v3608
    %v3703 = vunpack.c.l.b16 %v3609
    %v3704 = vunpack.c.h.b16 %v3609
    %v3705 = vunpack.c.l.b16 %v3610
    %v3706 = vunpack.c.h.b16 %v3610
    %v3707 = vpack.c.b16 %v3645, %v3643
    %v3708 = vpack.c.b16 %v3646, %v3644
    %v3709 = vpack.c.b16 %v3649, %v3647
    %v3710 = vpack.c.b16 %v3650, %v3648
    %v3711 = vpack.c.b16 %v3653, %v3651
    %v3712 = vpack.c.b16 %v3654, %v3652
    %v3713 = vpack.c.b16 %v3657, %v3655
    %v3714 = vpack.c.b16 %v3658, %v3656
    %v3715 = vpack.c.b16 %v3661, %v3659
    %v3716 = vpack.c.b16 %v3662, %v3660
    %v3717 = vpack.c.b16 %v3665, %v3663
    %v3718 = vpack.c.b16 %v3666, %v3664
    %v3719 = vpack.c.b16 %v3669, %v3667
    %v3720 = vpack.c.b16 %v3670, %v3668
    %v3721 = vpack.c.b16 %v3673, %v3671
    %v3722 = vpack.c.b16 %v3674, %v3672
    %v3723 = vpack.c.b16 %v3677, %v3675
    %v3724 = vpack.c.b16 %v3678, %v3676
    %v3725 = vpack.c.b16 %v3681, %v3679
    %v3726 = vpack.c.b16 %v3682, %v3680
    %v3727 = vpack.c.b16 %v3685, %v3683
    %v3728 = vpack.c.b16 %v3686, %v3684
    %v3729 = vpack.c.b16 %v3689, %v3687
    %v3730 = vpack.c.b16 %v3690, %v3688
    %v3731 = vpack.c.b16 %v3693, %v3691
    %v3732 = vpack.c.b16 %v3694, %v3692
    %v3733 = vpack.c.b16 %v3697, %v3695
    %v3734 = vpack.c.b16 %v3698, %v3696
    %v3735 = vpack.c.b16 %v3701, %v3699
    %v3736 = vpack.c.b16 %v3702, %v3700
    %v3737 = vpack.c.b16 %v3705, %v3703
    %v3738 = vpack.c.b16 %v3706, %v3704
    %3771 = vmatprep.subr.bf16.mxu0 %v3708
    %3772 = vmatpush1.bf16.msra.mxu0 %v3707
    %3773 = vmatprep.subr.bf16.mxu0 %v3710
    %3774 = vmatpush1.bf16.msra.mxu0 %v3709
    %3775 = vmatprep.subr.bf16.mxu0 %v3712
    %3776 = vmatpush1.bf16.msra.mxu0 %v3711
    %3777 = vmatprep.subr.bf16.mxu0 %v3714
    %3778 = vmatpush1.bf16.msra.mxu0 %v3713
    %3779 = vmatprep.subr.bf16.mxu0 %v3716
    %3780 = vmatpush1.bf16.msra.mxu0 %v3715
    %3781 = vmatprep.subr.bf16.mxu0 %v3718
    %3782 = vmatpush1.bf16.msra.mxu0 %v3717
    %3783 = vmatprep.subr.bf16.mxu0 %v3720
    %3784 = vmatpush1.bf16.msra.mxu0 %v3719
    %3785 = vmatprep.subr.bf16.mxu0 %v3722
    %3786 = vmatpush1.bf16.msra.mxu0 %v3721
    %3787 = vmatprep.subr.bf16.mxu0 %v3724
    %3788 = vmatpush1.bf16.msra.mxu0 %v3723
    %3789 = vmatprep.subr.bf16.mxu0 %v3726
    %3790 = vmatpush1.bf16.msra.mxu0 %v3725
    %3791 = vmatprep.subr.bf16.mxu0 %v3728
    %3792 = vmatpush1.bf16.msra.mxu0 %v3727
    %3793 = vmatprep.subr.bf16.mxu0 %v3730
    %3794 = vmatpush1.bf16.msra.mxu0 %v3729
    %3795 = vmatprep.subr.bf16.mxu0 %v3732
    %3796 = vmatpush1.bf16.msra.mxu0 %v3731
    %3797 = vmatprep.subr.bf16.mxu0 %v3734
    %3798 = vmatpush1.bf16.msra.mxu0 %v3733
    %3799 = vmatprep.subr.bf16.mxu0 %v3736
    %3800 = vmatpush1.bf16.msra.mxu0 %v3735
    %3801 = vmatprep.subr.bf16.mxu0 %v3738
    %3802 = vmatpush1.bf16.msra.mxu0 %v3737
    %3803 = vmatprep.mubr.bf16.mxu0 %v3578
    %3804 = vmatmul.mubr.bf16.gmra.mrb[0].mxu0 %v3577
    %v3805 = vpop.f32.mrb[0].mxu0
    %v3806 = vadd.f32 0.0, %v3805
    %v3807 = vpop.f32.mrb[0].mxu0
    %v3808 = vadd.f32 0.0, %v3807
    %v3809 = vpop.f32.mrb[0].mxu0
    %v3810 = vpop.f32.mrb[0].mxu0
    %3811 = vdwg.mxu0
    %v3844 = vunpack.c.l.b16 %v3543
    %v3845 = vunpack.c.h.b16 %v3543
    %v3846 = vunpack.c.l.b16 %v3544
    %v3847 = vunpack.c.h.b16 %v3544
    %v3848 = vunpack.c.l.b16 %v3545
    %v3849 = vunpack.c.h.b16 %v3545
    %v3850 = vunpack.c.l.b16 %v3546
    %v3851 = vunpack.c.h.b16 %v3546
    %v3852 = vunpack.c.l.b16 %v3547
    %v3853 = vunpack.c.h.b16 %v3547
    %v3854 = vunpack.c.l.b16 %v3548
    %v3855 = vunpack.c.h.b16 %v3548
    %v3856 = vunpack.c.l.b16 %v3549
    %v3857 = vunpack.c.h.b16 %v3549
    %v3858 = vunpack.c.l.b16 %v3550
    %v3859 = vunpack.c.h.b16 %v3550
    %v3860 = vunpack.c.l.b16 %v3551
    %v3861 = vunpack.c.h.b16 %v3551
    %v3862 = vunpack.c.l.b16 %v3552
    %v3863 = vunpack.c.h.b16 %v3552
    %v3864 = vunpack.c.l.b16 %v3553
    %v3865 = vunpack.c.h.b16 %v3553
    %v3866 = vunpack.c.l.b16 %v3554
    %v3867 = vunpack.c.h.b16 %v3554
    %v3868 = vunpack.c.l.b16 %v3555
    %v3869 = vunpack.c.h.b16 %v3555
    %v3870 = vunpack.c.l.b16 %v3556
    %v3871 = vunpack.c.h.b16 %v3556
    %v3872 = vunpack.c.l.b16 %v3557
    %v3873 = vunpack.c.h.b16 %v3557
    %v3874 = vunpack.c.l.b16 %v3558
    %v3875 = vunpack.c.h.b16 %v3558
    %v3876 = vunpack.c.l.b16 %v3559
    %v3877 = vunpack.c.h.b16 %v3559
    %v3878 = vunpack.c.l.b16 %v3560
    %v3879 = vunpack.c.h.b16 %v3560
    %v3880 = vunpack.c.l.b16 %v3561
    %v3881 = vunpack.c.h.b16 %v3561
    %v3882 = vunpack.c.l.b16 %v3562
    %v3883 = vunpack.c.h.b16 %v3562
    %v3884 = vunpack.c.l.b16 %v3563
    %v3885 = vunpack.c.h.b16 %v3563
    %v3886 = vunpack.c.l.b16 %v3564
    %v3887 = vunpack.c.h.b16 %v3564
    %v3888 = vunpack.c.l.b16 %v3565
    %v3889 = vunpack.c.h.b16 %v3565
    %v3890 = vunpack.c.l.b16 %v3566
    %v3891 = vunpack.c.h.b16 %v3566
    %v3892 = vunpack.c.l.b16 %v3567
    %v3893 = vunpack.c.h.b16 %v3567
    %v3894 = vunpack.c.l.b16 %v3568
    %v3895 = vunpack.c.h.b16 %v3568
    %v3896 = vunpack.c.l.b16 %v3569
    %v3897 = vunpack.c.h.b16 %v3569
    %v3898 = vunpack.c.l.b16 %v3570
    %v3899 = vunpack.c.h.b16 %v3570
    %v3900 = vunpack.c.l.b16 %v3571
    %v3901 = vunpack.c.h.b16 %v3571
    %v3902 = vunpack.c.l.b16 %v3572
    %v3903 = vunpack.c.h.b16 %v3572
    %v3904 = vunpack.c.l.b16 %v3573
    %v3905 = vunpack.c.h.b16 %v3573
    %v3906 = vunpack.c.l.b16 %v3574
    %v3907 = vunpack.c.h.b16 %v3574
    %v3908 = vpack.c.b16 %v3846, %v3844
    %v3909 = vpack.c.b16 %v3847, %v3845
    %v3910 = vpack.c.b16 %v3850, %v3848
    %v3911 = vpack.c.b16 %v3851, %v3849
    %v3912 = vpack.c.b16 %v3854, %v3852
    %v3913 = vpack.c.b16 %v3855, %v3853
    %v3914 = vpack.c.b16 %v3858, %v3856
    %v3915 = vpack.c.b16 %v3859, %v3857
    %v3916 = vpack.c.b16 %v3862, %v3860
    %v3917 = vpack.c.b16 %v3863, %v3861
    %v3918 = vpack.c.b16 %v3866, %v3864
    %v3919 = vpack.c.b16 %v3867, %v3865
    %v3920 = vpack.c.b16 %v3870, %v3868
    %v3921 = vpack.c.b16 %v3871, %v3869
    %v3922 = vpack.c.b16 %v3874, %v3872
    %v3923 = vpack.c.b16 %v3875, %v3873
    %v3924 = vpack.c.b16 %v3878, %v3876
    %v3925 = vpack.c.b16 %v3879, %v3877
    %v3926 = vpack.c.b16 %v3882, %v3880
    %v3927 = vpack.c.b16 %v3883, %v3881
    %v3928 = vpack.c.b16 %v3886, %v3884
    %v3929 = vpack.c.b16 %v3887, %v3885
    %v3930 = vpack.c.b16 %v3890, %v3888
    %v3931 = vpack.c.b16 %v3891, %v3889
    %v3932 = vpack.c.b16 %v3894, %v3892
    %v3933 = vpack.c.b16 %v3895, %v3893
    %v3934 = vpack.c.b16 %v3898, %v3896
    %v3935 = vpack.c.b16 %v3899, %v3897
    %v3936 = vpack.c.b16 %v3902, %v3900
    %v3937 = vpack.c.b16 %v3903, %v3901
    %v3938 = vpack.c.b16 %v3906, %v3904
    %v3939 = vpack.c.b16 %v3907, %v3905
    %3972 = vmatprep.subr.bf16.mxu0 %v3909
    %3973 = vmatpush1.bf16.msra.mxu0 %v3908
    %3974 = vmatprep.subr.bf16.mxu0 %v3911
    %3975 = vmatpush1.bf16.msra.mxu0 %v3910
    %3976 = vmatprep.subr.bf16.mxu0 %v3913
    %3977 = vmatpush1.bf16.msra.mxu0 %v3912
    %3978 = vmatprep.subr.bf16.mxu0 %v3915
    %3979 = vmatpush1.bf16.msra.mxu0 %v3914
    %3980 = vmatprep.subr.bf16.mxu0 %v3917
    %3981 = vmatpush1.bf16.msra.mxu0 %v3916
    %3982 = vmatprep.subr.bf16.mxu0 %v3919
    %3983 = vmatpush1.bf16.msra.mxu0 %v3918
    %3984 = vmatprep.subr.bf16.mxu0 %v3921
    %3985 = vmatpush1.bf16.msra.mxu0 %v3920
    %3986 = vmatprep.subr.bf16.mxu0 %v3923
    %3987 = vmatpush1.bf16.msra.mxu0 %v3922
    %3988 = vmatprep.subr.bf16.mxu0 %v3925
    %3989 = vmatpush1.bf16.msra.mxu0 %v3924
    %3990 = vmatprep.subr.bf16.mxu0 %v3927
    %3991 = vmatpush1.bf16.msra.mxu0 %v3926
    %3992 = vmatprep.subr.bf16.mxu0 %v3929
    %3993 = vmatpush1.bf16.msra.mxu0 %v3928
    %3994 = vmatprep.subr.bf16.mxu0 %v3931
    %3995 = vmatpush1.bf16.msra.mxu0 %v3930
    %3996 = vmatprep.subr.bf16.mxu0 %v3933
    %3997 = vmatpush1.bf16.msra.mxu0 %v3932
    %3998 = vmatprep.subr.bf16.mxu0 %v3935
    %3999 = vmatpush1.bf16.msra.mxu0 %v3934
    %4000 = vmatprep.subr.bf16.mxu0 %v3937
    %4001 = vmatpush1.bf16.msra.mxu0 %v3936
    %4002 = vmatprep.subr.bf16.mxu0 %v3939
    %4003 = vmatpush1.bf16.msra.mxu0 %v3938
    %4004 = vmatprep.mubr.bf16.mxu0 %v3542
    %4005 = vmatmul.mubr.bf16.gmra.mrb[0].mxu0 %v3541
    %v4006 = vpop.f32.mrb[0].mxu0
    %v4007 = vadd.f32 %v3806, %v4006
    %v4008 = vpop.f32.mrb[0].mxu0
    %v4009 = vadd.f32 %v3808, %v4008
    %v4010 = vpop.f32.mrb[0].mxu0
    %v4011 = vpop.f32.mrb[0].mxu0
    %4012 = vdwg.mxu0
    %v4013 = vld [vmem:[%s7] sm:$0x3]
    %v4015 = vlaneseq
    %v4016 = vshrl.u32 %v4015, 7
    %v4017 = vsub.s32 0, %v4016
    %v4018 = vrot.slane %v4013, %v4017
    %v4019 = vlaneseq
    %v4020 = vshrl.u32 %v4019, 7
    %v4021 = vsub.s32 1, %v4020
    %v4022 = vrot.slane %v4013, %v4021
    %v4025 = vadd.f32 %v4007, %v4018
    %v4026 = vadd.f32 %v4009, %v4022
    %4027 = vst [vmem:[#allocation14] sm:$0xff] %v4025
    %4028 = vst [vmem:[#allocation14 + $0x8] sm:$0xff] %v4026
    // Predicated region
    $region58: #{tpu_custom_call.1} parent=1 // pred_check
      _
    $region59: #{tpu_custom_call.1} parent=1 // pred_check_branch
      %4030 = sbr.rel (0) target = $region61
    $region60: #{tpu_custom_call.1} parent=1 // pred_region
      %s4032 = ssub.s32 256, 256
      %4033 = vsyncadd [#allocation5], %s4032
      %s4035 = sshll.u32 [#allocation14], 4
      %s4036 = int_to_ptr.vmem [resolvable:$true] %s4035
      %4038 = dma.vmem_to_hbm [thread:$0]  %s4036, 256, %s8, [#allocation5]
    $region61: #{tpu_custom_call.1} parent=1 // pred_fallthru
      _
    // Predicated region
    $region62: #{tpu_custom_call.1} parent=1 // pred_check
      _
    $region63: #{tpu_custom_call.1} parent=1 // pred_check_branch
      %4040 = sbr.rel (0) target = $region65
    $region64: #{tpu_custom_call.1} parent=1 // pred_region
      %4041 = dma.done [#allocation5], 256
    $region65: #{tpu_custom_call.1} parent=1 // pred_fallthru
      _
    %4042 = vsyncpa [#allocation4], 1
    %4043 = vsyncpa [#allocation7], 1
    %4044 = vsyncpa [#allocation10], 1
    %4045 = vsyncpa [#allocation13], 1
    %4046 = vsyncpa [#allocation5], 1

</llo_original>
